<compile_context>
chip_gen: v5e
topology: v5e:2x2
jax: 0.10.0
libtpu: 0.0.40
codegen_flags: <defaults>
</compile_context>

<pallas_src>
import functools

import jax
import jax.numpy as jnp
from jax.experimental import pallas as pl
from jax.experimental.pallas import tpu as pltpu


# ---------------------------------------------------------------------------
# helpers
# ---------------------------------------------------------------------------
def _round_up(n, m):
    return ((n + m - 1) // m) * m


def _pad_gate_cols(w, H, Hp):
    """(rows, 3H) -> (rows, 3Hp): zero-pad each of the r/z/n gate blocks."""
    if Hp == H:
        return w
    parts = [jnp.pad(w[:, g * H:(g + 1) * H], ((0, 0), (0, Hp - H)))
             for g in range(3)]
    return jnp.concatenate(parts, axis=1)


def _pad_rows(w, Hp):
    H = w.shape[0]
    if Hp == H:
        return w
    return jnp.pad(w, ((0, Hp - H), (0, 0)))


def _vmem_physical_bytes():
    try:
        info = pltpu.get_tpu_info()
        return int(getattr(info, "vmem_capacity_bytes", 128 * 2 ** 20))
    except Exception:
        return 128 * 2 ** 20


# ---------------------------------------------------------------------------
# In-kernel GRU recurrence
#   gi_steps : (steps, rows, 3H)   hoisted input projection (+ folded r/z hh bias)
#   whh      : (H, 3H) bf16        recurrent weight
#   bhh_n    : (1, H)  f32         n-gate hidden bias (must stay inside r*(...))
# Returns (h_f32, h_bf16) final hidden state.
# ---------------------------------------------------------------------------
def _run_gru(gi_steps, whh, bhh_n_row, n_rows, n_steps, hidden,
             unrolled_steps=8):
    H = hidden
    bhh_n = jnp.broadcast_to(bhh_n_row, (n_rows, H))      # hoisted, (rows, H)

    def step(gi, carry):
        h, h_mm = carry
        gh = jnp.dot(h_mm, whh, preferred_element_type=jnp.float32)
        r = jax.nn.sigmoid(gi[:, :H] + gh[:, :H])
        z = jax.nn.sigmoid(gi[:, H:2 * H] + gh[:, H:2 * H])
        n = jnp.tanh(gi[:, 2 * H:] + r * (gh[:, 2 * H:] + bhh_n))
        h_new = (1.0 - z) * n + z * h
        # Produce next step's bf16 matmul operand here so the convert hides
        # under this step's elementwise tail instead of gating the next dot.
        return h_new, h_new.astype(whh.dtype)

    h0 = jnp.zeros((n_rows, H), jnp.float32)
    carry = (h0, h0.astype(whh.dtype))

    if n_steps <= unrolled_steps:
        for t in range(n_steps):
            carry = step(gi_steps[t], carry)
    else:
        def body(t, c):
            gi = jax.lax.dynamic_index_in_dim(gi_steps, t, axis=0,
                                              keepdims=False)
            return step(gi, c)
        carry = jax.lax.fori_loop(0, n_steps, body, carry, unroll=2)
    return carry


# ---------------------------------------------------------------------------
# Pallas kernel (one batch block per grid step)
# ---------------------------------------------------------------------------
def segrnn_kernel(x_ref,
                  wih1_ref, whh1_ref, bih1_ref, bhh1n_ref,
                  wih2_ref, whh2_ref, bih2_ref, bhh2n_ref,
                  wfc_ref, bfc_ref,
                  out_ref,
                  *, block_b, num_segments, seg_len, hidden, gi_dtype):
    BB, S, T, H = block_b, num_segments, seg_len, hidden
    N = S * BB                 # stage-1 rows in this block, ordered (s, bb)
    G = 3 * H

    # ---------------- stage 1: segment-level GRU --------------------------
    x = x_ref[...]                                   # (T, S, BB, D) bf16
    D = x.shape[-1]
    x2 = x.reshape(T * N, D)                         # rows ordered (t, s, bb)

    # Hoisted input->hidden projection: one tall (T*N, D) x (D, 3H) matmul.
    # bih1 already contains b_ih + b_hh[r,z] (folded in the wrapper).
    gi1 = (jnp.dot(x2, wih1_ref[...], preferred_element_type=jnp.float32)
           + bih1_ref[...]).astype(gi_dtype)
    h1, h1_mm = _run_gru(gi1.reshape(T, N, G), whh1_ref[...], bhh1n_ref[...],
                         N, T, H)

    # ---------------- stage 2: aggregate GRU over segments ----------------
    gi2 = (jnp.dot(h1_mm, wih2_ref[...], preferred_element_type=jnp.float32)
           + bih2_ref[...])
    h2, h2_mm = _run_gru(gi2.reshape(S, BB, G), whh2_ref[...], bhh2n_ref[...],
                         BB, S, H)

    # ---------------- stage 3: linear head (lane-dense padded output) -----
    out = (jnp.dot(h2_mm, wfc_ref[...], preferred_element_type=jnp.float32)
           + bfc_ref[...])
    out_ref[...] = out.astype(out_ref.dtype)


# ---------------------------------------------------------------------------
# Wrapper
# ---------------------------------------------------------------------------
def segrnn_forward(x, params, segment_length, *, block_b=None):
    B, seq_len, D = x.shape
    T = segment_length
    S = seq_len // T
    H = params["whh1"].shape[0]                  # whh1: (H, 3H)
    O = params["wfc"].shape[1]                   # wfc : (H, O)

    Hp = _round_up(H, 128)                       # lane-aligned hidden width
    G = 3 * Hp
    Op = _round_up(O, 128)                       # lane-dense output width
    Dp = _round_up(D, 128)                       # lane-padded x width in VMEM

    # ---- VMEM budget (per generation: ~96 MiB on v5e/v6e, ~48 MiB on v7x)
    phys = _vmem_physical_bytes()
    budget = (3 * phys) // 4

    weights_bytes = ((_round_up(D, 16) + 3 * Hp) * G * 2     # wih1/whh1/wih2/whh2 bf16
                     + Hp * Op * 2                           # wfc bf16
                     + 8 * (2 * G + 2 * Hp + Op) * 4)        # biases, sublane-padded

    def per_block_bytes(bb, gi_bytes):
        n = S * bb
        x_blk = 2 * T * S * bb * Dp * 2          # double-buffered bf16 x block
        out_blk = 2 * bb * Op * 4                # double-buffered f32 out block
        gi1 = T * n * G * gi_bytes               # hoisted stage-1 projection
        gi2 = n * G * 4                          # hoisted stage-2 projection
        rec = (n + bb) * (18 * Hp + 4 * G)       # h/h_bf16/gh/r/z/n temporaries
        return x_blk + out_blk + gi1 + gi2 + rec

    def bb_cap(gi_bytes):
        avail = budget - weights_bytes - 2 * 2 ** 20
        return max(0, avail // max(per_block_bytes(1, gi_bytes), 1))

    gi_bytes = 4
    cap_rows = bb_cap(gi_bytes)
    if cap_rows < 16:                            # f32 gi doesn't fit: go bf16
        gi_bytes = 2
        cap_rows = bb_cap(gi_bytes)
    cap_rows = max(16, (cap_rows // 16) * 16)
    gi_dtype = jnp.float32 if gi_bytes == 4 else jnp.bfloat16

    # ---- batch block: multiple of 16 (bf16 sublane tile), sized from the
    #      VMEM budget; split into >=2 blocks when the batch allows it so both
    #      v7x TensorCores get work.
    if block_b is None:
        want = _round_up(max(1, -(-B // 2)), 16) if B > 16 else _round_up(B, 16)
        block_b = min(want, cap_rows, 1024)
    block_b = max(16, _round_up(block_b, 16))
    B_pad = _round_up(B, block_b)

    # ---- input layout: (B, seq, D) -> (T, S, B_pad, D), bf16.
    # TODO(synk): if the upstream producer can emit x already in (T,S,B,D)
    # bf16, feed it directly and skip this transpose (it is an extra HBM
    # read+write of x for long sequences).
    x = x[:, :S * T, :].astype(jnp.float32)
    x4 = jnp.transpose(x.reshape(B, S, T, D), (2, 1, 0, 3))   # (T, S, B, D)
    if B_pad != B:
        x4 = jnp.pad(x4, ((0, 0), (0, 0), (0, B_pad - B), (0, 0)))
    x4 = x4.astype(jnp.bfloat16)

    # ---- weights: gate-pad H->Hp, pad O->Op; matmul operands -> bf16,
    #      biases stay f32.  Fold b_hh[r,z] into the hoisted gi bias; keep
    #      only the n-gate b_hh on the per-step path.
    def fold_bias(b_ih, b_hh):
        comb = b_ih + jnp.concatenate(
            [b_hh[:, :2 * H], jnp.zeros((1, H), jnp.float32)], axis=1)
        bihc = _pad_gate_cols(comb, H, Hp)                       # (1, 3Hp)
        bhhn = jnp.pad(b_hh[:, 2 * H:], ((0, 0), (0, Hp - H)))   # (1, Hp)
        return bihc, bhhn

    wih1 = _pad_gate_cols(params["wih1"], H, Hp).astype(jnp.bfloat16)
    whh1 = _pad_gate_cols(_pad_rows(params["whh1"], Hp), H, Hp).astype(jnp.bfloat16)
    bih1c, bhh1n = fold_bias(params["bih1"], params["bhh1"])
    wih2 = _pad_gate_cols(_pad_rows(params["wih2"], Hp), H, Hp).astype(jnp.bfloat16)
    whh2 = _pad_gate_cols(_pad_rows(params["whh2"], Hp), H, Hp).astype(jnp.bfloat16)
    bih2c, bhh2n = fold_bias(params["bih2"], params["bhh2"])
    wfc = jnp.pad(params["wfc"], ((0, Hp - H), (0, Op - O))).astype(jnp.bfloat16)
    bfc = jnp.pad(params["bfc"], ((0, 0), (0, Op - O)))

    kernel = functools.partial(segrnn_kernel, block_b=block_b,
                               num_segments=S, seg_len=T, hidden=Hp,
                               gi_dtype=gi_dtype)

    grid = (B_pad // block_b,)
    const = lambda b: (0, 0)
    out_specs = pl.BlockSpec((block_b, Op), lambda b: (b, 0))

    est = weights_bytes + per_block_bytes(block_b, gi_bytes)
    vmem_limit = int(min(max(est * 5 // 4, budget), phys * 95 // 100))

    def build_call(single_buffer_weights):
        if single_buffer_weights:
            wspec = lambda shp: pl.BlockSpec(shp, const,
                                             pipeline_mode=pl.Buffered(1))
        else:
            wspec = lambda shp: pl.BlockSpec(shp, const)
        in_specs = [
            pl.BlockSpec((T, S, block_b, D), lambda b: (0, 0, b, 0)),  # x block
            wspec((D, G)),    # wih1   (resident)
            wspec((Hp, G)),   # whh1
            wspec((1, G)),    # bih1 (+ folded bhh[r,z])
            wspec((1, Hp)),   # bhh1 n-gate
            wspec((Hp, G)),   # wih2
            wspec((Hp, G)),   # whh2
            wspec((1, G)),    # bih2 (+ folded bhh[r,z])
            wspec((1, Hp)),   # bhh2 n-gate
            wspec((Hp, Op)),  # wfc
            wspec((1, Op)),   # bfc
        ]
        return pl.pallas_call(
            kernel,
            out_shape=jax.ShapeDtypeStruct((B_pad, Op), jnp.float32),
            grid=grid,
            in_specs=in_specs,
            out_specs=out_specs,
            compiler_params=pltpu.CompilerParams(
                dimension_semantics=("parallel",),
                vmem_limit_bytes=vmem_limit),
        )

    args = (x4, wih1, whh1, bih1c, bhh1n, wih2, whh2, bih2c, bhh2n, wfc, bfc)
    try:
        out = build_call(True)(*args)
    except Exception:
        # Fallback if this JAX/Mosaic build rejects single-buffered BlockSpecs.
        out = build_call(False)(*args)

    return out[:B, :O]


# ---------------------------------------------------------------------------
# Deterministic parameter initialization (shapes match nn.GRU / nn.Linear,
# stored pre-transposed as (in_features, out_features), gate order r,z,n)
# ---------------------------------------------------------------------------
def init_params(key, input_size, hidden_size, output_size):
    D, H, O = input_size, hidden_size, output_size
    ks = jax.random.split(key, 10)
    u = lambda k, shp, s: jax.random.uniform(k, shp, jnp.float32, -s, s)
    s = 1.0 / jnp.sqrt(H)
    return {
        "wih1": u(ks[0], (D, 3 * H), s), "whh1": u(ks[1], (H, 3 * H), s),
        "bih1": u(ks[2], (1, 3 * H), s), "bhh1": u(ks[3], (1, 3 * H), s),
        "wih2": u(ks[4], (H, 3 * H), s), "whh2": u(ks[5], (H, 3 * H), s),
        "bih2": u(ks[6], (1, 3 * H), s), "bhh2": u(ks[7], (1, 3 * H), s),
        "wfc": u(ks[8], (H, O), s), "bfc": u(ks[9], (1, O), s),
    }


# ---------------------------------------------------------------------------
# Pure-JAX reference (PyTorch GRU semantics; mm_dtype controls matmul
# operand precision, accumulation always f32)
# ---------------------------------------------------------------------------
def _ref_gru(xs, w_ih, w_hh, b_ih, b_hh, mm_dtype):
    N, T, _ = xs.shape
    H = w_hh.shape[0]
    h = jnp.zeros((N, H), jnp.float32)
    for t in range(T):
        gi = jnp.dot(xs[:, t, :].astype(mm_dtype), w_ih.astype(mm_dtype),
                     preferred_element_type=jnp.float32) + b_ih
        gh = jnp.dot(h.astype(mm_dtype), w_hh.astype(mm_dtype),
                     preferred_element_type=jnp.float32) + b_hh
        r = jax.nn.sigmoid(gi[:, :H] + gh[:, :H])
        z = jax.nn.sigmoid(gi[:, H:2 * H] + gh[:, H:2 * H])
        n = jnp.tanh(gi[:, 2 * H:] + r * gh[:, 2 * H:])
        h = (1.0 - z) * n + z * h
    return h


def segrnn_reference(x, params, segment_length, mm_dtype=jnp.float32):
    B, seq_len, D = x.shape
    T = segment_length
    S = seq_len // T
    x = x[:, :S * T, :].astype(jnp.float32)
    x_seg = x.reshape(B * S, T, D)
    h_seg = _ref_gru(x_seg, params["wih1"], params["whh1"],
                     params["bih1"], params["bhh1"], mm_dtype)
    h_seq = h_seg.reshape(B, S, -1)
    h_agg = _ref_gru(h_seq, params["wih2"], params["whh2"],
                     params["bih2"], params["bhh2"], mm_dtype)
    return jnp.dot(h_agg.astype(mm_dtype), params["wfc"].astype(mm_dtype),
                   preferred_element_type=jnp.float32) + params["bfc"]


# ---------------------------------------------------------------------------
if __name__ == "__main__":
    batch = 2
    seq_len = 8
    input_size = 4
    hidden_size = 32
    output_size = 4
    segment_length = 4

    key = jax.random.PRNGKey(0)
    k_x, k_p = jax.random.split(key)
    x = jax.random.normal(k_x, (batch, seq_len, input_size), jnp.float32)
    params = init_params(k_p, input_size, hidden_size, output_size)

    out = segrnn_forward(x, params, segment_length)
    out = jax.block_until_ready(out)
    assert out.shape == (batch, output_size)

    # Tight check vs a reference with identical matmul precision
    # (bf16 operands, f32 accumulation).
    ref_bf16 = segrnn_reference(x, params, segment_length, mm_dtype=jnp.bfloat16)
    assert jnp.allclose(out, ref_bf16, atol=1e-3, rtol=1e-3), \
        float(jnp.max(jnp.abs(out - ref_bf16)))

    # Loose check vs the full-f32 PyTorch-equivalent reference.
    ref_f32 = segrnn_reference(x, params, segment_length)
    assert jnp.allclose(out, ref_f32, atol=3e-2, rtol=3e-2), \
        float(jnp.max(jnp.abs(out - ref_f32)))

    print("KERNEL_OK")
</pallas_src>

<mosaic_0001>
module attributes {stable_mosaic.version = 11 : i64} {
  func.func @segrnn_kernel(%arg0: i32, %arg1: memref<4x2x16x4xbf16, #tpu.memory_space<vmem>>, %arg2: memref<4x384xbf16, #tpu.memory_space<vmem>>, %arg3: memref<128x384xbf16, #tpu.memory_space<vmem>>, %arg4: memref<1x384xf32, #tpu.memory_space<vmem>>, %arg5: memref<1x128xf32, #tpu.memory_space<vmem>>, %arg6: memref<128x384xbf16, #tpu.memory_space<vmem>>, %arg7: memref<128x384xbf16, #tpu.memory_space<vmem>>, %arg8: memref<1x384xf32, #tpu.memory_space<vmem>>, %arg9: memref<1x128xf32, #tpu.memory_space<vmem>>, %arg10: memref<128x128xbf16, #tpu.memory_space<vmem>>, %arg11: memref<1x128xf32, #tpu.memory_space<vmem>>, %arg12: memref<16x128xf32, #tpu.memory_space<vmem>>) attributes {dimension_semantics = [#tpu.dimension_semantics<parallel>], iteration_bounds = array<i64: 1>, scalar_prefetch = 0 : i64, scratch_operands = 0 : i64, tpu.core_type = #tpu.core_type<tc>, window_params = [{transform_indices = @transform_0, window_bounds = array<i64: 4, 2, 16, 4>}, {pipeline_mode = #tpu.pipeline_mode<synchronous>, transform_indices = @transform_1, window_bounds = array<i64: 4, 384>}, {pipeline_mode = #tpu.pipeline_mode<synchronous>, transform_indices = @transform_2, window_bounds = array<i64: 128, 384>}, {pipeline_mode = #tpu.pipeline_mode<synchronous>, transform_indices = @transform_3, window_bounds = array<i64: 1, 384>}, {pipeline_mode = #tpu.pipeline_mode<synchronous>, transform_indices = @transform_4, window_bounds = array<i64: 1, 128>}, {pipeline_mode = #tpu.pipeline_mode<synchronous>, transform_indices = @transform_5, window_bounds = array<i64: 128, 384>}, {pipeline_mode = #tpu.pipeline_mode<synchronous>, transform_indices = @transform_6, window_bounds = array<i64: 128, 384>}, {pipeline_mode = #tpu.pipeline_mode<synchronous>, transform_indices = @transform_7, window_bounds = array<i64: 1, 384>}, {pipeline_mode = #tpu.pipeline_mode<synchronous>, transform_indices = @transform_8, window_bounds = array<i64: 1, 128>}, {pipeline_mode = #tpu.pipeline_mode<synchronous>, transform_indices = @transform_9, window_bounds = array<i64: 128, 128>}, {pipeline_mode = #tpu.pipeline_mode<synchronous>, transform_indices = @transform_10, window_bounds = array<i64: 1, 128>}, {transform_indices = @transform_11, window_bounds = array<i64: 16, 128>}]} {
    %c0 = arith.constant 0 : index
    %c0_0 = arith.constant 0 : index
    %c0_1 = arith.constant 0 : index
    %c0_2 = arith.constant 0 : index
    %0 = vector.load %arg1[%c0, %c0_0, %c0_1, %c0_2] : memref<4x2x16x4xbf16, #tpu.memory_space<vmem>>, vector<4x2x16x4xbf16>
    %1 = vector.shape_cast %0 : vector<4x2x16x4xbf16> to vector<128x4xbf16>
    %c0_3 = arith.constant 0 : index
    %c0_4 = arith.constant 0 : index
    %2 = vector.load %arg2[%c0_3, %c0_4] : memref<4x384xbf16, #tpu.memory_space<vmem>>, vector<4x384xbf16>
    %cst = arith.constant dense<0.000000e+00> : vector<128x384xf32>
    %3 = tpu.matmul %1, %2, %cst {dimension_numbers = #tpu.dot_dimension_numbers<[1], [0], [0], [1], [0, 0, 1, 1], [], []>} : vector<128x4xbf16>, vector<4x384xbf16>, vector<128x384xf32> -> vector<128x384xf32>
    %c0_5 = arith.constant 0 : index
    %c0_6 = arith.constant 0 : index
    %4 = vector.load %arg4[%c0_5, %c0_6] : memref<1x384xf32, #tpu.memory_space<vmem>>, vector<1x384xf32>
    %5 = vector.broadcast %4 : vector<1x384xf32> to vector<128x384xf32>
    %6 = arith.addf %3, %5 : vector<128x384xf32>
    %7 = vector.shape_cast %6 : vector<128x384xf32> to vector<4x32x384xf32>
    %c0_7 = arith.constant 0 : index
    %c0_8 = arith.constant 0 : index
    %8 = vector.load %arg3[%c0_7, %c0_8] : memref<128x384xbf16, #tpu.memory_space<vmem>>, vector<128x384xbf16>
    %c0_9 = arith.constant 0 : index
    %c0_10 = arith.constant 0 : index
    %9 = vector.load %arg5[%c0_9, %c0_10] : memref<1x128xf32, #tpu.memory_space<vmem>>, vector<1x128xf32>
    %10 = vector.shape_cast %9 : vector<1x128xf32> to vector<1x128xf32>
    %11 = vector.broadcast %10 : vector<1x128xf32> to vector<32x128xf32>
    %cst_11 = arith.constant 0.000000e+00 : f32
    %12 = vector.broadcast %cst_11 : f32 to vector<32x128xf32>
    %13 = arith.truncf %12 : vector<32x128xf32> to vector<32x128xbf16>
    %14 = vector.extract_strided_slice %7 {offsets = [0, 0, 0], sizes = [1, 32, 384], strides = [1, 1, 1]} : vector<4x32x384xf32> to vector<1x32x384xf32>
    %15 = vector.shape_cast %14 : vector<1x32x384xf32> to vector<32x384xf32>
    %cst_12 = arith.constant dense<0.000000e+00> : vector<32x384xf32>
    %16 = tpu.matmul %13, %8, %cst_12 {dimension_numbers = #tpu.dot_dimension_numbers<[1], [0], [0], [1], [0, 0, 1, 1], [], []>} : vector<32x128xbf16>, vector<128x384xbf16>, vector<32x384xf32> -> vector<32x384xf32>
    %17 = vector.extract_strided_slice %15 {offsets = [0, 0], sizes = [32, 128], strides = [1, 1]} : vector<32x384xf32> to vector<32x128xf32>
    %18 = vector.extract_strided_slice %16 {offsets = [0, 0], sizes = [32, 128], strides = [1, 1]} : vector<32x384xf32> to vector<32x128xf32>
    %19 = arith.addf %17, %18 : vector<32x128xf32>
    %20 = arith.negf %19 : vector<32x128xf32>
    %21 = math.exp %20 : vector<32x128xf32>
    %cst_13 = arith.constant 1.000000e+00 : f32
    %22 = vector.broadcast %cst_13 : f32 to vector<32x128xf32>
    %23 = arith.addf %22, %21 : vector<32x128xf32>
    %24 = arith.divf %22, %23 : vector<32x128xf32>
    %25 = vector.extract_strided_slice %15 {offsets = [0, 128], sizes = [32, 128], strides = [1, 1]} : vector<32x384xf32> to vector<32x128xf32>
    %26 = vector.extract_strided_slice %16 {offsets = [0, 128], sizes = [32, 128], strides = [1, 1]} : vector<32x384xf32> to vector<32x128xf32>
    %27 = arith.addf %25, %26 : vector<32x128xf32>
    %28 = arith.negf %27 : vector<32x128xf32>
    %29 = math.exp %28 : vector<32x128xf32>
    %cst_14 = arith.constant 1.000000e+00 : f32
    %30 = vector.broadcast %cst_14 : f32 to vector<32x128xf32>
    %31 = arith.addf %30, %29 : vector<32x128xf32>
    %32 = arith.divf %30, %31 : vector<32x128xf32>
    %33 = vector.extract_strided_slice %15 {offsets = [0, 256], sizes = [32, 128], strides = [1, 1]} : vector<32x384xf32> to vector<32x128xf32>
    %34 = vector.extract_strided_slice %16 {offsets = [0, 256], sizes = [32, 128], strides = [1, 1]} : vector<32x384xf32> to vector<32x128xf32>
    %35 = arith.addf %34, %11 : vector<32x128xf32>
    %36 = arith.mulf %24, %35 : vector<32x128xf32>
    %37 = arith.addf %33, %36 : vector<32x128xf32>
    %38 = math.tanh %37 : vector<32x128xf32>
    %cst_15 = arith.constant 1.000000e+00 : f32
    %39 = vector.broadcast %cst_15 : f32 to vector<32x128xf32>
    %40 = arith.subf %39, %32 : vector<32x128xf32>
    %41 = arith.mulf %40, %38 : vector<32x128xf32>
    %42 = arith.mulf %32, %12 : vector<32x128xf32>
    %43 = arith.addf %41, %42 : vector<32x128xf32>
    %44 = arith.truncf %43 : vector<32x128xf32> to vector<32x128xbf16>
    %45 = vector.extract_strided_slice %7 {offsets = [1, 0, 0], sizes = [1, 32, 384], strides = [1, 1, 1]} : vector<4x32x384xf32> to vector<1x32x384xf32>
    %46 = vector.shape_cast %45 : vector<1x32x384xf32> to vector<32x384xf32>
    %cst_16 = arith.constant dense<0.000000e+00> : vector<32x384xf32>
    %47 = tpu.matmul %44, %8, %cst_16 {dimension_numbers = #tpu.dot_dimension_numbers<[1], [0], [0], [1], [0, 0, 1, 1], [], []>} : vector<32x128xbf16>, vector<128x384xbf16>, vector<32x384xf32> -> vector<32x384xf32>
    %48 = vector.extract_strided_slice %46 {offsets = [0, 0], sizes = [32, 128], strides = [1, 1]} : vector<32x384xf32> to vector<32x128xf32>
    %49 = vector.extract_strided_slice %47 {offsets = [0, 0], sizes = [32, 128], strides = [1, 1]} : vector<32x384xf32> to vector<32x128xf32>
    %50 = arith.addf %48, %49 : vector<32x128xf32>
    %51 = arith.negf %50 : vector<32x128xf32>
    %52 = math.exp %51 : vector<32x128xf32>
    %cst_17 = arith.constant 1.000000e+00 : f32
    %53 = vector.broadcast %cst_17 : f32 to vector<32x128xf32>
    %54 = arith.addf %53, %52 : vector<32x128xf32>
    %55 = arith.divf %53, %54 : vector<32x128xf32>
    %56 = vector.extract_strided_slice %46 {offsets = [0, 128], sizes = [32, 128], strides = [1, 1]} : vector<32x384xf32> to vector<32x128xf32>
    %57 = vector.extract_strided_slice %47 {offsets = [0, 128], sizes = [32, 128], strides = [1, 1]} : vector<32x384xf32> to vector<32x128xf32>
    %58 = arith.addf %56, %57 : vector<32x128xf32>
    %59 = arith.negf %58 : vector<32x128xf32>
    %60 = math.exp %59 : vector<32x128xf32>
    %cst_18 = arith.constant 1.000000e+00 : f32
    %61 = vector.broadcast %cst_18 : f32 to vector<32x128xf32>
    %62 = arith.addf %61, %60 : vector<32x128xf32>
    %63 = arith.divf %61, %62 : vector<32x128xf32>
    %64 = vector.extract_strided_slice %46 {offsets = [0, 256], sizes = [32, 128], strides = [1, 1]} : vector<32x384xf32> to vector<32x128xf32>
    %65 = vector.extract_strided_slice %47 {offsets = [0, 256], sizes = [32, 128], strides = [1, 1]} : vector<32x384xf32> to vector<32x128xf32>
    %66 = arith.addf %65, %11 : vector<32x128xf32>
    %67 = arith.mulf %55, %66 : vector<32x128xf32>
    %68 = arith.addf %64, %67 : vector<32x128xf32>
    %69 = math.tanh %68 : vector<32x128xf32>
    %cst_19 = arith.constant 1.000000e+00 : f32
    %70 = vector.broadcast %cst_19 : f32 to vector<32x128xf32>
    %71 = arith.subf %70, %63 : vector<32x128xf32>
    %72 = arith.mulf %71, %69 : vector<32x128xf32>
    %73 = arith.mulf %63, %43 : vector<32x128xf32>
    %74 = arith.addf %72, %73 : vector<32x128xf32>
    %75 = arith.truncf %74 : vector<32x128xf32> to vector<32x128xbf16>
    %76 = vector.extract_strided_slice %7 {offsets = [2, 0, 0], sizes = [1, 32, 384], strides = [1, 1, 1]} : vector<4x32x384xf32> to vector<1x32x384xf32>
    %77 = vector.shape_cast %76 : vector<1x32x384xf32> to vector<32x384xf32>
    %cst_20 = arith.constant dense<0.000000e+00> : vector<32x384xf32>
    %78 = tpu.matmul %75, %8, %cst_20 {dimension_numbers = #tpu.dot_dimension_numbers<[1], [0], [0], [1], [0, 0, 1, 1], [], []>} : vector<32x128xbf16>, vector<128x384xbf16>, vector<32x384xf32> -> vector<32x384xf32>
    %79 = vector.extract_strided_slice %77 {offsets = [0, 0], sizes = [32, 128], strides = [1, 1]} : vector<32x384xf32> to vector<32x128xf32>
    %80 = vector.extract_strided_slice %78 {offsets = [0, 0], sizes = [32, 128], strides = [1, 1]} : vector<32x384xf32> to vector<32x128xf32>
    %81 = arith.addf %79, %80 : vector<32x128xf32>
    %82 = arith.negf %81 : vector<32x128xf32>
    %83 = math.exp %82 : vector<32x128xf32>
    %cst_21 = arith.constant 1.000000e+00 : f32
    %84 = vector.broadcast %cst_21 : f32 to vector<32x128xf32>
    %85 = arith.addf %84, %83 : vector<32x128xf32>
    %86 = arith.divf %84, %85 : vector<32x128xf32>
    %87 = vector.extract_strided_slice %77 {offsets = [0, 128], sizes = [32, 128], strides = [1, 1]} : vector<32x384xf32> to vector<32x128xf32>
    %88 = vector.extract_strided_slice %78 {offsets = [0, 128], sizes = [32, 128], strides = [1, 1]} : vector<32x384xf32> to vector<32x128xf32>
    %89 = arith.addf %87, %88 : vector<32x128xf32>
    %90 = arith.negf %89 : vector<32x128xf32>
    %91 = math.exp %90 : vector<32x128xf32>
    %cst_22 = arith.constant 1.000000e+00 : f32
    %92 = vector.broadcast %cst_22 : f32 to vector<32x128xf32>
    %93 = arith.addf %92, %91 : vector<32x128xf32>
    %94 = arith.divf %92, %93 : vector<32x128xf32>
    %95 = vector.extract_strided_slice %77 {offsets = [0, 256], sizes = [32, 128], strides = [1, 1]} : vector<32x384xf32> to vector<32x128xf32>
    %96 = vector.extract_strided_slice %78 {offsets = [0, 256], sizes = [32, 128], strides = [1, 1]} : vector<32x384xf32> to vector<32x128xf32>
    %97 = arith.addf %96, %11 : vector<32x128xf32>
    %98 = arith.mulf %86, %97 : vector<32x128xf32>
    %99 = arith.addf %95, %98 : vector<32x128xf32>
    %100 = math.tanh %99 : vector<32x128xf32>
    %cst_23 = arith.constant 1.000000e+00 : f32
    %101 = vector.broadcast %cst_23 : f32 to vector<32x128xf32>
    %102 = arith.subf %101, %94 : vector<32x128xf32>
    %103 = arith.mulf %102, %100 : vector<32x128xf32>
    %104 = arith.mulf %94, %74 : vector<32x128xf32>
    %105 = arith.addf %103, %104 : vector<32x128xf32>
    %106 = arith.truncf %105 : vector<32x128xf32> to vector<32x128xbf16>
    %107 = vector.extract_strided_slice %7 {offsets = [3, 0, 0], sizes = [1, 32, 384], strides = [1, 1, 1]} : vector<4x32x384xf32> to vector<1x32x384xf32>
    %108 = vector.shape_cast %107 : vector<1x32x384xf32> to vector<32x384xf32>
    %cst_24 = arith.constant dense<0.000000e+00> : vector<32x384xf32>
    %109 = tpu.matmul %106, %8, %cst_24 {dimension_numbers = #tpu.dot_dimension_numbers<[1], [0], [0], [1], [0, 0, 1, 1], [], []>} : vector<32x128xbf16>, vector<128x384xbf16>, vector<32x384xf32> -> vector<32x384xf32>
    %110 = vector.extract_strided_slice %108 {offsets = [0, 0], sizes = [32, 128], strides = [1, 1]} : vector<32x384xf32> to vector<32x128xf32>
    %111 = vector.extract_strided_slice %109 {offsets = [0, 0], sizes = [32, 128], strides = [1, 1]} : vector<32x384xf32> to vector<32x128xf32>
    %112 = arith.addf %110, %111 : vector<32x128xf32>
    %113 = arith.negf %112 : vector<32x128xf32>
    %114 = math.exp %113 : vector<32x128xf32>
    %cst_25 = arith.constant 1.000000e+00 : f32
    %115 = vector.broadcast %cst_25 : f32 to vector<32x128xf32>
    %116 = arith.addf %115, %114 : vector<32x128xf32>
    %117 = arith.divf %115, %116 : vector<32x128xf32>
    %118 = vector.extract_strided_slice %108 {offsets = [0, 128], sizes = [32, 128], strides = [1, 1]} : vector<32x384xf32> to vector<32x128xf32>
    %119 = vector.extract_strided_slice %109 {offsets = [0, 128], sizes = [32, 128], strides = [1, 1]} : vector<32x384xf32> to vector<32x128xf32>
    %120 = arith.addf %118, %119 : vector<32x128xf32>
    %121 = arith.negf %120 : vector<32x128xf32>
    %122 = math.exp %121 : vector<32x128xf32>
    %cst_26 = arith.constant 1.000000e+00 : f32
    %123 = vector.broadcast %cst_26 : f32 to vector<32x128xf32>
    %124 = arith.addf %123, %122 : vector<32x128xf32>
    %125 = arith.divf %123, %124 : vector<32x128xf32>
    %126 = vector.extract_strided_slice %108 {offsets = [0, 256], sizes = [32, 128], strides = [1, 1]} : vector<32x384xf32> to vector<32x128xf32>
    %127 = vector.extract_strided_slice %109 {offsets = [0, 256], sizes = [32, 128], strides = [1, 1]} : vector<32x384xf32> to vector<32x128xf32>
    %128 = arith.addf %127, %11 : vector<32x128xf32>
    %129 = arith.mulf %117, %128 : vector<32x128xf32>
    %130 = arith.addf %126, %129 : vector<32x128xf32>
    %131 = math.tanh %130 : vector<32x128xf32>
    %cst_27 = arith.constant 1.000000e+00 : f32
    %132 = vector.broadcast %cst_27 : f32 to vector<32x128xf32>
    %133 = arith.subf %132, %125 : vector<32x128xf32>
    %134 = arith.mulf %133, %131 : vector<32x128xf32>
    %135 = arith.mulf %125, %105 : vector<32x128xf32>
    %136 = arith.addf %134, %135 : vector<32x128xf32>
    %137 = arith.truncf %136 : vector<32x128xf32> to vector<32x128xbf16>
    %c0_28 = arith.constant 0 : index
    %c0_29 = arith.constant 0 : index
    %138 = vector.load %arg6[%c0_28, %c0_29] : memref<128x384xbf16, #tpu.memory_space<vmem>>, vector<128x384xbf16>
    %cst_30 = arith.constant dense<0.000000e+00> : vector<32x384xf32>
    %139 = tpu.matmul %137, %138, %cst_30 {dimension_numbers = #tpu.dot_dimension_numbers<[1], [0], [0], [1], [0, 0, 1, 1], [], []>} : vector<32x128xbf16>, vector<128x384xbf16>, vector<32x384xf32> -> vector<32x384xf32>
    %c0_31 = arith.constant 0 : index
    %c0_32 = arith.constant 0 : index
    %140 = vector.load %arg8[%c0_31, %c0_32] : memref<1x384xf32, #tpu.memory_space<vmem>>, vector<1x384xf32>
    %141 = vector.broadcast %140 : vector<1x384xf32> to vector<32x384xf32>
    %142 = arith.addf %139, %141 : vector<32x384xf32>
    %143 = vector.shape_cast %142 : vector<32x384xf32> to vector<2x16x384xf32>
    %c0_33 = arith.constant 0 : index
    %c0_34 = arith.constant 0 : index
    %144 = vector.load %arg7[%c0_33, %c0_34] : memref<128x384xbf16, #tpu.memory_space<vmem>>, vector<128x384xbf16>
    %c0_35 = arith.constant 0 : index
    %c0_36 = arith.constant 0 : index
    %145 = vector.load %arg9[%c0_35, %c0_36] : memref<1x128xf32, #tpu.memory_space<vmem>>, vector<1x128xf32>
    %146 = vector.shape_cast %145 : vector<1x128xf32> to vector<1x128xf32>
    %147 = vector.broadcast %146 : vector<1x128xf32> to vector<16x128xf32>
    %cst_37 = arith.constant 0.000000e+00 : f32
    %148 = vector.broadcast %cst_37 : f32 to vector<16x128xf32>
    %149 = arith.truncf %148 : vector<16x128xf32> to vector<16x128xbf16>
    %150 = vector.extract_strided_slice %143 {offsets = [0, 0, 0], sizes = [1, 16, 384], strides = [1, 1, 1]} : vector<2x16x384xf32> to vector<1x16x384xf32>
    %151 = vector.shape_cast %150 : vector<1x16x384xf32> to vector<16x384xf32>
    %cst_38 = arith.constant dense<0.000000e+00> : vector<16x384xf32>
    %152 = tpu.matmul %149, %144, %cst_38 {dimension_numbers = #tpu.dot_dimension_numbers<[1], [0], [0], [1], [0, 0, 1, 1], [], []>} : vector<16x128xbf16>, vector<128x384xbf16>, vector<16x384xf32> -> vector<16x384xf32>
    %153 = vector.extract_strided_slice %151 {offsets = [0, 0], sizes = [16, 128], strides = [1, 1]} : vector<16x384xf32> to vector<16x128xf32>
    %154 = vector.extract_strided_slice %152 {offsets = [0, 0], sizes = [16, 128], strides = [1, 1]} : vector<16x384xf32> to vector<16x128xf32>
    %155 = arith.addf %153, %154 : vector<16x128xf32>
    %156 = arith.negf %155 : vector<16x128xf32>
    %157 = math.exp %156 : vector<16x128xf32>
    %cst_39 = arith.constant 1.000000e+00 : f32
    %158 = vector.broadcast %cst_39 : f32 to vector<16x128xf32>
    %159 = arith.addf %158, %157 : vector<16x128xf32>
    %160 = arith.divf %158, %159 : vector<16x128xf32>
    %161 = vector.extract_strided_slice %151 {offsets = [0, 128], sizes = [16, 128], strides = [1, 1]} : vector<16x384xf32> to vector<16x128xf32>
    %162 = vector.extract_strided_slice %152 {offsets = [0, 128], sizes = [16, 128], strides = [1, 1]} : vector<16x384xf32> to vector<16x128xf32>
    %163 = arith.addf %161, %162 : vector<16x128xf32>
    %164 = arith.negf %163 : vector<16x128xf32>
    %165 = math.exp %164 : vector<16x128xf32>
    %cst_40 = arith.constant 1.000000e+00 : f32
    %166 = vector.broadcast %cst_40 : f32 to vector<16x128xf32>
    %167 = arith.addf %166, %165 : vector<16x128xf32>
    %168 = arith.divf %166, %167 : vector<16x128xf32>
    %169 = vector.extract_strided_slice %151 {offsets = [0, 256], sizes = [16, 128], strides = [1, 1]} : vector<16x384xf32> to vector<16x128xf32>
    %170 = vector.extract_strided_slice %152 {offsets = [0, 256], sizes = [16, 128], strides = [1, 1]} : vector<16x384xf32> to vector<16x128xf32>
    %171 = arith.addf %170, %147 : vector<16x128xf32>
    %172 = arith.mulf %160, %171 : vector<16x128xf32>
    %173 = arith.addf %169, %172 : vector<16x128xf32>
    %174 = math.tanh %173 : vector<16x128xf32>
    %cst_41 = arith.constant 1.000000e+00 : f32
    %175 = vector.broadcast %cst_41 : f32 to vector<16x128xf32>
    %176 = arith.subf %175, %168 : vector<16x128xf32>
    %177 = arith.mulf %176, %174 : vector<16x128xf32>
    %178 = arith.mulf %168, %148 : vector<16x128xf32>
    %179 = arith.addf %177, %178 : vector<16x128xf32>
    %180 = arith.truncf %179 : vector<16x128xf32> to vector<16x128xbf16>
    %181 = vector.extract_strided_slice %143 {offsets = [1, 0, 0], sizes = [1, 16, 384], strides = [1, 1, 1]} : vector<2x16x384xf32> to vector<1x16x384xf32>
    %182 = vector.shape_cast %181 : vector<1x16x384xf32> to vector<16x384xf32>
    %cst_42 = arith.constant dense<0.000000e+00> : vector<16x384xf32>
    %183 = tpu.matmul %180, %144, %cst_42 {dimension_numbers = #tpu.dot_dimension_numbers<[1], [0], [0], [1], [0, 0, 1, 1], [], []>} : vector<16x128xbf16>, vector<128x384xbf16>, vector<16x384xf32> -> vector<16x384xf32>
    %184 = vector.extract_strided_slice %182 {offsets = [0, 0], sizes = [16, 128], strides = [1, 1]} : vector<16x384xf32> to vector<16x128xf32>
    %185 = vector.extract_strided_slice %183 {offsets = [0, 0], sizes = [16, 128], strides = [1, 1]} : vector<16x384xf32> to vector<16x128xf32>
    %186 = arith.addf %184, %185 : vector<16x128xf32>
    %187 = arith.negf %186 : vector<16x128xf32>
    %188 = math.exp %187 : vector<16x128xf32>
    %cst_43 = arith.constant 1.000000e+00 : f32
    %189 = vector.broadcast %cst_43 : f32 to vector<16x128xf32>
    %190 = arith.addf %189, %188 : vector<16x128xf32>
    %191 = arith.divf %189, %190 : vector<16x128xf32>
    %192 = vector.extract_strided_slice %182 {offsets = [0, 128], sizes = [16, 128], strides = [1, 1]} : vector<16x384xf32> to vector<16x128xf32>
    %193 = vector.extract_strided_slice %183 {offsets = [0, 128], sizes = [16, 128], strides = [1, 1]} : vector<16x384xf32> to vector<16x128xf32>
    %194 = arith.addf %192, %193 : vector<16x128xf32>
    %195 = arith.negf %194 : vector<16x128xf32>
    %196 = math.exp %195 : vector<16x128xf32>
    %cst_44 = arith.constant 1.000000e+00 : f32
    %197 = vector.broadcast %cst_44 : f32 to vector<16x128xf32>
    %198 = arith.addf %197, %196 : vector<16x128xf32>
    %199 = arith.divf %197, %198 : vector<16x128xf32>
    %200 = vector.extract_strided_slice %182 {offsets = [0, 256], sizes = [16, 128], strides = [1, 1]} : vector<16x384xf32> to vector<16x128xf32>
    %201 = vector.extract_strided_slice %183 {offsets = [0, 256], sizes = [16, 128], strides = [1, 1]} : vector<16x384xf32> to vector<16x128xf32>
    %202 = arith.addf %201, %147 : vector<16x128xf32>
    %203 = arith.mulf %191, %202 : vector<16x128xf32>
    %204 = arith.addf %200, %203 : vector<16x128xf32>
    %205 = math.tanh %204 : vector<16x128xf32>
    %cst_45 = arith.constant 1.000000e+00 : f32
    %206 = vector.broadcast %cst_45 : f32 to vector<16x128xf32>
    %207 = arith.subf %206, %199 : vector<16x128xf32>
    %208 = arith.mulf %207, %205 : vector<16x128xf32>
    %209 = arith.mulf %199, %179 : vector<16x128xf32>
    %210 = arith.addf %208, %209 : vector<16x128xf32>
    %211 = arith.truncf %210 : vector<16x128xf32> to vector<16x128xbf16>
    %c0_46 = arith.constant 0 : index
    %c0_47 = arith.constant 0 : index
    %212 = vector.load %arg10[%c0_46, %c0_47] : memref<128x128xbf16, #tpu.memory_space<vmem>>, vector<128x128xbf16>
    %cst_48 = arith.constant dense<0.000000e+00> : vector<16x128xf32>
    %213 = tpu.matmul %211, %212, %cst_48 {dimension_numbers = #tpu.dot_dimension_numbers<[1], [0], [0], [1], [0, 0, 1, 1], [], []>} : vector<16x128xbf16>, vector<128x128xbf16>, vector<16x128xf32> -> vector<16x128xf32>
    %c0_49 = arith.constant 0 : index
    %c0_50 = arith.constant 0 : index
    %214 = vector.load %arg11[%c0_49, %c0_50] : memref<1x128xf32, #tpu.memory_space<vmem>>, vector<1x128xf32>
    %215 = vector.broadcast %214 : vector<1x128xf32> to vector<16x128xf32>
    %216 = arith.addf %213, %215 : vector<16x128xf32>
    %c0_51 = arith.constant 0 : index
    %c0_52 = arith.constant 0 : index
    %217 = vector.load %arg12[%c0_51, %c0_52] : memref<16x128xf32, #tpu.memory_space<vmem>>, vector<16x128xf32>
    tpu.vector_store %arg12[%c0_51, %c0_52], %216 {strides = array<i32>} : memref<16x128xf32, #tpu.memory_space<vmem>>, vector<16x128xf32>,
    return
  }
  func.func @transform_0(%arg0: i32) -> (i32, i32, i32, i32) {
    %c0_i32 = arith.constant 0 : i32
    %c0_i32_0 = arith.constant 0 : i32
    %c0_i32_1 = arith.constant 0 : i32
    %c0_i32_2 = arith.constant 0 : i32
    return %c0_i32, %c0_i32_0, %arg0, %c0_i32_1 : i32, i32, i32, i32
  }
  func.func @transform_1(%arg0: i32) -> (i32, i32) {
    %c0_i32 = arith.constant 0 : i32
    %c0_i32_0 = arith.constant 0 : i32
    %c0_i32_1 = arith.constant 0 : i32
    return %c0_i32, %c0_i32_0 : i32, i32
  }
  func.func @transform_2(%arg0: i32) -> (i32, i32) {
    %c0_i32 = arith.constant 0 : i32
    %c0_i32_0 = arith.constant 0 : i32
    %c0_i32_1 = arith.constant 0 : i32
    return %c0_i32, %c0_i32_0 : i32, i32
  }
  func.func @transform_3(%arg0: i32) -> (i32, i32) {
    %c0_i32 = arith.constant 0 : i32
    %c0_i32_0 = arith.constant 0 : i32
    %c0_i32_1 = arith.constant 0 : i32
    return %c0_i32, %c0_i32_0 : i32, i32
  }
  func.func @transform_4(%arg0: i32) -> (i32, i32) {
    %c0_i32 = arith.constant 0 : i32
    %c0_i32_0 = arith.constant 0 : i32
    %c0_i32_1 = arith.constant 0 : i32
    return %c0_i32, %c0_i32_0 : i32, i32
  }
  func.func @transform_5(%arg0: i32) -> (i32, i32) {
    %c0_i32 = arith.constant 0 : i32
    %c0_i32_0 = arith.constant 0 : i32
    %c0_i32_1 = arith.constant 0 : i32
    return %c0_i32, %c0_i32_0 : i32, i32
  }
  func.func @transform_6(%arg0: i32) -> (i32, i32) {
    %c0_i32 = arith.constant 0 : i32
    %c0_i32_0 = arith.constant 0 : i32
    %c0_i32_1 = arith.constant 0 : i32
    return %c0_i32, %c0_i32_0 : i32, i32
  }
  func.func @transform_7(%arg0: i32) -> (i32, i32) {
    %c0_i32 = arith.constant 0 : i32
    %c0_i32_0 = arith.constant 0 : i32
    %c0_i32_1 = arith.constant 0 : i32
    return %c0_i32, %c0_i32_0 : i32, i32
  }
  func.func @transform_8(%arg0: i32) -> (i32, i32) {
    %c0_i32 = arith.constant 0 : i32
    %c0_i32_0 = arith.constant 0 : i32
    %c0_i32_1 = arith.constant 0 : i32
    return %c0_i32, %c0_i32_0 : i32, i32
  }
  func.func @transform_9(%arg0: i32) -> (i32, i32) {
    %c0_i32 = arith.constant 0 : i32
    %c0_i32_0 = arith.constant 0 : i32
    %c0_i32_1 = arith.constant 0 : i32
    return %c0_i32, %c0_i32_0 : i32, i32
  }
  func.func @transform_10(%arg0: i32) -> (i32, i32) {
    %c0_i32 = arith.constant 0 : i32
    %c0_i32_0 = arith.constant 0 : i32
    %c0_i32_1 = arith.constant 0 : i32
    return %c0_i32, %c0_i32_0 : i32, i32
  }
  func.func @transform_11(%arg0: i32) -> (i32, i32) {
    %c0_i32 = arith.constant 0 : i32
    %c0_i32_0 = arith.constant 0 : i32
    return %arg0, %c0_i32 : i32, i32
  }
}

module attributes {stable_mosaic.version = 11 : i64} {
  func.func @segrnn_kernel(%arg0: i32, %arg1: memref<4x2x16x4xbf16, #tpu.memory_space<vmem>>, %arg2: memref<4x384xbf16, #tpu.memory_space<vmem>>, %arg3: memref<128x384xbf16, #tpu.memory_space<vmem>>, %arg4: memref<1x384xf32, #tpu.memory_space<vmem>>, %arg5: memref<1x128xf32, #tpu.memory_space<vmem>>, %arg6: memref<128x384xbf16, #tpu.memory_space<vmem>>, %arg7: memref<128x384xbf16, #tpu.memory_space<vmem>>, %arg8: memref<1x384xf32, #tpu.memory_space<vmem>>, %arg9: memref<1x128xf32, #tpu.memory_space<vmem>>, %arg10: memref<128x128xbf16, #tpu.memory_space<vmem>>, %arg11: memref<1x128xf32, #tpu.memory_space<vmem>>, %arg12: memref<16x128xf32, #tpu.memory_space<vmem>>) attributes {dimension_semantics = [#tpu.dimension_semantics<parallel>], iteration_bounds = array<i64: 1>, scalar_prefetch = 0 : i64, scratch_operands = 0 : i64, tpu.core_type = #tpu.core_type<tc>, window_params = [{transform_indices = @transform_0, window_bounds = array<i64: 4, 2, 16, 4>}, {pipeline_mode = #tpu.pipeline_mode<synchronous>, transform_indices = @transform_1, window_bounds = array<i64: 4, 384>}, {pipeline_mode = #tpu.pipeline_mode<synchronous>, transform_indices = @transform_2, window_bounds = array<i64: 128, 384>}, {pipeline_mode = #tpu.pipeline_mode<synchronous>, transform_indices = @transform_3, window_bounds = array<i64: 1, 384>}, {pipeline_mode = #tpu.pipeline_mode<synchronous>, transform_indices = @transform_4, window_bounds = array<i64: 1, 128>}, {pipeline_mode = #tpu.pipeline_mode<synchronous>, transform_indices = @transform_5, window_bounds = array<i64: 128, 384>}, {pipeline_mode = #tpu.pipeline_mode<synchronous>, transform_indices = @transform_6, window_bounds = array<i64: 128, 384>}, {pipeline_mode = #tpu.pipeline_mode<synchronous>, transform_indices = @transform_7, window_bounds = array<i64: 1, 384>}, {pipeline_mode = #tpu.pipeline_mode<synchronous>, transform_indices = @transform_8, window_bounds = array<i64: 1, 128>}, {pipeline_mode = #tpu.pipeline_mode<synchronous>, transform_indices = @transform_9, window_bounds = array<i64: 128, 128>}, {pipeline_mode = #tpu.pipeline_mode<synchronous>, transform_indices = @transform_10, window_bounds = array<i64: 1, 128>}, {transform_indices = @transform_11, window_bounds = array<i64: 16, 128>}]} {
    %c0 = arith.constant 0 : index
    %c0_0 = arith.constant 0 : index
    %c0_1 = arith.constant 0 : index
    %c0_2 = arith.constant 0 : index
    %0 = vector.load %arg1[%c0, %c0_0, %c0_1, %c0_2] : memref<4x2x16x4xbf16, #tpu.memory_space<vmem>>, vector<4x2x16x4xbf16>
    %1 = vector.shape_cast %0 : vector<4x2x16x4xbf16> to vector<128x4xbf16>
    %c0_3 = arith.constant 0 : index
    %c0_4 = arith.constant 0 : index
    %2 = vector.load %arg2[%c0_3, %c0_4] : memref<4x384xbf16, #tpu.memory_space<vmem>>, vector<4x384xbf16>
    %cst = arith.constant dense<0.000000e+00> : vector<128x384xf32>
    %3 = tpu.matmul %1, %2, %cst {dimension_numbers = #tpu.dot_dimension_numbers<[1], [0], [0], [1], [0, 0, 1, 1], [], []>} : vector<128x4xbf16>, vector<4x384xbf16>, vector<128x384xf32> -> vector<128x384xf32>
    %c0_5 = arith.constant 0 : index
    %c0_6 = arith.constant 0 : index
    %4 = vector.load %arg4[%c0_5, %c0_6] : memref<1x384xf32, #tpu.memory_space<vmem>>, vector<1x384xf32>
    %5 = vector.broadcast %4 : vector<1x384xf32> to vector<128x384xf32>
    %6 = arith.addf %3, %5 : vector<128x384xf32>
    %7 = vector.shape_cast %6 : vector<128x384xf32> to vector<4x32x384xf32>
    %c0_7 = arith.constant 0 : index
    %c0_8 = arith.constant 0 : index
    %8 = vector.load %arg3[%c0_7, %c0_8] : memref<128x384xbf16, #tpu.memory_space<vmem>>, vector<128x384xbf16>
    %c0_9 = arith.constant 0 : index
    %c0_10 = arith.constant 0 : index
    %9 = vector.load %arg5[%c0_9, %c0_10] : memref<1x128xf32, #tpu.memory_space<vmem>>, vector<1x128xf32>
    %10 = vector.shape_cast %9 : vector<1x128xf32> to vector<1x128xf32>
    %11 = vector.broadcast %10 : vector<1x128xf32> to vector<32x128xf32>
    %cst_11 = arith.constant 0.000000e+00 : f32
    %12 = vector.broadcast %cst_11 : f32 to vector<32x128xf32>
    %13 = arith.truncf %12 : vector<32x128xf32> to vector<32x128xbf16>
    %14 = vector.extract_strided_slice %7 {offsets = [0, 0, 0], sizes = [1, 32, 384], strides = [1, 1, 1]} : vector<4x32x384xf32> to vector<1x32x384xf32>
    %15 = vector.shape_cast %14 : vector<1x32x384xf32> to vector<32x384xf32>
    %cst_12 = arith.constant dense<0.000000e+00> : vector<32x384xf32>
    %16 = tpu.matmul %13, %8, %cst_12 {dimension_numbers = #tpu.dot_dimension_numbers<[1], [0], [0], [1], [0, 0, 1, 1], [], []>} : vector<32x128xbf16>, vector<128x384xbf16>, vector<32x384xf32> -> vector<32x384xf32>
    %17 = vector.extract_strided_slice %15 {offsets = [0, 0], sizes = [32, 128], strides = [1, 1]} : vector<32x384xf32> to vector<32x128xf32>
    %18 = vector.extract_strided_slice %16 {offsets = [0, 0], sizes = [32, 128], strides = [1, 1]} : vector<32x384xf32> to vector<32x128xf32>
    %19 = arith.addf %17, %18 : vector<32x128xf32>
    %20 = arith.negf %19 : vector<32x128xf32>
    %21 = math.exp %20 : vector<32x128xf32>
    %cst_13 = arith.constant 1.000000e+00 : f32
    %22 = vector.broadcast %cst_13 : f32 to vector<32x128xf32>
    %23 = arith.addf %22, %21 : vector<32x128xf32>
    %24 = arith.divf %22, %23 : vector<32x128xf32>
    %25 = vector.extract_strided_slice %15 {offsets = [0, 128], sizes = [32, 128], strides = [1, 1]} : vector<32x384xf32> to vector<32x128xf32>
    %26 = vector.extract_strided_slice %16 {offsets = [0, 128], sizes = [32, 128], strides = [1, 1]} : vector<32x384xf32> to vector<32x128xf32>
    %27 = arith.addf %25, %26 : vector<32x128xf32>
    %28 = arith.negf %27 : vector<32x128xf32>
    %29 = math.exp %28 : vector<32x128xf32>
    %cst_14 = arith.constant 1.000000e+00 : f32
    %30 = vector.broadcast %cst_14 : f32 to vector<32x128xf32>
    %31 = arith.addf %30, %29 : vector<32x128xf32>
    %32 = arith.divf %30, %31 : vector<32x128xf32>
    %33 = vector.extract_strided_slice %15 {offsets = [0, 256], sizes = [32, 128], strides = [1, 1]} : vector<32x384xf32> to vector<32x128xf32>
    %34 = vector.extract_strided_slice %16 {offsets = [0, 256], sizes = [32, 128], strides = [1, 1]} : vector<32x384xf32> to vector<32x128xf32>
    %35 = arith.addf %34, %11 : vector<32x128xf32>
    %36 = arith.mulf %24, %35 : vector<32x128xf32>
    %37 = arith.addf %33, %36 : vector<32x128xf32>
    %38 = math.tanh %37 : vector<32x128xf32>
    %cst_15 = arith.constant 1.000000e+00 : f32
    %39 = vector.broadcast %cst_15 : f32 to vector<32x128xf32>
    %40 = arith.subf %39, %32 : vector<32x128xf32>
    %41 = arith.mulf %40, %38 : vector<32x128xf32>
    %42 = arith.mulf %32, %12 : vector<32x128xf32>
    %43 = arith.addf %41, %42 : vector<32x128xf32>
    %44 = arith.truncf %43 : vector<32x128xf32> to vector<32x128xbf16>
    %45 = vector.extract_strided_slice %7 {offsets = [1, 0, 0], sizes = [1, 32, 384], strides = [1, 1, 1]} : vector<4x32x384xf32> to vector<1x32x384xf32>
    %46 = vector.shape_cast %45 : vector<1x32x384xf32> to vector<32x384xf32>
    %cst_16 = arith.constant dense<0.000000e+00> : vector<32x384xf32>
    %47 = tpu.matmul %44, %8, %cst_16 {dimension_numbers = #tpu.dot_dimension_numbers<[1], [0], [0], [1], [0, 0, 1, 1], [], []>} : vector<32x128xbf16>, vector<128x384xbf16>, vector<32x384xf32> -> vector<32x384xf32>
    %48 = vector.extract_strided_slice %46 {offsets = [0, 0], sizes = [32, 128], strides = [1, 1]} : vector<32x384xf32> to vector<32x128xf32>
    %49 = vector.extract_strided_slice %47 {offsets = [0, 0], sizes = [32, 128], strides = [1, 1]} : vector<32x384xf32> to vector<32x128xf32>
    %50 = arith.addf %48, %49 : vector<32x128xf32>
    %51 = arith.negf %50 : vector<32x128xf32>
    %52 = math.exp %51 : vector<32x128xf32>
    %cst_17 = arith.constant 1.000000e+00 : f32
    %53 = vector.broadcast %cst_17 : f32 to vector<32x128xf32>
    %54 = arith.addf %53, %52 : vector<32x128xf32>
    %55 = arith.divf %53, %54 : vector<32x128xf32>
    %56 = vector.extract_strided_slice %46 {offsets = [0, 128], sizes = [32, 128], strides = [1, 1]} : vector<32x384xf32> to vector<32x128xf32>
    %57 = vector.extract_strided_slice %47 {offsets = [0, 128], sizes = [32, 128], strides = [1, 1]} : vector<32x384xf32> to vector<32x128xf32>
    %58 = arith.addf %56, %57 : vector<32x128xf32>
    %59 = arith.negf %58 : vector<32x128xf32>
    %60 = math.exp %59 : vector<32x128xf32>
    %cst_18 = arith.constant 1.000000e+00 : f32
    %61 = vector.broadcast %cst_18 : f32 to vector<32x128xf32>
    %62 = arith.addf %61, %60 : vector<32x128xf32>
    %63 = arith.divf %61, %62 : vector<32x128xf32>
    %64 = vector.extract_strided_slice %46 {offsets = [0, 256], sizes = [32, 128], strides = [1, 1]} : vector<32x384xf32> to vector<32x128xf32>
    %65 = vector.extract_strided_slice %47 {offsets = [0, 256], sizes = [32, 128], strides = [1, 1]} : vector<32x384xf32> to vector<32x128xf32>
    %66 = arith.addf %65, %11 : vector<32x128xf32>
    %67 = arith.mulf %55, %66 : vector<32x128xf32>
    %68 = arith.addf %64, %67 : vector<32x128xf32>
    %69 = math.tanh %68 : vector<32x128xf32>
    %cst_19 = arith.constant 1.000000e+00 : f32
    %70 = vector.broadcast %cst_19 : f32 to vector<32x128xf32>
    %71 = arith.subf %70, %63 : vector<32x128xf32>
    %72 = arith.mulf %71, %69 : vector<32x128xf32>
    %73 = arith.mulf %63, %43 : vector<32x128xf32>
    %74 = arith.addf %72, %73 : vector<32x128xf32>
    %75 = arith.truncf %74 : vector<32x128xf32> to vector<32x128xbf16>
    %76 = vector.extract_strided_slice %7 {offsets = [2, 0, 0], sizes = [1, 32, 384], strides = [1, 1, 1]} : vector<4x32x384xf32> to vector<1x32x384xf32>
    %77 = vector.shape_cast %76 : vector<1x32x384xf32> to vector<32x384xf32>
    %cst_20 = arith.constant dense<0.000000e+00> : vector<32x384xf32>
    %78 = tpu.matmul %75, %8, %cst_20 {dimension_numbers = #tpu.dot_dimension_numbers<[1], [0], [0], [1], [0, 0, 1, 1], [], []>} : vector<32x128xbf16>, vector<128x384xbf16>, vector<32x384xf32> -> vector<32x384xf32>
    %79 = vector.extract_strided_slice %77 {offsets = [0, 0], sizes = [32, 128], strides = [1, 1]} : vector<32x384xf32> to vector<32x128xf32>
    %80 = vector.extract_strided_slice %78 {offsets = [0, 0], sizes = [32, 128], strides = [1, 1]} : vector<32x384xf32> to vector<32x128xf32>
    %81 = arith.addf %79, %80 : vector<32x128xf32>
    %82 = arith.negf %81 : vector<32x128xf32>
    %83 = math.exp %82 : vector<32x128xf32>
    %cst_21 = arith.constant 1.000000e+00 : f32
    %84 = vector.broadcast %cst_21 : f32 to vector<32x128xf32>
    %85 = arith.addf %84, %83 : vector<32x128xf32>
    %86 = arith.divf %84, %85 : vector<32x128xf32>
    %87 = vector.extract_strided_slice %77 {offsets = [0, 128], sizes = [32, 128], strides = [1, 1]} : vector<32x384xf32> to vector<32x128xf32>
    %88 = vector.extract_strided_slice %78 {offsets = [0, 128], sizes = [32, 128], strides = [1, 1]} : vector<32x384xf32> to vector<32x128xf32>
    %89 = arith.addf %87, %88 : vector<32x128xf32>
    %90 = arith.negf %89 : vector<32x128xf32>
    %91 = math.exp %90 : vector<32x128xf32>
    %cst_22 = arith.constant 1.000000e+00 : f32
    %92 = vector.broadcast %cst_22 : f32 to vector<32x128xf32>
    %93 = arith.addf %92, %91 : vector<32x128xf32>
    %94 = arith.divf %92, %93 : vector<32x128xf32>
    %95 = vector.extract_strided_slice %77 {offsets = [0, 256], sizes = [32, 128], strides = [1, 1]} : vector<32x384xf32> to vector<32x128xf32>
    %96 = vector.extract_strided_slice %78 {offsets = [0, 256], sizes = [32, 128], strides = [1, 1]} : vector<32x384xf32> to vector<32x128xf32>
    %97 = arith.addf %96, %11 : vector<32x128xf32>
    %98 = arith.mulf %86, %97 : vector<32x128xf32>
    %99 = arith.addf %95, %98 : vector<32x128xf32>
    %100 = math.tanh %99 : vector<32x128xf32>
    %cst_23 = arith.constant 1.000000e+00 : f32
    %101 = vector.broadcast %cst_23 : f32 to vector<32x128xf32>
    %102 = arith.subf %101, %94 : vector<32x128xf32>
    %103 = arith.mulf %102, %100 : vector<32x128xf32>
    %104 = arith.mulf %94, %74 : vector<32x128xf32>
    %105 = arith.addf %103, %104 : vector<32x128xf32>
    %106 = arith.truncf %105 : vector<32x128xf32> to vector<32x128xbf16>
    %107 = vector.extract_strided_slice %7 {offsets = [3, 0, 0], sizes = [1, 32, 384], strides = [1, 1, 1]} : vector<4x32x384xf32> to vector<1x32x384xf32>
    %108 = vector.shape_cast %107 : vector<1x32x384xf32> to vector<32x384xf32>
    %cst_24 = arith.constant dense<0.000000e+00> : vector<32x384xf32>
    %109 = tpu.matmul %106, %8, %cst_24 {dimension_numbers = #tpu.dot_dimension_numbers<[1], [0], [0], [1], [0, 0, 1, 1], [], []>} : vector<32x128xbf16>, vector<128x384xbf16>, vector<32x384xf32> -> vector<32x384xf32>
    %110 = vector.extract_strided_slice %108 {offsets = [0, 0], sizes = [32, 128], strides = [1, 1]} : vector<32x384xf32> to vector<32x128xf32>
    %111 = vector.extract_strided_slice %109 {offsets = [0, 0], sizes = [32, 128], strides = [1, 1]} : vector<32x384xf32> to vector<32x128xf32>
    %112 = arith.addf %110, %111 : vector<32x128xf32>
    %113 = arith.negf %112 : vector<32x128xf32>
    %114 = math.exp %113 : vector<32x128xf32>
    %cst_25 = arith.constant 1.000000e+00 : f32
    %115 = vector.broadcast %cst_25 : f32 to vector<32x128xf32>
    %116 = arith.addf %115, %114 : vector<32x128xf32>
    %117 = arith.divf %115, %116 : vector<32x128xf32>
    %118 = vector.extract_strided_slice %108 {offsets = [0, 128], sizes = [32, 128], strides = [1, 1]} : vector<32x384xf32> to vector<32x128xf32>
    %119 = vector.extract_strided_slice %109 {offsets = [0, 128], sizes = [32, 128], strides = [1, 1]} : vector<32x384xf32> to vector<32x128xf32>
    %120 = arith.addf %118, %119 : vector<32x128xf32>
    %121 = arith.negf %120 : vector<32x128xf32>
    %122 = math.exp %121 : vector<32x128xf32>
    %cst_26 = arith.constant 1.000000e+00 : f32
    %123 = vector.broadcast %cst_26 : f32 to vector<32x128xf32>
    %124 = arith.addf %123, %122 : vector<32x128xf32>
    %125 = arith.divf %123, %124 : vector<32x128xf32>
    %126 = vector.extract_strided_slice %108 {offsets = [0, 256], sizes = [32, 128], strides = [1, 1]} : vector<32x384xf32> to vector<32x128xf32>
    %127 = vector.extract_strided_slice %109 {offsets = [0, 256], sizes = [32, 128], strides = [1, 1]} : vector<32x384xf32> to vector<32x128xf32>
    %128 = arith.addf %127, %11 : vector<32x128xf32>
    %129 = arith.mulf %117, %128 : vector<32x128xf32>
    %130 = arith.addf %126, %129 : vector<32x128xf32>
    %131 = math.tanh %130 : vector<32x128xf32>
    %cst_27 = arith.constant 1.000000e+00 : f32
    %132 = vector.broadcast %cst_27 : f32 to vector<32x128xf32>
    %133 = arith.subf %132, %125 : vector<32x128xf32>
    %134 = arith.mulf %133, %131 : vector<32x128xf32>
    %135 = arith.mulf %125, %105 : vector<32x128xf32>
    %136 = arith.addf %134, %135 : vector<32x128xf32>
    %137 = arith.truncf %136 : vector<32x128xf32> to vector<32x128xbf16>
    %c0_28 = arith.constant 0 : index
    %c0_29 = arith.constant 0 : index
    %138 = vector.load %arg6[%c0_28, %c0_29] : memref<128x384xbf16, #tpu.memory_space<vmem>>, vector<128x384xbf16>
    %cst_30 = arith.constant dense<0.000000e+00> : vector<32x384xf32>
    %139 = tpu.matmul %137, %138, %cst_30 {dimension_numbers = #tpu.dot_dimension_numbers<[1], [0], [0], [1], [0, 0, 1, 1], [], []>} : vector<32x128xbf16>, vector<128x384xbf16>, vector<32x384xf32> -> vector<32x384xf32>
    %c0_31 = arith.constant 0 : index
    %c0_32 = arith.constant 0 : index
    %140 = vector.load %arg8[%c0_31, %c0_32] : memref<1x384xf32, #tpu.memory_space<vmem>>, vector<1x384xf32>
    %141 = vector.broadcast %140 : vector<1x384xf32> to vector<32x384xf32>
    %142 = arith.addf %139, %141 : vector<32x384xf32>
    %143 = vector.shape_cast %142 : vector<32x384xf32> to vector<2x16x384xf32>
    %c0_33 = arith.constant 0 : index
    %c0_34 = arith.constant 0 : index
    %144 = vector.load %arg7[%c0_33, %c0_34] : memref<128x384xbf16, #tpu.memory_space<vmem>>, vector<128x384xbf16>
    %c0_35 = arith.constant 0 : index
    %c0_36 = arith.constant 0 : index
    %145 = vector.load %arg9[%c0_35, %c0_36] : memref<1x128xf32, #tpu.memory_space<vmem>>, vector<1x128xf32>
    %146 = vector.shape_cast %145 : vector<1x128xf32> to vector<1x128xf32>
    %147 = vector.broadcast %146 : vector<1x128xf32> to vector<16x128xf32>
    %cst_37 = arith.constant 0.000000e+00 : f32
    %148 = vector.broadcast %cst_37 : f32 to vector<16x128xf32>
    %149 = arith.truncf %148 : vector<16x128xf32> to vector<16x128xbf16>
    %150 = vector.extract_strided_slice %143 {offsets = [0, 0, 0], sizes = [1, 16, 384], strides = [1, 1, 1]} : vector<2x16x384xf32> to vector<1x16x384xf32>
    %151 = vector.shape_cast %150 : vector<1x16x384xf32> to vector<16x384xf32>
    %cst_38 = arith.constant dense<0.000000e+00> : vector<16x384xf32>
    %152 = tpu.matmul %149, %144, %cst_38 {dimension_numbers = #tpu.dot_dimension_numbers<[1], [0], [0], [1], [0, 0, 1, 1], [], []>} : vector<16x128xbf16>, vector<128x384xbf16>, vector<16x384xf32> -> vector<16x384xf32>
    %153 = vector.extract_strided_slice %151 {offsets = [0, 0], sizes = [16, 128], strides = [1, 1]} : vector<16x384xf32> to vector<16x128xf32>
    %154 = vector.extract_strided_slice %152 {offsets = [0, 0], sizes = [16, 128], strides = [1, 1]} : vector<16x384xf32> to vector<16x128xf32>
    %155 = arith.addf %153, %154 : vector<16x128xf32>
    %156 = arith.negf %155 : vector<16x128xf32>
    %157 = math.exp %156 : vector<16x128xf32>
    %cst_39 = arith.constant 1.000000e+00 : f32
    %158 = vector.broadcast %cst_39 : f32 to vector<16x128xf32>
    %159 = arith.addf %158, %157 : vector<16x128xf32>
    %160 = arith.divf %158, %159 : vector<16x128xf32>
    %161 = vector.extract_strided_slice %151 {offsets = [0, 128], sizes = [16, 128], strides = [1, 1]} : vector<16x384xf32> to vector<16x128xf32>
    %162 = vector.extract_strided_slice %152 {offsets = [0, 128], sizes = [16, 128], strides = [1, 1]} : vector<16x384xf32> to vector<16x128xf32>
    %163 = arith.addf %161, %162 : vector<16x128xf32>
    %164 = arith.negf %163 : vector<16x128xf32>
    %165 = math.exp %164 : vector<16x128xf32>
    %cst_40 = arith.constant 1.000000e+00 : f32
    %166 = vector.broadcast %cst_40 : f32 to vector<16x128xf32>
    %167 = arith.addf %166, %165 : vector<16x128xf32>
    %168 = arith.divf %166, %167 : vector<16x128xf32>
    %169 = vector.extract_strided_slice %151 {offsets = [0, 256], sizes = [16, 128], strides = [1, 1]} : vector<16x384xf32> to vector<16x128xf32>
    %170 = vector.extract_strided_slice %152 {offsets = [0, 256], sizes = [16, 128], strides = [1, 1]} : vector<16x384xf32> to vector<16x128xf32>
    %171 = arith.addf %170, %147 : vector<16x128xf32>
    %172 = arith.mulf %160, %171 : vector<16x128xf32>
    %173 = arith.addf %169, %172 : vector<16x128xf32>
    %174 = math.tanh %173 : vector<16x128xf32>
    %cst_41 = arith.constant 1.000000e+00 : f32
    %175 = vector.broadcast %cst_41 : f32 to vector<16x128xf32>
    %176 = arith.subf %175, %168 : vector<16x128xf32>
    %177 = arith.mulf %176, %174 : vector<16x128xf32>
    %178 = arith.mulf %168, %148 : vector<16x128xf32>
    %179 = arith.addf %177, %178 : vector<16x128xf32>
    %180 = arith.truncf %179 : vector<16x128xf32> to vector<16x128xbf16>
    %181 = vector.extract_strided_slice %143 {offsets = [1, 0, 0], sizes = [1, 16, 384], strides = [1, 1, 1]} : vector<2x16x384xf32> to vector<1x16x384xf32>
    %182 = vector.shape_cast %181 : vector<1x16x384xf32> to vector<16x384xf32>
    %cst_42 = arith.constant dense<0.000000e+00> : vector<16x384xf32>
    %183 = tpu.matmul %180, %144, %cst_42 {dimension_numbers = #tpu.dot_dimension_numbers<[1], [0], [0], [1], [0, 0, 1, 1], [], []>} : vector<16x128xbf16>, vector<128x384xbf16>, vector<16x384xf32> -> vector<16x384xf32>
    %184 = vector.extract_strided_slice %182 {offsets = [0, 0], sizes = [16, 128], strides = [1, 1]} : vector<16x384xf32> to vector<16x128xf32>
    %185 = vector.extract_strided_slice %183 {offsets = [0, 0], sizes = [16, 128], strides = [1, 1]} : vector<16x384xf32> to vector<16x128xf32>
    %186 = arith.addf %184, %185 : vector<16x128xf32>
    %187 = arith.negf %186 : vector<16x128xf32>
    %188 = math.exp %187 : vector<16x128xf32>
    %cst_43 = arith.constant 1.000000e+00 : f32
    %189 = vector.broadcast %cst_43 : f32 to vector<16x128xf32>
    %190 = arith.addf %189, %188 : vector<16x128xf32>
    %191 = arith.divf %189, %190 : vector<16x128xf32>
    %192 = vector.extract_strided_slice %182 {offsets = [0, 128], sizes = [16, 128], strides = [1, 1]} : vector<16x384xf32> to vector<16x128xf32>
    %193 = vector.extract_strided_slice %183 {offsets = [0, 128], sizes = [16, 128], strides = [1, 1]} : vector<16x384xf32> to vector<16x128xf32>
    %194 = arith.addf %192, %193 : vector<16x128xf32>
    %195 = arith.negf %194 : vector<16x128xf32>
    %196 = math.exp %195 : vector<16x128xf32>
    %cst_44 = arith.constant 1.000000e+00 : f32
    %197 = vector.broadcast %cst_44 : f32 to vector<16x128xf32>
    %198 = arith.addf %197, %196 : vector<16x128xf32>
    %199 = arith.divf %197, %198 : vector<16x128xf32>
    %200 = vector.extract_strided_slice %182 {offsets = [0, 256], sizes = [16, 128], strides = [1, 1]} : vector<16x384xf32> to vector<16x128xf32>
    %201 = vector.extract_strided_slice %183 {offsets = [0, 256], sizes = [16, 128], strides = [1, 1]} : vector<16x384xf32> to vector<16x128xf32>
    %202 = arith.addf %201, %147 : vector<16x128xf32>
    %203 = arith.mulf %191, %202 : vector<16x128xf32>
    %204 = arith.addf %200, %203 : vector<16x128xf32>
    %205 = math.tanh %204 : vector<16x128xf32>
    %cst_45 = arith.constant 1.000000e+00 : f32
    %206 = vector.broadcast %cst_45 : f32 to vector<16x128xf32>
    %207 = arith.subf %206, %199 : vector<16x128xf32>
    %208 = arith.mulf %207, %205 : vector<16x128xf32>
    %209 = arith.mulf %199, %179 : vector<16x128xf32>
    %210 = arith.addf %208, %209 : vector<16x128xf32>
    %211 = arith.truncf %210 : vector<16x128xf32> to vector<16x128xbf16>
    %c0_46 = arith.constant 0 : index
    %c0_47 = arith.constant 0 : index
    %212 = vector.load %arg10[%c0_46, %c0_47] : memref<128x128xbf16, #tpu.memory_space<vmem>>, vector<128x128xbf16>
    %cst_48 = arith.constant dense<0.000000e+00> : vector<16x128xf32>
    %213 = tpu.matmul %211, %212, %cst_48 {dimension_numbers = #tpu.dot_dimension_numbers<[1], [0], [0], [1], [0, 0, 1, 1], [], []>} : vector<16x128xbf16>, vector<128x128xbf16>, vector<16x128xf32> -> vector<16x128xf32>
    %c0_49 = arith.constant 0 : index
    %c0_50 = arith.constant 0 : index
    %214 = vector.load %arg11[%c0_49, %c0_50] : memref<1x128xf32, #tpu.memory_space<vmem>>, vector<1x128xf32>
    %215 = vector.broadcast %214 : vector<1x128xf32> to vector<16x128xf32>
    %216 = arith.addf %213, %215 : vector<16x128xf32>
    %c0_51 = arith.constant 0 : index
    %c0_52 = arith.constant 0 : index
    %217 = vector.load %arg12[%c0_51, %c0_52] : memref<16x128xf32, #tpu.memory_space<vmem>>, vector<16x128xf32>
    tpu.vector_store %arg12[%c0_51, %c0_52], %216 {strides = array<i32>} : memref<16x128xf32, #tpu.memory_space<vmem>>, vector<16x128xf32>,
    return
  }
  func.func @transform_0(%arg0: i32) -> (i32, i32, i32, i32) {
    %c0_i32 = arith.constant 0 : i32
    %c0_i32_0 = arith.constant 0 : i32
    %c0_i32_1 = arith.constant 0 : i32
    %c0_i32_2 = arith.constant 0 : i32
    return %c0_i32, %c0_i32_0, %arg0, %c0_i32_1 : i32, i32, i32, i32
  }
  func.func @transform_1(%arg0: i32) -> (i32, i32) {
    %c0_i32 = arith.constant 0 : i32
    %c0_i32_0 = arith.constant 0 : i32
    %c0_i32_1 = arith.constant 0 : i32
    return %c0_i32, %c0_i32_0 : i32, i32
  }
  func.func @transform_2(%arg0: i32) -> (i32, i32) {
    %c0_i32 = arith.constant 0 : i32
    %c0_i32_0 = arith.constant 0 : i32
    %c0_i32_1 = arith.constant 0 : i32
    return %c0_i32, %c0_i32_0 : i32, i32
  }
  func.func @transform_3(%arg0: i32) -> (i32, i32) {
    %c0_i32 = arith.constant 0 : i32
    %c0_i32_0 = arith.constant 0 : i32
    %c0_i32_1 = arith.constant 0 : i32
    return %c0_i32, %c0_i32_0 : i32, i32
  }
  func.func @transform_4(%arg0: i32) -> (i32, i32) {
    %c0_i32 = arith.constant 0 : i32
    %c0_i32_0 = arith.constant 0 : i32
    %c0_i32_1 = arith.constant 0 : i32
    return %c0_i32, %c0_i32_0 : i32, i32
  }
  func.func @transform_5(%arg0: i32) -> (i32, i32) {
    %c0_i32 = arith.constant 0 : i32
    %c0_i32_0 = arith.constant 0 : i32
    %c0_i32_1 = arith.constant 0 : i32
    return %c0_i32, %c0_i32_0 : i32, i32
  }
  func.func @transform_6(%arg0: i32) -> (i32, i32) {
    %c0_i32 = arith.constant 0 : i32
    %c0_i32_0 = arith.constant 0 : i32
    %c0_i32_1 = arith.constant 0 : i32
    return %c0_i32, %c0_i32_0 : i32, i32
  }
  func.func @transform_7(%arg0: i32) -> (i32, i32) {
    %c0_i32 = arith.constant 0 : i32
    %c0_i32_0 = arith.constant 0 : i32
    %c0_i32_1 = arith.constant 0 : i32
    return %c0_i32, %c0_i32_0 : i32, i32
  }
  func.func @transform_8(%arg0: i32) -> (i32, i32) {
    %c0_i32 = arith.constant 0 : i32
    %c0_i32_0 = arith.constant 0 : i32
    %c0_i32_1 = arith.constant 0 : i32
    return %c0_i32, %c0_i32_0 : i32, i32
  }
  func.func @transform_9(%arg0: i32) -> (i32, i32) {
    %c0_i32 = arith.constant 0 : i32
    %c0_i32_0 = arith.constant 0 : i32
    %c0_i32_1 = arith.constant 0 : i32
    return %c0_i32, %c0_i32_0 : i32, i32
  }
  func.func @transform_10(%arg0: i32) -> (i32, i32) {
    %c0_i32 = arith.constant 0 : i32
    %c0_i32_0 = arith.constant 0 : i32
    %c0_i32_1 = arith.constant 0 : i32
    return %c0_i32, %c0_i32_0 : i32, i32
  }
  func.func @transform_11(%arg0: i32) -> (i32, i32) {
    %c0_i32 = arith.constant 0 : i32
    %c0_i32_0 = arith.constant 0 : i32
    return %arg0, %c0_i32 : i32, i32
  }
}

</mosaic_0001>

<llo_original>
// kernel: tpu_custom_call.1
$region0: #{tpu_custom_call.1}
  #allocation0 [shape = 'u32[]', space=smem, size = 0x4, offset = 0x4, fixed_abs, tag = 'smem constant byte address 0x4 - core index']
  #allocation1 [shape = 'u32[72,128]{1,0:T(1,128)}', space=vmem, size = 0x9000, scoped, tag = 'internal scratch']
  %s0 = inlined_call_operand.vmem [shape: bf16[4,2,16,4], index: 0, kind: input, shape index: {}]
  %s1 = inlined_call_operand.vmem [shape: bf16[4,384], index: 1, kind: input, shape index: {}]
  %s2 = inlined_call_operand.hbm [shape: bf16[128,384], index: 2, kind: input, shape index: {}]
  %s3 = inlined_call_operand.vmem [shape: f32[1,384], index: 3, kind: input, shape index: {}]
  %s4 = inlined_call_operand.vmem [shape: f32[1,128], index: 4, kind: input, shape index: {}]
  %s5 = inlined_call_operand.hbm [shape: bf16[128,384], index: 5, kind: input, shape index: {}]
  %s6 = inlined_call_operand.hbm [shape: bf16[128,384], index: 6, kind: input, shape index: {}]
  %s7 = inlined_call_operand.vmem [shape: f32[1,384], index: 7, kind: input, shape index: {}]
  %s8 = inlined_call_operand.vmem [shape: f32[1,128], index: 8, kind: input, shape index: {}]
  %s9 = inlined_call_operand.vmem [shape: bf16[128,128], index: 9, kind: input, shape index: {}]
  %s10 = inlined_call_operand.vmem [shape: f32[1,128], index: 10, kind: input, shape index: {}]
  %s11 = inlined_call_operand.hbm [shape: f32[16,128], index: 11, kind: output, shape index: {}]
  %s12 = sld [smem:[#allocation0]]
  $region66: #{tpu_custom_call.1} parent=0
    _
  %s14 = ssub.s32 1, %s12
  %s15 = scalar_select 0, %s14, %s12
  $region1: #{tpu_custom_call.1} parent=0
    #allocation2 [shape = 'u8[98304]{0}', space=vmem, size = 0x18000, scoped, tag = 'input window, operand 2, single buffered']
    #allocation3 [shape = 's32[1]{0}', space=sflag, size = 0x4, scoped, tag = 'scoped memory for tpu_custom_call.1']
    #allocation4 [shape = 's32[1]{0}', space=sflag, size = 0x4, scoped, tag = 'scoped memory for tpu_custom_call.1']
    #allocation5 [shape = 'u8[98304]{0}', space=vmem, size = 0x18000, scoped, tag = 'input window, operand 5, single buffered']
    #allocation6 [shape = 's32[1]{0}', space=sflag, size = 0x4, scoped, tag = 'scoped memory for tpu_custom_call.1']
    #allocation7 [shape = 'u8[98304]{0}', space=vmem, size = 0x18000, scoped, tag = 'input window, operand 6, single buffered']
    #allocation8 [shape = 'u8[8192]{0}', space=vmem, size = 0x2000, scoped, tag = 'output window, operand 0, single buffered']
    %16 = vsyncpa [#allocation3], 0
    %17 = vsyncpa [#allocation6], 0
    %18 = vsyncpa [#allocation4], 0
    // Predicated region
    $region2: #{tpu_custom_call.1} parent=1 // pred_check
      _
    $region3: #{tpu_custom_call.1} parent=1 // pred_check_branch
      %20 = sbr.rel (0) target = $region5
    $region4: #{tpu_custom_call.1} parent=1 // pred_region
      _
    $region5: #{tpu_custom_call.1} parent=1 // pred_fallthru
      _
    // Predicated region
    $region6: #{tpu_custom_call.1} parent=1 // pred_check
      _
    $region7: #{tpu_custom_call.1} parent=1 // pred_check_branch
      %22 = sbr.rel (0) target = $region9
    $region8: #{tpu_custom_call.1} parent=1 // pred_region
      _
    $region9: #{tpu_custom_call.1} parent=1 // pred_fallthru
      _
    // Predicated region
    $region10: #{tpu_custom_call.1} parent=1 // pred_check
      _
    $region11: #{tpu_custom_call.1} parent=1 // pred_check_branch
      %24 = sbr.rel (0) target = $region13
    $region12: #{tpu_custom_call.1} parent=1 // pred_region
      %26 = vsyncadd [#allocation3], 0
      %s27 = sshll.u32 %s2, 4
      %s28 = int_to_ptr.hbm [resolvable:$true] %s27
      %s29 = sshll.u32 [#allocation2], 4
      %s30 = int_to_ptr.vmem [resolvable:$true] %s29
      %35 = dma.hbm_to_vmem [thread:$0]  %s28, 3072, %s30, [#allocation3], 192, 192, 12
    $region13: #{tpu_custom_call.1} parent=1 // pred_fallthru
      _
    // Predicated region
    $region14: #{tpu_custom_call.1} parent=1 // pred_check
      _
    $region15: #{tpu_custom_call.1} parent=1 // pred_check_branch
      %37 = sbr.rel (0) target = $region17
    $region16: #{tpu_custom_call.1} parent=1 // pred_region
      _
    $region17: #{tpu_custom_call.1} parent=1 // pred_fallthru
      _
    // Predicated region
    $region18: #{tpu_custom_call.1} parent=1 // pred_check
      _
    $region19: #{tpu_custom_call.1} parent=1 // pred_check_branch
      %39 = sbr.rel (0) target = $region21
    $region20: #{tpu_custom_call.1} parent=1 // pred_region
      _
    $region21: #{tpu_custom_call.1} parent=1 // pred_fallthru
      _
    // Predicated region
    $region22: #{tpu_custom_call.1} parent=1 // pred_check
      _
    $region23: #{tpu_custom_call.1} parent=1 // pred_check_branch
      %41 = sbr.rel (0) target = $region25
    $region24: #{tpu_custom_call.1} parent=1 // pred_region
      %43 = vsyncadd [#allocation6], 0
      %s44 = sshll.u32 %s5, 4
      %s45 = int_to_ptr.hbm [resolvable:$true] %s44
      %s46 = sshll.u32 [#allocation5], 4
      %s47 = int_to_ptr.vmem [resolvable:$true] %s46
      %52 = dma.hbm_to_vmem [thread:$0]  %s45, 3072, %s47, [#allocation6], 192, 192, 12
    $region25: #{tpu_custom_call.1} parent=1 // pred_fallthru
      _
    // Predicated region
    $region26: #{tpu_custom_call.1} parent=1 // pred_check
      _
    $region27: #{tpu_custom_call.1} parent=1 // pred_check_branch
      %54 = sbr.rel (0) target = $region29
    $region28: #{tpu_custom_call.1} parent=1 // pred_region
      %56 = vsyncadd [#allocation6], 0
      %s57 = sshll.u32 %s6, 4
      %s58 = int_to_ptr.hbm [resolvable:$true] %s57
      %s59 = sshll.u32 [#allocation7], 4
      %s60 = int_to_ptr.vmem [resolvable:$true] %s59
      %65 = dma.hbm_to_vmem [thread:$0]  %s58, 3072, %s60, [#allocation6], 192, 192, 12
    $region29: #{tpu_custom_call.1} parent=1 // pred_fallthru
      _
    // Predicated region
    $region30: #{tpu_custom_call.1} parent=1 // pred_check
      _
    $region31: #{tpu_custom_call.1} parent=1 // pred_check_branch
      %67 = sbr.rel (0) target = $region33
    $region32: #{tpu_custom_call.1} parent=1 // pred_region
      _
    $region33: #{tpu_custom_call.1} parent=1 // pred_fallthru
      _
    // Predicated region
    $region34: #{tpu_custom_call.1} parent=1 // pred_check
      _
    $region35: #{tpu_custom_call.1} parent=1 // pred_check_branch
      %69 = sbr.rel (0) target = $region37
    $region36: #{tpu_custom_call.1} parent=1 // pred_region
      _
    $region37: #{tpu_custom_call.1} parent=1 // pred_fallthru
      _
    // Predicated region
    $region38: #{tpu_custom_call.1} parent=1 // pred_check
      _
    $region39: #{tpu_custom_call.1} parent=1 // pred_check_branch
      %71 = sbr.rel (0) target = $region41
    $region40: #{tpu_custom_call.1} parent=1 // pred_region
      _
    $region41: #{tpu_custom_call.1} parent=1 // pred_fallthru
      _
    // Predicated region
    $region42: #{tpu_custom_call.1} parent=1 // pred_check
      _
    $region43: #{tpu_custom_call.1} parent=1 // pred_check_branch
      %73 = sbr.rel (0) target = $region45
    $region44: #{tpu_custom_call.1} parent=1 // pred_region
      _
    $region45: #{tpu_custom_call.1} parent=1 // pred_fallthru
      _
    // Predicated region
    $region46: #{tpu_custom_call.1} parent=1 // pred_check
      _
    $region47: #{tpu_custom_call.1} parent=1 // pred_check_branch
      %75 = sbr.rel (0) target = $region49
    $region48: #{tpu_custom_call.1} parent=1 // pred_region
      %77 = dma.done [#allocation3], 3072
    $region49: #{tpu_custom_call.1} parent=1 // pred_fallthru
      _
    // Predicated region
    $region50: #{tpu_custom_call.1} parent=1 // pred_check
      _
    $region51: #{tpu_custom_call.1} parent=1 // pred_check_branch
      %79 = sbr.rel (0) target = $region53
    $region52: #{tpu_custom_call.1} parent=1 // pred_region
      %81 = dma.done [#allocation6], 3072
    $region53: #{tpu_custom_call.1} parent=1 // pred_fallthru
      _
    // Predicated region
    $region54: #{tpu_custom_call.1} parent=1 // pred_check
      _
    $region55: #{tpu_custom_call.1} parent=1 // pred_check_branch
      %83 = sbr.rel (0) target = $region57
    $region56: #{tpu_custom_call.1} parent=1 // pred_region
      %85 = dma.done [#allocation6], 3072
    $region57: #{tpu_custom_call.1} parent=1 // pred_fallthru
      _
    %v87 = vld [vmem:[%s0] sm:$0xf]
    %v88 = vld [vmem:[%s0 + $0x4] sm:$0xf]
    %v89 = vld [vmem:[%s0 + $0x8] sm:$0xf]
    %v90 = vld [vmem:[%s0 + $0xc] sm:$0xf]
    %v91 = vld [vmem:[%s0 + $0x10] sm:$0xf]
    %v92 = vld [vmem:[%s0 + $0x14] sm:$0xf]
    %v93 = vld [vmem:[%s0 + $0x18] sm:$0xf]
    %v94 = vld [vmem:[%s0 + $0x1c] sm:$0xf]
    %v95 = vld [vmem:[%s0 + $0x20] sm:$0xf]
    %v96 = vld [vmem:[%s0 + $0x24] sm:$0xf]
    %v97 = vld [vmem:[%s0 + $0x28] sm:$0xf]
    %v98 = vld [vmem:[%s0 + $0x2c] sm:$0xf]
    %v99 = vld [vmem:[%s0 + $0x30] sm:$0xf]
    %v100 = vld [vmem:[%s0 + $0x34] sm:$0xf]
    %v101 = vld [vmem:[%s0 + $0x38] sm:$0xf]
    %v102 = vld [vmem:[%s0 + $0x3c] sm:$0xf]
    %v103 = vld [vmem:[%s1] sm:$0x3f]
    %v104 = vld [vmem:[%s3] sm:$0x7]
    %v106 = vperm.slane %v104, 0
    %v107 = vperm.slane %v104, 1
    %v108 = vperm.slane %v104, 2
    %v128 = vunpack.c.l.b16 %v87
    %v129 = vunpack.c.l.b16 %v88
    %v130 = vunpack.c.l.b16 %v89
    %v131 = vunpack.c.l.b16 %v90
    %v132 = vunpack.c.l.b16 %v91
    %v133 = vunpack.c.l.b16 %v92
    %v134 = vunpack.c.l.b16 %v93
    %v135 = vunpack.c.l.b16 %v94
    %v136 = vunpack.c.l.b16 %v95
    %v137 = vunpack.c.l.b16 %v96
    %v138 = vunpack.c.l.b16 %v97
    %v139 = vunpack.c.l.b16 %v98
    %v140 = vunpack.c.l.b16 %v99
    %v141 = vunpack.c.l.b16 %v100
    %v142 = vunpack.c.l.b16 %v101
    %v143 = vunpack.c.l.b16 %v102
    %v144 = vpack.c.b16 %v129, %v128
    %v145 = vpack.c.b16 %v131, %v130
    %v146 = vpack.c.b16 %v133, %v132
    %v147 = vpack.c.b16 %v135, %v134
    %v148 = vpack.c.b16 %v137, %v136
    %v149 = vpack.c.b16 %v139, %v138
    %v150 = vpack.c.b16 %v141, %v140
    %v151 = vpack.c.b16 %v143, %v142
    %153 = vst [vmem:[#allocation1] ss:$4 sm:$0xff] %v103
    %v154 = vld.sshfl [vmem:[#allocation1] sm:$0xff pattern:$0x73625140]
    %v155 = vld.sshfl [vmem:[#allocation1 + $0x8] sm:$0xff pattern:$0x73625140]
    %v156 = vld.sshfl [vmem:[#allocation1 + $0x10] sm:$0xff pattern:$0x73625140]
    %vm157 = vcmask 31744
    %v159 = vsel %vm157, %v144, 0
    %v162 = vsel %vm157, %v145, 0
    %v165 = vsel %vm157, %v146, 0
    %v168 = vsel %vm157, %v147, 0
    %v171 = vsel %vm157, %v148, 0
    %v174 = vsel %vm157, %v149, 0
    %v177 = vsel %vm157, %v150, 0
    %v180 = vsel %vm157, %v151, 0
    %vm182 = vcmask 1041408
    %v183 = vsel %vm182, %v154, 0
    %v185 = vsel %vm182, %v155, 0
    %v187 = vsel %vm182, %v156, 0
    %189 = vmatpush.bf16.msra.mxu0 0
    %190 = vmatpush.bf16.msra.mxu0 0
    %191 = vmatpush.bf16.msra.mxu0 0
    %192 = vmatpush.bf16.msra.mxu0 0
    %193 = vmatpush.bf16.msra.mxu0 0
    %194 = vmatpush.bf16.msra.mxu0 0
    %195 = vmatpush.bf16.msra.mxu0 0
    %196 = vmatpush.bf16.msra.mxu0 %v183
    %197 = vmatmul.bf16.gmra.mxu0 %v159
    %v198 = vpop.f32.mrf.mxu0
    %v199 = vadd.f32 %v106, %v198
    %v200 = vpop.f32.mrf.mxu0
    %v201 = vadd.f32 %v106, %v200
    %202 = vmatmul.bf16.gmra.mxu0 %v162
    %v203 = vpop.f32.mrf.mxu0
    %v204 = vadd.f32 %v106, %v203
    %v205 = vpop.f32.mrf.mxu0
    %v206 = vadd.f32 %v106, %v205
    %207 = vmatmul.bf16.gmra.mxu0 %v165
    %v208 = vpop.f32.mrf.mxu0
    %v209 = vadd.f32 %v106, %v208
    %v210 = vpop.f32.mrf.mxu0
    %v211 = vadd.f32 %v106, %v210
    %212 = vmatmul.bf16.gmra.mxu0 %v168
    %v213 = vpop.f32.mrf.mxu0
    %v214 = vadd.f32 %v106, %v213
    %v215 = vpop.f32.mrf.mxu0
    %v216 = vadd.f32 %v106, %v215
    %217 = vmatmul.bf16.gmra.mxu0 %v171
    %v218 = vpop.f32.mrf.mxu0
    %v219 = vadd.f32 %v106, %v218
    %v220 = vpop.f32.mrf.mxu0
    %v221 = vadd.f32 %v106, %v220
    %222 = vmatmul.bf16.gmra.mxu0 %v174
    %v223 = vpop.f32.mrf.mxu0
    %v224 = vadd.f32 %v106, %v223
    %v225 = vpop.f32.mrf.mxu0
    %v226 = vadd.f32 %v106, %v225
    %227 = vmatmul.bf16.gmra.mxu0 %v177
    %v228 = vpop.f32.mrf.mxu0
    %v229 = vadd.f32 %v106, %v228
    %v230 = vpop.f32.mrf.mxu0
    %v231 = vadd.f32 %v106, %v230
    %232 = vmatmul.bf16.gmra.mxu0 %v180
    %v233 = vpop.f32.mrf.mxu0
    %v234 = vadd.f32 %v106, %v233
    %v235 = vpop.f32.mrf.mxu0
    %v236 = vadd.f32 %v106, %v235
    %237 = vdwg.mxu0
    %238 = vmatpush.bf16.msra.mxu0 0
    %239 = vmatpush.bf16.msra.mxu0 0
    %240 = vmatpush.bf16.msra.mxu0 0
    %241 = vmatpush.bf16.msra.mxu0 0
    %242 = vmatpush.bf16.msra.mxu0 0
    %243 = vmatpush.bf16.msra.mxu0 0
    %244 = vmatpush.bf16.msra.mxu0 0
    %245 = vmatpush.bf16.msra.mxu0 %v185
    %246 = vmatmul.bf16.gmra.mxu0 %v159
    %v247 = vpop.f32.mrf.mxu0
    %v248 = vadd.f32 %v107, %v247
    %v249 = vpop.f32.mrf.mxu0
    %v250 = vadd.f32 %v107, %v249
    %251 = vmatmul.bf16.gmra.mxu0 %v162
    %v252 = vpop.f32.mrf.mxu0
    %v253 = vadd.f32 %v107, %v252
    %v254 = vpop.f32.mrf.mxu0
    %v255 = vadd.f32 %v107, %v254
    %256 = vmatmul.bf16.gmra.mxu0 %v165
    %v257 = vpop.f32.mrf.mxu0
    %v258 = vadd.f32 %v107, %v257
    %v259 = vpop.f32.mrf.mxu0
    %v260 = vadd.f32 %v107, %v259
    %261 = vmatmul.bf16.gmra.mxu0 %v168
    %v262 = vpop.f32.mrf.mxu0
    %v263 = vadd.f32 %v107, %v262
    %v264 = vpop.f32.mrf.mxu0
    %v265 = vadd.f32 %v107, %v264
    %266 = vmatmul.bf16.gmra.mxu0 %v171
    %v267 = vpop.f32.mrf.mxu0
    %v268 = vadd.f32 %v107, %v267
    %v269 = vpop.f32.mrf.mxu0
    %v270 = vadd.f32 %v107, %v269
    %271 = vmatmul.bf16.gmra.mxu0 %v174
    %v272 = vpop.f32.mrf.mxu0
    %v273 = vadd.f32 %v107, %v272
    %v274 = vpop.f32.mrf.mxu0
    %v275 = vadd.f32 %v107, %v274
    %276 = vmatmul.bf16.gmra.mxu0 %v177
    %v277 = vpop.f32.mrf.mxu0
    %v278 = vadd.f32 %v107, %v277
    %v279 = vpop.f32.mrf.mxu0
    %v280 = vadd.f32 %v107, %v279
    %281 = vmatmul.bf16.gmra.mxu0 %v180
    %v282 = vpop.f32.mrf.mxu0
    %v283 = vadd.f32 %v107, %v282
    %v284 = vpop.f32.mrf.mxu0
    %v285 = vadd.f32 %v107, %v284
    %286 = vdwg.mxu0
    %287 = vmatpush.bf16.msra.mxu0 0
    %288 = vmatpush.bf16.msra.mxu0 0
    %289 = vmatpush.bf16.msra.mxu0 0
    %290 = vmatpush.bf16.msra.mxu0 0
    %291 = vmatpush.bf16.msra.mxu0 0
    %292 = vmatpush.bf16.msra.mxu0 0
    %293 = vmatpush.bf16.msra.mxu0 0
    %294 = vmatpush.bf16.msra.mxu0 %v187
    %295 = vmatmul.bf16.gmra.mxu0 %v159
    %v296 = vpop.f32.mrf.mxu0
    %v297 = vadd.f32 %v108, %v296
    %v298 = vpop.f32.mrf.mxu0
    %v299 = vadd.f32 %v108, %v298
    %300 = vmatmul.bf16.gmra.mxu0 %v162
    %v301 = vpop.f32.mrf.mxu0
    %v302 = vadd.f32 %v108, %v301
    %v303 = vpop.f32.mrf.mxu0
    %v304 = vadd.f32 %v108, %v303
    %305 = vmatmul.bf16.gmra.mxu0 %v165
    %v306 = vpop.f32.mrf.mxu0
    %v307 = vadd.f32 %v108, %v306
    %v308 = vpop.f32.mrf.mxu0
    %v309 = vadd.f32 %v108, %v308
    %310 = vmatmul.bf16.gmra.mxu0 %v168
    %v311 = vpop.f32.mrf.mxu0
    %v312 = vadd.f32 %v108, %v311
    %v313 = vpop.f32.mrf.mxu0
    %v314 = vadd.f32 %v108, %v313
    %315 = vmatmul.bf16.gmra.mxu0 %v171
    %v316 = vpop.f32.mrf.mxu0
    %v317 = vadd.f32 %v108, %v316
    %v318 = vpop.f32.mrf.mxu0
    %v319 = vadd.f32 %v108, %v318
    %320 = vmatmul.bf16.gmra.mxu0 %v174
    %v321 = vpop.f32.mrf.mxu0
    %v322 = vadd.f32 %v108, %v321
    %v323 = vpop.f32.mrf.mxu0
    %v324 = vadd.f32 %v108, %v323
    %325 = vmatmul.bf16.gmra.mxu0 %v177
    %v326 = vpop.f32.mrf.mxu0
    %v327 = vadd.f32 %v108, %v326
    %v328 = vpop.f32.mrf.mxu0
    %v329 = vadd.f32 %v108, %v328
    %330 = vmatmul.bf16.gmra.mxu0 %v180
    %v331 = vpop.f32.mrf.mxu0
    %v332 = vadd.f32 %v108, %v331
    %v333 = vpop.f32.mrf.mxu0
    %v334 = vadd.f32 %v108, %v333
    %335 = vdwg.mxu0
    %v336 = vld [vmem:[#allocation2] sm:$0xff]
    %v337 = vld [vmem:[#allocation2 + $0x8] sm:$0xf]
    %v338 = vld [vmem:[#allocation2 + $0xc] sm:$0xff]
    %v339 = vld [vmem:[#allocation2 + $0x14] sm:$0xf]
    %v340 = vld [vmem:[#allocation2 + $0x18] sm:$0xff]
    %v341 = vld [vmem:[#allocation2 + $0x20] sm:$0xf]
    %v342 = vld [vmem:[#allocation2 + $0x24] sm:$0xff]
    %v343 = vld [vmem:[#allocation2 + $0x2c] sm:$0xf]
    %v344 = vld [vmem:[#allocation2 + $0x30] sm:$0xff]
    %v345 = vld [vmem:[#allocation2 + $0x38] sm:$0xf]
    %v346 = vld [vmem:[#allocation2 + $0x3c] sm:$0xff]
    %v347 = vld [vmem:[#allocation2 + $0x44] sm:$0xf]
    %v348 = vld [vmem:[#allocation2 + $0x48] sm:$0xff]
    %v349 = vld [vmem:[#allocation2 + $0x50] sm:$0xf]
    %v350 = vld [vmem:[#allocation2 + $0x54] sm:$0xff]
    %v351 = vld [vmem:[#allocation2 + $0x5c] sm:$0xf]
    %v352 = vld [vmem:[#allocation2 + $0x60] sm:$0xff]
    %v353 = vld [vmem:[#allocation2 + $0x68] sm:$0xf]
    %v354 = vld [vmem:[#allocation2 + $0x6c] sm:$0xff]
    %v355 = vld [vmem:[#allocation2 + $0x74] sm:$0xf]
    %v356 = vld [vmem:[#allocation2 + $0x78] sm:$0xff]
    %v357 = vld [vmem:[#allocation2 + $0x80] sm:$0xf]
    %v358 = vld [vmem:[#allocation2 + $0x84] sm:$0xff]
    %v359 = vld [vmem:[#allocation2 + $0x8c] sm:$0xf]
    %v360 = vld [vmem:[#allocation2 + $0x90] sm:$0xff]
    %v361 = vld [vmem:[#allocation2 + $0x98] sm:$0xf]
    %v362 = vld [vmem:[#allocation2 + $0x9c] sm:$0xff]
    %v363 = vld [vmem:[#allocation2 + $0xa4] sm:$0xf]
    %v364 = vld [vmem:[#allocation2 + $0xa8] sm:$0xff]
    %v365 = vld [vmem:[#allocation2 + $0xb0] sm:$0xf]
    %v366 = vld [vmem:[#allocation2 + $0xb4] sm:$0xff]
    %v367 = vld [vmem:[#allocation2 + $0xbc] sm:$0xf]
    %v368 = vld [vmem:[%s4] sm:$0x1]
    %v370 = vperm.slane %v368, 0
    %v404 = vunpack.c.l.b16 %v336
    %v405 = vunpack.c.h.b16 %v336
    %v406 = vunpack.c.l.b16 %v337
    %v407 = vunpack.c.l.b16 %v338
    %v408 = vunpack.c.h.b16 %v338
    %v409 = vunpack.c.l.b16 %v339
    %v410 = vunpack.c.l.b16 %v340
    %v411 = vunpack.c.h.b16 %v340
    %v412 = vunpack.c.l.b16 %v341
    %v413 = vunpack.c.l.b16 %v342
    %v414 = vunpack.c.h.b16 %v342
    %v415 = vunpack.c.l.b16 %v343
    %v416 = vunpack.c.l.b16 %v344
    %v417 = vunpack.c.h.b16 %v344
    %v418 = vunpack.c.l.b16 %v345
    %v419 = vunpack.c.l.b16 %v346
    %v420 = vunpack.c.h.b16 %v346
    %v421 = vunpack.c.l.b16 %v347
    %v422 = vunpack.c.l.b16 %v348
    %v423 = vunpack.c.h.b16 %v348
    %v424 = vunpack.c.l.b16 %v349
    %v425 = vunpack.c.l.b16 %v350
    %v426 = vunpack.c.h.b16 %v350
    %v427 = vunpack.c.l.b16 %v351
    %v428 = vunpack.c.l.b16 %v352
    %v429 = vunpack.c.h.b16 %v352
    %v430 = vunpack.c.l.b16 %v353
    %v431 = vunpack.c.l.b16 %v354
    %v432 = vunpack.c.h.b16 %v354
    %v433 = vunpack.c.l.b16 %v355
    %v434 = vunpack.c.l.b16 %v356
    %v435 = vunpack.c.h.b16 %v356
    %v436 = vunpack.c.l.b16 %v357
    %v437 = vunpack.c.l.b16 %v358
    %v438 = vunpack.c.h.b16 %v358
    %v439 = vunpack.c.l.b16 %v359
    %v440 = vunpack.c.l.b16 %v360
    %v441 = vunpack.c.h.b16 %v360
    %v442 = vunpack.c.l.b16 %v361
    %v443 = vunpack.c.l.b16 %v362
    %v444 = vunpack.c.h.b16 %v362
    %v445 = vunpack.c.l.b16 %v363
    %v446 = vunpack.c.l.b16 %v364
    %v447 = vunpack.c.h.b16 %v364
    %v448 = vunpack.c.l.b16 %v365
    %v449 = vunpack.c.l.b16 %v366
    %v450 = vunpack.c.h.b16 %v366
    %v451 = vunpack.c.l.b16 %v367
    %v452 = vpack.c.b16 %v407, %v404
    %v453 = vpack.c.b16 %v408, %v405
    %v454 = vpack.c.b16 %v409, %v406
    %v455 = vpack.c.b16 %v413, %v410
    %v456 = vpack.c.b16 %v414, %v411
    %v457 = vpack.c.b16 %v415, %v412
    %v458 = vpack.c.b16 %v419, %v416
    %v459 = vpack.c.b16 %v420, %v417
    %v460 = vpack.c.b16 %v421, %v418
    %v461 = vpack.c.b16 %v425, %v422
    %v462 = vpack.c.b16 %v426, %v423
    %v463 = vpack.c.b16 %v427, %v424
    %v464 = vpack.c.b16 %v431, %v428
    %v465 = vpack.c.b16 %v432, %v429
    %v466 = vpack.c.b16 %v433, %v430
    %v467 = vpack.c.b16 %v437, %v434
    %v468 = vpack.c.b16 %v438, %v435
    %v469 = vpack.c.b16 %v439, %v436
    %v470 = vpack.c.b16 %v443, %v440
    %v471 = vpack.c.b16 %v444, %v441
    %v472 = vpack.c.b16 %v445, %v442
    %v473 = vpack.c.b16 %v449, %v446
    %v474 = vpack.c.b16 %v450, %v447
    %v475 = vpack.c.b16 %v451, %v448
    %500 = vmatpush.bf16.msra.mxu0 %v473
    %501 = vmatpush.bf16.msra.mxu0 %v470
    %502 = vmatpush.bf16.msra.mxu0 %v467
    %503 = vmatpush.bf16.msra.mxu0 %v464
    %504 = vmatpush.bf16.msra.mxu0 %v461
    %505 = vmatpush.bf16.msra.mxu0 %v458
    %506 = vmatpush.bf16.msra.mxu0 %v455
    %507 = vmatpush.bf16.msra.mxu0 %v452
    %508 = vmatmul.bf16.gmra.mxu0 0
    %v509 = vpop.f32.mrf.mxu0
    %v510 = vadd.f32 0.0, %v509
    %v511 = vpop.f32.mrf.mxu0
    %v512 = vadd.f32 0.0, %v511
    %513 = vmatmul.bf16.gmra.mxu0 0
    %v514 = vpop.f32.mrf.mxu0
    %v515 = vadd.f32 0.0, %v514
    %v516 = vpop.f32.mrf.mxu0
    %v517 = vadd.f32 0.0, %v516
    %518 = vdwg.mxu0
    %519 = vmatpush.bf16.msra.mxu0 %v474
    %520 = vmatpush.bf16.msra.mxu0 %v471
    %521 = vmatpush.bf16.msra.mxu0 %v468
    %522 = vmatpush.bf16.msra.mxu0 %v465
    %523 = vmatpush.bf16.msra.mxu0 %v462
    %524 = vmatpush.bf16.msra.mxu0 %v459
    %525 = vmatpush.bf16.msra.mxu0 %v456
    %526 = vmatpush.bf16.msra.mxu0 %v453
    %527 = vmatmul.bf16.gmra.mxu0 0
    %v528 = vpop.f32.mrf.mxu0
    %v529 = vadd.f32 0.0, %v528
    %v530 = vpop.f32.mrf.mxu0
    %v531 = vadd.f32 0.0, %v530
    %532 = vmatmul.bf16.gmra.mxu0 0
    %v533 = vpop.f32.mrf.mxu0
    %v534 = vadd.f32 0.0, %v533
    %v535 = vpop.f32.mrf.mxu0
    %v536 = vadd.f32 0.0, %v535
    %537 = vdwg.mxu0
    %538 = vmatpush.bf16.msra.mxu0 %v475
    %539 = vmatpush.bf16.msra.mxu0 %v472
    %540 = vmatpush.bf16.msra.mxu0 %v469
    %541 = vmatpush.bf16.msra.mxu0 %v466
    %542 = vmatpush.bf16.msra.mxu0 %v463
    %543 = vmatpush.bf16.msra.mxu0 %v460
    %544 = vmatpush.bf16.msra.mxu0 %v457
    %545 = vmatpush.bf16.msra.mxu0 %v454
    %546 = vmatmul.bf16.gmra.mxu0 0
    %v547 = vpop.f32.mrf.mxu0
    %v548 = vadd.f32 0.0, %v547
    %v549 = vpop.f32.mrf.mxu0
    %v550 = vadd.f32 0.0, %v549
    %551 = vmatmul.bf16.gmra.mxu0 0
    %v552 = vpop.f32.mrf.mxu0
    %v553 = vadd.f32 0.0, %v552
    %v554 = vpop.f32.mrf.mxu0
    %v555 = vadd.f32 0.0, %v554
    %556 = vdwg.mxu0
    %v557 = vadd.f32 %v199, %v510
    %v558 = vadd.f32 %v201, %v512
    %v559 = vadd.f32 %v204, %v515
    %v560 = vadd.f32 %v206, %v517
    %v561 = vxor.u32 %v557, 2147483648
    %v562 = vxor.u32 %v558, 2147483648
    %v563 = vxor.u32 %v559, 2147483648
    %v564 = vxor.u32 %v560, 2147483648
    %v565 = vmul.f32 %v561, 1.442695
    %v566 = vpow.pop %v565
    %v567 = vmul.f32 %v562, 1.442695
    %v568 = vpow.pop %v567
    %v569 = vmul.f32 %v563, 1.442695
    %v570 = vpow.pop %v569
    %v571 = vmul.f32 %v564, 1.442695
    %v572 = vpow.pop %v571
    %v573 = vadd.f32 %v566, 1.0
    %v574 = vadd.f32 %v568, 1.0
    %v575 = vadd.f32 %v570, 1.0
    %v576 = vadd.f32 %v572, 1.0
    %v577 = vrcp.pop %v573
    %v578 = vmul.f32 %v573, %v577
    %v579 = vsub.f32 1.0, %v578
    %v580 = vmul.f32 %v577, %v579
    %v581 = vadd.f32 %v577, %v580
    %vm582 = vweird.f32 %v573
    %vm583 = vweird.f32 %v577
    %vm584 = vmor %vm582, %vm583
    %v585 = vsel %vm584, %v577, %v581
    %v586 = vand.u32 2147483647, %v573
    %vm587 = vcmp.eq.f32.partialorder %v586, 8.507059e+37
    %v588 = vand.u32 %v573, 2147483648
    %v589 = vor.u32 1.1754944e-38, %v588
    %v590 = vsel %vm587, %v589, %v585
    %v591 = vmul.f32 1.0, %v590
    %v592 = vrcp.pop %v574
    %v593 = vmul.f32 %v574, %v592
    %v594 = vsub.f32 1.0, %v593
    %v595 = vmul.f32 %v592, %v594
    %v596 = vadd.f32 %v592, %v595
    %vm597 = vweird.f32 %v574
    %vm598 = vweird.f32 %v592
    %vm599 = vmor %vm597, %vm598
    %v600 = vsel %vm599, %v592, %v596
    %v601 = vand.u32 2147483647, %v574
    %vm602 = vcmp.eq.f32.partialorder %v601, 8.507059e+37
    %v603 = vand.u32 %v574, 2147483648
    %v604 = vor.u32 1.1754944e-38, %v603
    %v605 = vsel %vm602, %v604, %v600
    %v606 = vmul.f32 1.0, %v605
    %v607 = vrcp.pop %v575
    %v608 = vmul.f32 %v575, %v607
    %v609 = vsub.f32 1.0, %v608
    %v610 = vmul.f32 %v607, %v609
    %v611 = vadd.f32 %v607, %v610
    %vm612 = vweird.f32 %v575
    %vm613 = vweird.f32 %v607
    %vm614 = vmor %vm612, %vm613
    %v615 = vsel %vm614, %v607, %v611
    %v616 = vand.u32 2147483647, %v575
    %vm617 = vcmp.eq.f32.partialorder %v616, 8.507059e+37
    %v618 = vand.u32 %v575, 2147483648
    %v619 = vor.u32 1.1754944e-38, %v618
    %v620 = vsel %vm617, %v619, %v615
    %v621 = vmul.f32 1.0, %v620
    %v622 = vrcp.pop %v576
    %v623 = vmul.f32 %v576, %v622
    %v624 = vsub.f32 1.0, %v623
    %v625 = vmul.f32 %v622, %v624
    %v626 = vadd.f32 %v622, %v625
    %vm627 = vweird.f32 %v576
    %vm628 = vweird.f32 %v622
    %vm629 = vmor %vm627, %vm628
    %v630 = vsel %vm629, %v622, %v626
    %v631 = vand.u32 2147483647, %v576
    %vm632 = vcmp.eq.f32.partialorder %v631, 8.507059e+37
    %v633 = vand.u32 %v576, 2147483648
    %v634 = vor.u32 1.1754944e-38, %v633
    %v635 = vsel %vm632, %v634, %v630
    %v636 = vmul.f32 1.0, %v635
    %v637 = vadd.f32 %v248, %v529
    %v638 = vadd.f32 %v250, %v531
    %v639 = vadd.f32 %v253, %v534
    %v640 = vadd.f32 %v255, %v536
    %v641 = vxor.u32 %v637, 2147483648
    %v642 = vxor.u32 %v638, 2147483648
    %v643 = vxor.u32 %v639, 2147483648
    %v644 = vxor.u32 %v640, 2147483648
    %v645 = vmul.f32 %v641, 1.442695
    %v646 = vpow.pop %v645
    %v647 = vmul.f32 %v642, 1.442695
    %v648 = vpow.pop %v647
    %v649 = vmul.f32 %v643, 1.442695
    %v650 = vpow.pop %v649
    %v651 = vmul.f32 %v644, 1.442695
    %v652 = vpow.pop %v651
    %v653 = vadd.f32 %v646, 1.0
    %v654 = vadd.f32 %v648, 1.0
    %v655 = vadd.f32 %v650, 1.0
    %v656 = vadd.f32 %v652, 1.0
    %v657 = vrcp.pop %v653
    %v658 = vmul.f32 %v653, %v657
    %v659 = vsub.f32 1.0, %v658
    %v660 = vmul.f32 %v657, %v659
    %v661 = vadd.f32 %v657, %v660
    %vm662 = vweird.f32 %v653
    %vm663 = vweird.f32 %v657
    %vm664 = vmor %vm662, %vm663
    %v665 = vsel %vm664, %v657, %v661
    %v666 = vand.u32 2147483647, %v653
    %vm667 = vcmp.eq.f32.partialorder %v666, 8.507059e+37
    %v668 = vand.u32 %v653, 2147483648
    %v669 = vor.u32 1.1754944e-38, %v668
    %v670 = vsel %vm667, %v669, %v665
    %v671 = vmul.f32 1.0, %v670
    %v672 = vrcp.pop %v654
    %v673 = vmul.f32 %v654, %v672
    %v674 = vsub.f32 1.0, %v673
    %v675 = vmul.f32 %v672, %v674
    %v676 = vadd.f32 %v672, %v675
    %vm677 = vweird.f32 %v654
    %vm678 = vweird.f32 %v672
    %vm679 = vmor %vm677, %vm678
    %v680 = vsel %vm679, %v672, %v676
    %v681 = vand.u32 2147483647, %v654
    %vm682 = vcmp.eq.f32.partialorder %v681, 8.507059e+37
    %v683 = vand.u32 %v654, 2147483648
    %v684 = vor.u32 1.1754944e-38, %v683
    %v685 = vsel %vm682, %v684, %v680
    %v686 = vmul.f32 1.0, %v685
    %v687 = vrcp.pop %v655
    %v688 = vmul.f32 %v655, %v687
    %v689 = vsub.f32 1.0, %v688
    %v690 = vmul.f32 %v687, %v689
    %v691 = vadd.f32 %v687, %v690
    %vm692 = vweird.f32 %v655
    %vm693 = vweird.f32 %v687
    %vm694 = vmor %vm692, %vm693
    %v695 = vsel %vm694, %v687, %v691
    %v696 = vand.u32 2147483647, %v655
    %vm697 = vcmp.eq.f32.partialorder %v696, 8.507059e+37
    %v698 = vand.u32 %v655, 2147483648
    %v699 = vor.u32 1.1754944e-38, %v698
    %v700 = vsel %vm697, %v699, %v695
    %v701 = vmul.f32 1.0, %v700
    %v702 = vrcp.pop %v656
    %v703 = vmul.f32 %v656, %v702
    %v704 = vsub.f32 1.0, %v703
    %v705 = vmul.f32 %v702, %v704
    %v706 = vadd.f32 %v702, %v705
    %vm707 = vweird.f32 %v656
    %vm708 = vweird.f32 %v702
    %vm709 = vmor %vm707, %vm708
    %v710 = vsel %vm709, %v702, %v706
    %v711 = vand.u32 2147483647, %v656
    %vm712 = vcmp.eq.f32.partialorder %v711, 8.507059e+37
    %v713 = vand.u32 %v656, 2147483648
    %v714 = vor.u32 1.1754944e-38, %v713
    %v715 = vsel %vm712, %v714, %v710
    %v716 = vmul.f32 1.0, %v715
    %v717 = vadd.f32 %v548, %v370
    %v718 = vadd.f32 %v550, %v370
    %v719 = vadd.f32 %v553, %v370
    %v720 = vadd.f32 %v555, %v370
    %v721 = vmul.f32 %v591, %v717
    %v722 = vmul.f32 %v606, %v718
    %v723 = vmul.f32 %v621, %v719
    %v724 = vmul.f32 %v636, %v720
    %v725 = vadd.f32 %v297, %v721
    %v726 = vadd.f32 %v299, %v722
    %v727 = vadd.f32 %v302, %v723
    %v728 = vadd.f32 %v304, %v724
    %v729 = vtanh.pop %v725
    %v730 = vtanh.pop %v726
    %v731 = vtanh.pop %v727
    %v732 = vtanh.pop %v728
    %v733 = vsub.f32 1.0, %v671
    %v734 = vsub.f32 1.0, %v686
    %v735 = vsub.f32 1.0, %v701
    %v736 = vsub.f32 1.0, %v716
    %v737 = vmul.f32 %v733, %v729
    %v738 = vmul.f32 %v734, %v730
    %v739 = vmul.f32 %v735, %v731
    %v740 = vmul.f32 %v736, %v732
    %v741 = vmul.f32 %v671, 0.0
    %v742 = vmul.f32 %v686, 0.0
    %v743 = vmul.f32 %v701, 0.0
    %v744 = vmul.f32 %v716, 0.0
    %v745 = vadd.f32 %v737, %v741
    %v746 = vadd.f32 %v738, %v742
    %v747 = vadd.f32 %v739, %v743
    %v748 = vadd.f32 %v740, %v744
    %v749 = vpack.c.bf16 %v746, %v745
    %v750 = vpack.c.bf16 %v748, %v747
    %751 = vmatpush.bf16.msra.mxu0 %v473
    %752 = vmatpush.bf16.msra.mxu0 %v470
    %753 = vmatpush.bf16.msra.mxu0 %v467
    %754 = vmatpush.bf16.msra.mxu0 %v464
    %755 = vmatpush.bf16.msra.mxu0 %v461
    %756 = vmatpush.bf16.msra.mxu0 %v458
    %757 = vmatpush.bf16.msra.mxu0 %v455
    %758 = vmatpush.bf16.msra.mxu0 %v452
    %759 = vmatmul.bf16.gmra.mxu0 %v749
    %v760 = vpop.f32.mrf.mxu0
    %v761 = vadd.f32 0.0, %v760
    %v762 = vpop.f32.mrf.mxu0
    %v763 = vadd.f32 0.0, %v762
    %764 = vmatmul.bf16.gmra.mxu0 %v750
    %v765 = vpop.f32.mrf.mxu0
    %v766 = vadd.f32 0.0, %v765
    %v767 = vpop.f32.mrf.mxu0
    %v768 = vadd.f32 0.0, %v767
    %769 = vdwg.mxu0
    %770 = vmatpush.bf16.msra.mxu0 %v474
    %771 = vmatpush.bf16.msra.mxu0 %v471
    %772 = vmatpush.bf16.msra.mxu0 %v468
    %773 = vmatpush.bf16.msra.mxu0 %v465
    %774 = vmatpush.bf16.msra.mxu0 %v462
    %775 = vmatpush.bf16.msra.mxu0 %v459
    %776 = vmatpush.bf16.msra.mxu0 %v456
    %777 = vmatpush.bf16.msra.mxu0 %v453
    %778 = vmatmul.bf16.gmra.mxu0 %v749
    %v779 = vpop.f32.mrf.mxu0
    %v780 = vadd.f32 0.0, %v779
    %v781 = vpop.f32.mrf.mxu0
    %v782 = vadd.f32 0.0, %v781
    %783 = vmatmul.bf16.gmra.mxu0 %v750
    %v784 = vpop.f32.mrf.mxu0
    %v785 = vadd.f32 0.0, %v784
    %v786 = vpop.f32.mrf.mxu0
    %v787 = vadd.f32 0.0, %v786
    %788 = vdwg.mxu0
    %789 = vmatpush.bf16.msra.mxu0 %v475
    %790 = vmatpush.bf16.msra.mxu0 %v472
    %791 = vmatpush.bf16.msra.mxu0 %v469
    %792 = vmatpush.bf16.msra.mxu0 %v466
    %793 = vmatpush.bf16.msra.mxu0 %v463
    %794 = vmatpush.bf16.msra.mxu0 %v460
    %795 = vmatpush.bf16.msra.mxu0 %v457
    %796 = vmatpush.bf16.msra.mxu0 %v454
    %797 = vmatmul.bf16.gmra.mxu0 %v749
    %v798 = vpop.f32.mrf.mxu0
    %v799 = vadd.f32 0.0, %v798
    %v800 = vpop.f32.mrf.mxu0
    %v801 = vadd.f32 0.0, %v800
    %802 = vmatmul.bf16.gmra.mxu0 %v750
    %v803 = vpop.f32.mrf.mxu0
    %v804 = vadd.f32 0.0, %v803
    %v805 = vpop.f32.mrf.mxu0
    %v806 = vadd.f32 0.0, %v805
    %807 = vdwg.mxu0
    %v808 = vadd.f32 %v209, %v761
    %v809 = vadd.f32 %v211, %v763
    %v810 = vadd.f32 %v214, %v766
    %v811 = vadd.f32 %v216, %v768
    %v812 = vxor.u32 %v808, 2147483648
    %v813 = vxor.u32 %v809, 2147483648
    %v814 = vxor.u32 %v810, 2147483648
    %v815 = vxor.u32 %v811, 2147483648
    %v816 = vmul.f32 %v812, 1.442695
    %v817 = vpow.pop %v816
    %v818 = vmul.f32 %v813, 1.442695
    %v819 = vpow.pop %v818
    %v820 = vmul.f32 %v814, 1.442695
    %v821 = vpow.pop %v820
    %v822 = vmul.f32 %v815, 1.442695
    %v823 = vpow.pop %v822
    %v824 = vadd.f32 %v817, 1.0
    %v825 = vadd.f32 %v819, 1.0
    %v826 = vadd.f32 %v821, 1.0
    %v827 = vadd.f32 %v823, 1.0
    %v828 = vrcp.pop %v824
    %v829 = vmul.f32 %v824, %v828
    %v830 = vsub.f32 1.0, %v829
    %v831 = vmul.f32 %v828, %v830
    %v832 = vadd.f32 %v828, %v831
    %vm833 = vweird.f32 %v824
    %vm834 = vweird.f32 %v828
    %vm835 = vmor %vm833, %vm834
    %v836 = vsel %vm835, %v828, %v832
    %v837 = vand.u32 2147483647, %v824
    %vm838 = vcmp.eq.f32.partialorder %v837, 8.507059e+37
    %v839 = vand.u32 %v824, 2147483648
    %v840 = vor.u32 1.1754944e-38, %v839
    %v841 = vsel %vm838, %v840, %v836
    %v842 = vmul.f32 1.0, %v841
    %v843 = vrcp.pop %v825
    %v844 = vmul.f32 %v825, %v843
    %v845 = vsub.f32 1.0, %v844
    %v846 = vmul.f32 %v843, %v845
    %v847 = vadd.f32 %v843, %v846
    %vm848 = vweird.f32 %v825
    %vm849 = vweird.f32 %v843
    %vm850 = vmor %vm848, %vm849
    %v851 = vsel %vm850, %v843, %v847
    %v852 = vand.u32 2147483647, %v825
    %vm853 = vcmp.eq.f32.partialorder %v852, 8.507059e+37
    %v854 = vand.u32 %v825, 2147483648
    %v855 = vor.u32 1.1754944e-38, %v854
    %v856 = vsel %vm853, %v855, %v851
    %v857 = vmul.f32 1.0, %v856
    %v858 = vrcp.pop %v826
    %v859 = vmul.f32 %v826, %v858
    %v860 = vsub.f32 1.0, %v859
    %v861 = vmul.f32 %v858, %v860
    %v862 = vadd.f32 %v858, %v861
    %vm863 = vweird.f32 %v826
    %vm864 = vweird.f32 %v858
    %vm865 = vmor %vm863, %vm864
    %v866 = vsel %vm865, %v858, %v862
    %v867 = vand.u32 2147483647, %v826
    %vm868 = vcmp.eq.f32.partialorder %v867, 8.507059e+37
    %v869 = vand.u32 %v826, 2147483648
    %v870 = vor.u32 1.1754944e-38, %v869
    %v871 = vsel %vm868, %v870, %v866
    %v872 = vmul.f32 1.0, %v871
    %v873 = vrcp.pop %v827
    %v874 = vmul.f32 %v827, %v873
    %v875 = vsub.f32 1.0, %v874
    %v876 = vmul.f32 %v873, %v875
    %v877 = vadd.f32 %v873, %v876
    %vm878 = vweird.f32 %v827
    %vm879 = vweird.f32 %v873
    %vm880 = vmor %vm878, %vm879
    %v881 = vsel %vm880, %v873, %v877
    %v882 = vand.u32 2147483647, %v827
    %vm883 = vcmp.eq.f32.partialorder %v882, 8.507059e+37
    %v884 = vand.u32 %v827, 2147483648
    %v885 = vor.u32 1.1754944e-38, %v884
    %v886 = vsel %vm883, %v885, %v881
    %v887 = vmul.f32 1.0, %v886
    %v888 = vadd.f32 %v258, %v780
    %v889 = vadd.f32 %v260, %v782
    %v890 = vadd.f32 %v263, %v785
    %v891 = vadd.f32 %v265, %v787
    %v892 = vxor.u32 %v888, 2147483648
    %v893 = vxor.u32 %v889, 2147483648
    %v894 = vxor.u32 %v890, 2147483648
    %v895 = vxor.u32 %v891, 2147483648
    %v896 = vmul.f32 %v892, 1.442695
    %v897 = vpow.pop %v896
    %v898 = vmul.f32 %v893, 1.442695
    %v899 = vpow.pop %v898
    %v900 = vmul.f32 %v894, 1.442695
    %v901 = vpow.pop %v900
    %v902 = vmul.f32 %v895, 1.442695
    %v903 = vpow.pop %v902
    %v904 = vadd.f32 %v897, 1.0
    %v905 = vadd.f32 %v899, 1.0
    %v906 = vadd.f32 %v901, 1.0
    %v907 = vadd.f32 %v903, 1.0
    %v908 = vrcp.pop %v904
    %v909 = vmul.f32 %v904, %v908
    %v910 = vsub.f32 1.0, %v909
    %v911 = vmul.f32 %v908, %v910
    %v912 = vadd.f32 %v908, %v911
    %vm913 = vweird.f32 %v904
    %vm914 = vweird.f32 %v908
    %vm915 = vmor %vm913, %vm914
    %v916 = vsel %vm915, %v908, %v912
    %v917 = vand.u32 2147483647, %v904
    %vm918 = vcmp.eq.f32.partialorder %v917, 8.507059e+37
    %v919 = vand.u32 %v904, 2147483648
    %v920 = vor.u32 1.1754944e-38, %v919
    %v921 = vsel %vm918, %v920, %v916
    %v922 = vmul.f32 1.0, %v921
    %v923 = vrcp.pop %v905
    %v924 = vmul.f32 %v905, %v923
    %v925 = vsub.f32 1.0, %v924
    %v926 = vmul.f32 %v923, %v925
    %v927 = vadd.f32 %v923, %v926
    %vm928 = vweird.f32 %v905
    %vm929 = vweird.f32 %v923
    %vm930 = vmor %vm928, %vm929
    %v931 = vsel %vm930, %v923, %v927
    %v932 = vand.u32 2147483647, %v905
    %vm933 = vcmp.eq.f32.partialorder %v932, 8.507059e+37
    %v934 = vand.u32 %v905, 2147483648
    %v935 = vor.u32 1.1754944e-38, %v934
    %v936 = vsel %vm933, %v935, %v931
    %v937 = vmul.f32 1.0, %v936
    %v938 = vrcp.pop %v906
    %v939 = vmul.f32 %v906, %v938
    %v940 = vsub.f32 1.0, %v939
    %v941 = vmul.f32 %v938, %v940
    %v942 = vadd.f32 %v938, %v941
    %vm943 = vweird.f32 %v906
    %vm944 = vweird.f32 %v938
    %vm945 = vmor %vm943, %vm944
    %v946 = vsel %vm945, %v938, %v942
    %v947 = vand.u32 2147483647, %v906
    %vm948 = vcmp.eq.f32.partialorder %v947, 8.507059e+37
    %v949 = vand.u32 %v906, 2147483648
    %v950 = vor.u32 1.1754944e-38, %v949
    %v951 = vsel %vm948, %v950, %v946
    %v952 = vmul.f32 1.0, %v951
    %v953 = vrcp.pop %v907
    %v954 = vmul.f32 %v907, %v953
    %v955 = vsub.f32 1.0, %v954
    %v956 = vmul.f32 %v953, %v955
    %v957 = vadd.f32 %v953, %v956
    %vm958 = vweird.f32 %v907
    %vm959 = vweird.f32 %v953
    %vm960 = vmor %vm958, %vm959
    %v961 = vsel %vm960, %v953, %v957
    %v962 = vand.u32 2147483647, %v907
    %vm963 = vcmp.eq.f32.partialorder %v962, 8.507059e+37
    %v964 = vand.u32 %v907, 2147483648
    %v965 = vor.u32 1.1754944e-38, %v964
    %v966 = vsel %vm963, %v965, %v961
    %v967 = vmul.f32 1.0, %v966
    %v968 = vadd.f32 %v799, %v370
    %v969 = vadd.f32 %v801, %v370
    %v970 = vadd.f32 %v804, %v370
    %v971 = vadd.f32 %v806, %v370
    %v972 = vmul.f32 %v842, %v968
    %v973 = vmul.f32 %v857, %v969
    %v974 = vmul.f32 %v872, %v970
    %v975 = vmul.f32 %v887, %v971
    %v976 = vadd.f32 %v307, %v972
    %v977 = vadd.f32 %v309, %v973
    %v978 = vadd.f32 %v312, %v974
    %v979 = vadd.f32 %v314, %v975
    %v980 = vtanh.pop %v976
    %v981 = vtanh.pop %v977
    %v982 = vtanh.pop %v978
    %v983 = vtanh.pop %v979
    %v984 = vsub.f32 1.0, %v922
    %v985 = vsub.f32 1.0, %v937
    %v986 = vsub.f32 1.0, %v952
    %v987 = vsub.f32 1.0, %v967
    %v988 = vmul.f32 %v984, %v980
    %v989 = vmul.f32 %v985, %v981
    %v990 = vmul.f32 %v986, %v982
    %v991 = vmul.f32 %v987, %v983
    %v992 = vmul.f32 %v922, %v745
    %v993 = vmul.f32 %v937, %v746
    %v994 = vmul.f32 %v952, %v747
    %v995 = vmul.f32 %v967, %v748
    %v996 = vadd.f32 %v988, %v992
    %v997 = vadd.f32 %v989, %v993
    %v998 = vadd.f32 %v990, %v994
    %v999 = vadd.f32 %v991, %v995
    %v1000 = vpack.c.bf16 %v997, %v996
    %v1001 = vpack.c.bf16 %v999, %v998
    %1002 = vmatpush.bf16.msra.mxu0 %v473
    %1003 = vmatpush.bf16.msra.mxu0 %v470
    %1004 = vmatpush.bf16.msra.mxu0 %v467
    %1005 = vmatpush.bf16.msra.mxu0 %v464
    %1006 = vmatpush.bf16.msra.mxu0 %v461
    %1007 = vmatpush.bf16.msra.mxu0 %v458
    %1008 = vmatpush.bf16.msra.mxu0 %v455
    %1009 = vmatpush.bf16.msra.mxu0 %v452
    %1010 = vmatmul.bf16.gmra.mxu0 %v1000
    %v1011 = vpop.f32.mrf.mxu0
    %v1012 = vadd.f32 0.0, %v1011
    %v1013 = vpop.f32.mrf.mxu0
    %v1014 = vadd.f32 0.0, %v1013
    %1015 = vmatmul.bf16.gmra.mxu0 %v1001
    %v1016 = vpop.f32.mrf.mxu0
    %v1017 = vadd.f32 0.0, %v1016
    %v1018 = vpop.f32.mrf.mxu0
    %v1019 = vadd.f32 0.0, %v1018
    %1020 = vdwg.mxu0
    %1021 = vmatpush.bf16.msra.mxu0 %v474
    %1022 = vmatpush.bf16.msra.mxu0 %v471
    %1023 = vmatpush.bf16.msra.mxu0 %v468
    %1024 = vmatpush.bf16.msra.mxu0 %v465
    %1025 = vmatpush.bf16.msra.mxu0 %v462
    %1026 = vmatpush.bf16.msra.mxu0 %v459
    %1027 = vmatpush.bf16.msra.mxu0 %v456
    %1028 = vmatpush.bf16.msra.mxu0 %v453
    %1029 = vmatmul.bf16.gmra.mxu0 %v1000
    %v1030 = vpop.f32.mrf.mxu0
    %v1031 = vadd.f32 0.0, %v1030
    %v1032 = vpop.f32.mrf.mxu0
    %v1033 = vadd.f32 0.0, %v1032
    %1034 = vmatmul.bf16.gmra.mxu0 %v1001
    %v1035 = vpop.f32.mrf.mxu0
    %v1036 = vadd.f32 0.0, %v1035
    %v1037 = vpop.f32.mrf.mxu0
    %v1038 = vadd.f32 0.0, %v1037
    %1039 = vdwg.mxu0
    %1040 = vmatpush.bf16.msra.mxu0 %v475
    %1041 = vmatpush.bf16.msra.mxu0 %v472
    %1042 = vmatpush.bf16.msra.mxu0 %v469
    %1043 = vmatpush.bf16.msra.mxu0 %v466
    %1044 = vmatpush.bf16.msra.mxu0 %v463
    %1045 = vmatpush.bf16.msra.mxu0 %v460
    %1046 = vmatpush.bf16.msra.mxu0 %v457
    %1047 = vmatpush.bf16.msra.mxu0 %v454
    %1048 = vmatmul.bf16.gmra.mxu0 %v1000
    %v1049 = vpop.f32.mrf.mxu0
    %v1050 = vadd.f32 0.0, %v1049
    %v1051 = vpop.f32.mrf.mxu0
    %v1052 = vadd.f32 0.0, %v1051
    %1053 = vmatmul.bf16.gmra.mxu0 %v1001
    %v1054 = vpop.f32.mrf.mxu0
    %v1055 = vadd.f32 0.0, %v1054
    %v1056 = vpop.f32.mrf.mxu0
    %v1057 = vadd.f32 0.0, %v1056
    %1058 = vdwg.mxu0
    %v1059 = vadd.f32 %v219, %v1012
    %v1060 = vadd.f32 %v221, %v1014
    %v1061 = vadd.f32 %v224, %v1017
    %v1062 = vadd.f32 %v226, %v1019
    %v1063 = vxor.u32 %v1059, 2147483648
    %v1064 = vxor.u32 %v1060, 2147483648
    %v1065 = vxor.u32 %v1061, 2147483648
    %v1066 = vxor.u32 %v1062, 2147483648
    %v1067 = vmul.f32 %v1063, 1.442695
    %v1068 = vpow.pop %v1067
    %v1069 = vmul.f32 %v1064, 1.442695
    %v1070 = vpow.pop %v1069
    %v1071 = vmul.f32 %v1065, 1.442695
    %v1072 = vpow.pop %v1071
    %v1073 = vmul.f32 %v1066, 1.442695
    %v1074 = vpow.pop %v1073
    %v1075 = vadd.f32 %v1068, 1.0
    %v1076 = vadd.f32 %v1070, 1.0
    %v1077 = vadd.f32 %v1072, 1.0
    %v1078 = vadd.f32 %v1074, 1.0
    %v1079 = vrcp.pop %v1075
    %v1080 = vmul.f32 %v1075, %v1079
    %v1081 = vsub.f32 1.0, %v1080
    %v1082 = vmul.f32 %v1079, %v1081
    %v1083 = vadd.f32 %v1079, %v1082
    %vm1084 = vweird.f32 %v1075
    %vm1085 = vweird.f32 %v1079
    %vm1086 = vmor %vm1084, %vm1085
    %v1087 = vsel %vm1086, %v1079, %v1083
    %v1088 = vand.u32 2147483647, %v1075
    %vm1089 = vcmp.eq.f32.partialorder %v1088, 8.507059e+37
    %v1090 = vand.u32 %v1075, 2147483648
    %v1091 = vor.u32 1.1754944e-38, %v1090
    %v1092 = vsel %vm1089, %v1091, %v1087
    %v1093 = vmul.f32 1.0, %v1092
    %v1094 = vrcp.pop %v1076
    %v1095 = vmul.f32 %v1076, %v1094
    %v1096 = vsub.f32 1.0, %v1095
    %v1097 = vmul.f32 %v1094, %v1096
    %v1098 = vadd.f32 %v1094, %v1097
    %vm1099 = vweird.f32 %v1076
    %vm1100 = vweird.f32 %v1094
    %vm1101 = vmor %vm1099, %vm1100
    %v1102 = vsel %vm1101, %v1094, %v1098
    %v1103 = vand.u32 2147483647, %v1076
    %vm1104 = vcmp.eq.f32.partialorder %v1103, 8.507059e+37
    %v1105 = vand.u32 %v1076, 2147483648
    %v1106 = vor.u32 1.1754944e-38, %v1105
    %v1107 = vsel %vm1104, %v1106, %v1102
    %v1108 = vmul.f32 1.0, %v1107
    %v1109 = vrcp.pop %v1077
    %v1110 = vmul.f32 %v1077, %v1109
    %v1111 = vsub.f32 1.0, %v1110
    %v1112 = vmul.f32 %v1109, %v1111
    %v1113 = vadd.f32 %v1109, %v1112
    %vm1114 = vweird.f32 %v1077
    %vm1115 = vweird.f32 %v1109
    %vm1116 = vmor %vm1114, %vm1115
    %v1117 = vsel %vm1116, %v1109, %v1113
    %v1118 = vand.u32 2147483647, %v1077
    %vm1119 = vcmp.eq.f32.partialorder %v1118, 8.507059e+37
    %v1120 = vand.u32 %v1077, 2147483648
    %v1121 = vor.u32 1.1754944e-38, %v1120
    %v1122 = vsel %vm1119, %v1121, %v1117
    %v1123 = vmul.f32 1.0, %v1122
    %v1124 = vrcp.pop %v1078
    %v1125 = vmul.f32 %v1078, %v1124
    %v1126 = vsub.f32 1.0, %v1125
    %v1127 = vmul.f32 %v1124, %v1126
    %v1128 = vadd.f32 %v1124, %v1127
    %vm1129 = vweird.f32 %v1078
    %vm1130 = vweird.f32 %v1124
    %vm1131 = vmor %vm1129, %vm1130
    %v1132 = vsel %vm1131, %v1124, %v1128
    %v1133 = vand.u32 2147483647, %v1078
    %vm1134 = vcmp.eq.f32.partialorder %v1133, 8.507059e+37
    %v1135 = vand.u32 %v1078, 2147483648
    %v1136 = vor.u32 1.1754944e-38, %v1135
    %v1137 = vsel %vm1134, %v1136, %v1132
    %v1138 = vmul.f32 1.0, %v1137
    %v1139 = vadd.f32 %v268, %v1031
    %v1140 = vadd.f32 %v270, %v1033
    %v1141 = vadd.f32 %v273, %v1036
    %v1142 = vadd.f32 %v275, %v1038
    %v1143 = vxor.u32 %v1139, 2147483648
    %v1144 = vxor.u32 %v1140, 2147483648
    %v1145 = vxor.u32 %v1141, 2147483648
    %v1146 = vxor.u32 %v1142, 2147483648
    %v1147 = vmul.f32 %v1143, 1.442695
    %v1148 = vpow.pop %v1147
    %v1149 = vmul.f32 %v1144, 1.442695
    %v1150 = vpow.pop %v1149
    %v1151 = vmul.f32 %v1145, 1.442695
    %v1152 = vpow.pop %v1151
    %v1153 = vmul.f32 %v1146, 1.442695
    %v1154 = vpow.pop %v1153
    %v1155 = vadd.f32 %v1148, 1.0
    %v1156 = vadd.f32 %v1150, 1.0
    %v1157 = vadd.f32 %v1152, 1.0
    %v1158 = vadd.f32 %v1154, 1.0
    %v1159 = vrcp.pop %v1155
    %v1160 = vmul.f32 %v1155, %v1159
    %v1161 = vsub.f32 1.0, %v1160
    %v1162 = vmul.f32 %v1159, %v1161
    %v1163 = vadd.f32 %v1159, %v1162
    %vm1164 = vweird.f32 %v1155
    %vm1165 = vweird.f32 %v1159
    %vm1166 = vmor %vm1164, %vm1165
    %v1167 = vsel %vm1166, %v1159, %v1163
    %v1168 = vand.u32 2147483647, %v1155
    %vm1169 = vcmp.eq.f32.partialorder %v1168, 8.507059e+37
    %v1170 = vand.u32 %v1155, 2147483648
    %v1171 = vor.u32 1.1754944e-38, %v1170
    %v1172 = vsel %vm1169, %v1171, %v1167
    %v1173 = vmul.f32 1.0, %v1172
    %v1174 = vrcp.pop %v1156
    %v1175 = vmul.f32 %v1156, %v1174
    %v1176 = vsub.f32 1.0, %v1175
    %v1177 = vmul.f32 %v1174, %v1176
    %v1178 = vadd.f32 %v1174, %v1177
    %vm1179 = vweird.f32 %v1156
    %vm1180 = vweird.f32 %v1174
    %vm1181 = vmor %vm1179, %vm1180
    %v1182 = vsel %vm1181, %v1174, %v1178
    %v1183 = vand.u32 2147483647, %v1156
    %vm1184 = vcmp.eq.f32.partialorder %v1183, 8.507059e+37
    %v1185 = vand.u32 %v1156, 2147483648
    %v1186 = vor.u32 1.1754944e-38, %v1185
    %v1187 = vsel %vm1184, %v1186, %v1182
    %v1188 = vmul.f32 1.0, %v1187
    %v1189 = vrcp.pop %v1157
    %v1190 = vmul.f32 %v1157, %v1189
    %v1191 = vsub.f32 1.0, %v1190
    %v1192 = vmul.f32 %v1189, %v1191
    %v1193 = vadd.f32 %v1189, %v1192
    %vm1194 = vweird.f32 %v1157
    %vm1195 = vweird.f32 %v1189
    %vm1196 = vmor %vm1194, %vm1195
    %v1197 = vsel %vm1196, %v1189, %v1193
    %v1198 = vand.u32 2147483647, %v1157
    %vm1199 = vcmp.eq.f32.partialorder %v1198, 8.507059e+37
    %v1200 = vand.u32 %v1157, 2147483648
    %v1201 = vor.u32 1.1754944e-38, %v1200
    %v1202 = vsel %vm1199, %v1201, %v1197
    %v1203 = vmul.f32 1.0, %v1202
    %v1204 = vrcp.pop %v1158
    %v1205 = vmul.f32 %v1158, %v1204
    %v1206 = vsub.f32 1.0, %v1205
    %v1207 = vmul.f32 %v1204, %v1206
    %v1208 = vadd.f32 %v1204, %v1207
    %vm1209 = vweird.f32 %v1158
    %vm1210 = vweird.f32 %v1204
    %vm1211 = vmor %vm1209, %vm1210
    %v1212 = vsel %vm1211, %v1204, %v1208
    %v1213 = vand.u32 2147483647, %v1158
    %vm1214 = vcmp.eq.f32.partialorder %v1213, 8.507059e+37
    %v1215 = vand.u32 %v1158, 2147483648
    %v1216 = vor.u32 1.1754944e-38, %v1215
    %v1217 = vsel %vm1214, %v1216, %v1212
    %v1218 = vmul.f32 1.0, %v1217
    %v1219 = vadd.f32 %v1050, %v370
    %v1220 = vadd.f32 %v1052, %v370
    %v1221 = vadd.f32 %v1055, %v370
    %v1222 = vadd.f32 %v1057, %v370
    %v1223 = vmul.f32 %v1093, %v1219
    %v1224 = vmul.f32 %v1108, %v1220
    %v1225 = vmul.f32 %v1123, %v1221
    %v1226 = vmul.f32 %v1138, %v1222
    %v1227 = vadd.f32 %v317, %v1223
    %v1228 = vadd.f32 %v319, %v1224
    %v1229 = vadd.f32 %v322, %v1225
    %v1230 = vadd.f32 %v324, %v1226
    %v1231 = vtanh.pop %v1227
    %v1232 = vtanh.pop %v1228
    %v1233 = vtanh.pop %v1229
    %v1234 = vtanh.pop %v1230
    %v1235 = vsub.f32 1.0, %v1173
    %v1236 = vsub.f32 1.0, %v1188
    %v1237 = vsub.f32 1.0, %v1203
    %v1238 = vsub.f32 1.0, %v1218
    %v1239 = vmul.f32 %v1235, %v1231
    %v1240 = vmul.f32 %v1236, %v1232
    %v1241 = vmul.f32 %v1237, %v1233
    %v1242 = vmul.f32 %v1238, %v1234
    %v1243 = vmul.f32 %v1173, %v996
    %v1244 = vmul.f32 %v1188, %v997
    %v1245 = vmul.f32 %v1203, %v998
    %v1246 = vmul.f32 %v1218, %v999
    %v1247 = vadd.f32 %v1239, %v1243
    %v1248 = vadd.f32 %v1240, %v1244
    %v1249 = vadd.f32 %v1241, %v1245
    %v1250 = vadd.f32 %v1242, %v1246
    %v1251 = vpack.c.bf16 %v1248, %v1247
    %v1252 = vpack.c.bf16 %v1250, %v1249
    %1253 = vmatpush.bf16.msra.mxu0 %v473
    %1254 = vmatpush.bf16.msra.mxu0 %v470
    %1255 = vmatpush.bf16.msra.mxu0 %v467
    %1256 = vmatpush.bf16.msra.mxu0 %v464
    %1257 = vmatpush.bf16.msra.mxu0 %v461
    %1258 = vmatpush.bf16.msra.mxu0 %v458
    %1259 = vmatpush.bf16.msra.mxu0 %v455
    %1260 = vmatpush.bf16.msra.mxu0 %v452
    %1261 = vmatmul.bf16.gmra.mxu0 %v1251
    %v1262 = vpop.f32.mrf.mxu0
    %v1263 = vadd.f32 0.0, %v1262
    %v1264 = vpop.f32.mrf.mxu0
    %v1265 = vadd.f32 0.0, %v1264
    %1266 = vmatmul.bf16.gmra.mxu0 %v1252
    %v1267 = vpop.f32.mrf.mxu0
    %v1268 = vadd.f32 0.0, %v1267
    %v1269 = vpop.f32.mrf.mxu0
    %v1270 = vadd.f32 0.0, %v1269
    %1271 = vdwg.mxu0
    %1272 = vmatpush.bf16.msra.mxu0 %v474
    %1273 = vmatpush.bf16.msra.mxu0 %v471
    %1274 = vmatpush.bf16.msra.mxu0 %v468
    %1275 = vmatpush.bf16.msra.mxu0 %v465
    %1276 = vmatpush.bf16.msra.mxu0 %v462
    %1277 = vmatpush.bf16.msra.mxu0 %v459
    %1278 = vmatpush.bf16.msra.mxu0 %v456
    %1279 = vmatpush.bf16.msra.mxu0 %v453
    %1280 = vmatmul.bf16.gmra.mxu0 %v1251
    %v1281 = vpop.f32.mrf.mxu0
    %v1282 = vadd.f32 0.0, %v1281
    %v1283 = vpop.f32.mrf.mxu0
    %v1284 = vadd.f32 0.0, %v1283
    %1285 = vmatmul.bf16.gmra.mxu0 %v1252
    %v1286 = vpop.f32.mrf.mxu0
    %v1287 = vadd.f32 0.0, %v1286
    %v1288 = vpop.f32.mrf.mxu0
    %v1289 = vadd.f32 0.0, %v1288
    %1290 = vdwg.mxu0
    %1291 = vmatpush.bf16.msra.mxu0 %v475
    %1292 = vmatpush.bf16.msra.mxu0 %v472
    %1293 = vmatpush.bf16.msra.mxu0 %v469
    %1294 = vmatpush.bf16.msra.mxu0 %v466
    %1295 = vmatpush.bf16.msra.mxu0 %v463
    %1296 = vmatpush.bf16.msra.mxu0 %v460
    %1297 = vmatpush.bf16.msra.mxu0 %v457
    %1298 = vmatpush.bf16.msra.mxu0 %v454
    %1299 = vmatmul.bf16.gmra.mxu0 %v1251
    %v1300 = vpop.f32.mrf.mxu0
    %v1301 = vadd.f32 0.0, %v1300
    %v1302 = vpop.f32.mrf.mxu0
    %v1303 = vadd.f32 0.0, %v1302
    %1304 = vmatmul.bf16.gmra.mxu0 %v1252
    %v1305 = vpop.f32.mrf.mxu0
    %v1306 = vadd.f32 0.0, %v1305
    %v1307 = vpop.f32.mrf.mxu0
    %v1308 = vadd.f32 0.0, %v1307
    %1309 = vdwg.mxu0
    %v1310 = vadd.f32 %v229, %v1263
    %v1311 = vadd.f32 %v231, %v1265
    %v1312 = vadd.f32 %v234, %v1268
    %v1313 = vadd.f32 %v236, %v1270
    %v1314 = vxor.u32 %v1310, 2147483648
    %v1315 = vxor.u32 %v1311, 2147483648
    %v1316 = vxor.u32 %v1312, 2147483648
    %v1317 = vxor.u32 %v1313, 2147483648
    %v1318 = vmul.f32 %v1314, 1.442695
    %v1319 = vpow.pop %v1318
    %v1320 = vmul.f32 %v1315, 1.442695
    %v1321 = vpow.pop %v1320
    %v1322 = vmul.f32 %v1316, 1.442695
    %v1323 = vpow.pop %v1322
    %v1324 = vmul.f32 %v1317, 1.442695
    %v1325 = vpow.pop %v1324
    %v1326 = vadd.f32 %v1319, 1.0
    %v1327 = vadd.f32 %v1321, 1.0
    %v1328 = vadd.f32 %v1323, 1.0
    %v1329 = vadd.f32 %v1325, 1.0
    %v1330 = vrcp.pop %v1326
    %v1331 = vmul.f32 %v1326, %v1330
    %v1332 = vsub.f32 1.0, %v1331
    %v1333 = vmul.f32 %v1330, %v1332
    %v1334 = vadd.f32 %v1330, %v1333
    %vm1335 = vweird.f32 %v1326
    %vm1336 = vweird.f32 %v1330
    %vm1337 = vmor %vm1335, %vm1336
    %v1338 = vsel %vm1337, %v1330, %v1334
    %v1339 = vand.u32 2147483647, %v1326
    %vm1340 = vcmp.eq.f32.partialorder %v1339, 8.507059e+37
    %v1341 = vand.u32 %v1326, 2147483648
    %v1342 = vor.u32 1.1754944e-38, %v1341
    %v1343 = vsel %vm1340, %v1342, %v1338
    %v1344 = vmul.f32 1.0, %v1343
    %v1345 = vrcp.pop %v1327
    %v1346 = vmul.f32 %v1327, %v1345
    %v1347 = vsub.f32 1.0, %v1346
    %v1348 = vmul.f32 %v1345, %v1347
    %v1349 = vadd.f32 %v1345, %v1348
    %vm1350 = vweird.f32 %v1327
    %vm1351 = vweird.f32 %v1345
    %vm1352 = vmor %vm1350, %vm1351
    %v1353 = vsel %vm1352, %v1345, %v1349
    %v1354 = vand.u32 2147483647, %v1327
    %vm1355 = vcmp.eq.f32.partialorder %v1354, 8.507059e+37
    %v1356 = vand.u32 %v1327, 2147483648
    %v1357 = vor.u32 1.1754944e-38, %v1356
    %v1358 = vsel %vm1355, %v1357, %v1353
    %v1359 = vmul.f32 1.0, %v1358
    %v1360 = vrcp.pop %v1328
    %v1361 = vmul.f32 %v1328, %v1360
    %v1362 = vsub.f32 1.0, %v1361
    %v1363 = vmul.f32 %v1360, %v1362
    %v1364 = vadd.f32 %v1360, %v1363
    %vm1365 = vweird.f32 %v1328
    %vm1366 = vweird.f32 %v1360
    %vm1367 = vmor %vm1365, %vm1366
    %v1368 = vsel %vm1367, %v1360, %v1364
    %v1369 = vand.u32 2147483647, %v1328
    %vm1370 = vcmp.eq.f32.partialorder %v1369, 8.507059e+37
    %v1371 = vand.u32 %v1328, 2147483648
    %v1372 = vor.u32 1.1754944e-38, %v1371
    %v1373 = vsel %vm1370, %v1372, %v1368
    %v1374 = vmul.f32 1.0, %v1373
    %v1375 = vrcp.pop %v1329
    %v1376 = vmul.f32 %v1329, %v1375
    %v1377 = vsub.f32 1.0, %v1376
    %v1378 = vmul.f32 %v1375, %v1377
    %v1379 = vadd.f32 %v1375, %v1378
    %vm1380 = vweird.f32 %v1329
    %vm1381 = vweird.f32 %v1375
    %vm1382 = vmor %vm1380, %vm1381
    %v1383 = vsel %vm1382, %v1375, %v1379
    %v1384 = vand.u32 2147483647, %v1329
    %vm1385 = vcmp.eq.f32.partialorder %v1384, 8.507059e+37
    %v1386 = vand.u32 %v1329, 2147483648
    %v1387 = vor.u32 1.1754944e-38, %v1386
    %v1388 = vsel %vm1385, %v1387, %v1383
    %v1389 = vmul.f32 1.0, %v1388
    %v1390 = vadd.f32 %v278, %v1282
    %v1391 = vadd.f32 %v280, %v1284
    %v1392 = vadd.f32 %v283, %v1287
    %v1393 = vadd.f32 %v285, %v1289
    %v1394 = vxor.u32 %v1390, 2147483648
    %v1395 = vxor.u32 %v1391, 2147483648
    %v1396 = vxor.u32 %v1392, 2147483648
    %v1397 = vxor.u32 %v1393, 2147483648
    %v1398 = vmul.f32 %v1394, 1.442695
    %v1399 = vpow.pop %v1398
    %v1400 = vmul.f32 %v1395, 1.442695
    %v1401 = vpow.pop %v1400
    %v1402 = vmul.f32 %v1396, 1.442695
    %v1403 = vpow.pop %v1402
    %v1404 = vmul.f32 %v1397, 1.442695
    %v1405 = vpow.pop %v1404
    %v1406 = vadd.f32 %v1399, 1.0
    %v1407 = vadd.f32 %v1401, 1.0
    %v1408 = vadd.f32 %v1403, 1.0
    %v1409 = vadd.f32 %v1405, 1.0
    %v1410 = vrcp.pop %v1406
    %v1411 = vmul.f32 %v1406, %v1410
    %v1412 = vsub.f32 1.0, %v1411
    %v1413 = vmul.f32 %v1410, %v1412
    %v1414 = vadd.f32 %v1410, %v1413
    %vm1415 = vweird.f32 %v1406
    %vm1416 = vweird.f32 %v1410
    %vm1417 = vmor %vm1415, %vm1416
    %v1418 = vsel %vm1417, %v1410, %v1414
    %v1419 = vand.u32 2147483647, %v1406
    %vm1420 = vcmp.eq.f32.partialorder %v1419, 8.507059e+37
    %v1421 = vand.u32 %v1406, 2147483648
    %v1422 = vor.u32 1.1754944e-38, %v1421
    %v1423 = vsel %vm1420, %v1422, %v1418
    %v1424 = vmul.f32 1.0, %v1423
    %v1425 = vrcp.pop %v1407
    %v1426 = vmul.f32 %v1407, %v1425
    %v1427 = vsub.f32 1.0, %v1426
    %v1428 = vmul.f32 %v1425, %v1427
    %v1429 = vadd.f32 %v1425, %v1428
    %vm1430 = vweird.f32 %v1407
    %vm1431 = vweird.f32 %v1425
    %vm1432 = vmor %vm1430, %vm1431
    %v1433 = vsel %vm1432, %v1425, %v1429
    %v1434 = vand.u32 2147483647, %v1407
    %vm1435 = vcmp.eq.f32.partialorder %v1434, 8.507059e+37
    %v1436 = vand.u32 %v1407, 2147483648
    %v1437 = vor.u32 1.1754944e-38, %v1436
    %v1438 = vsel %vm1435, %v1437, %v1433
    %v1439 = vmul.f32 1.0, %v1438
    %v1440 = vrcp.pop %v1408
    %v1441 = vmul.f32 %v1408, %v1440
    %v1442 = vsub.f32 1.0, %v1441
    %v1443 = vmul.f32 %v1440, %v1442
    %v1444 = vadd.f32 %v1440, %v1443
    %vm1445 = vweird.f32 %v1408
    %vm1446 = vweird.f32 %v1440
    %vm1447 = vmor %vm1445, %vm1446
    %v1448 = vsel %vm1447, %v1440, %v1444
    %v1449 = vand.u32 2147483647, %v1408
    %vm1450 = vcmp.eq.f32.partialorder %v1449, 8.507059e+37
    %v1451 = vand.u32 %v1408, 2147483648
    %v1452 = vor.u32 1.1754944e-38, %v1451
    %v1453 = vsel %vm1450, %v1452, %v1448
    %v1454 = vmul.f32 1.0, %v1453
    %v1455 = vrcp.pop %v1409
    %v1456 = vmul.f32 %v1409, %v1455
    %v1457 = vsub.f32 1.0, %v1456
    %v1458 = vmul.f32 %v1455, %v1457
    %v1459 = vadd.f32 %v1455, %v1458
    %vm1460 = vweird.f32 %v1409
    %vm1461 = vweird.f32 %v1455
    %vm1462 = vmor %vm1460, %vm1461
    %v1463 = vsel %vm1462, %v1455, %v1459
    %v1464 = vand.u32 2147483647, %v1409
    %vm1465 = vcmp.eq.f32.partialorder %v1464, 8.507059e+37
    %v1466 = vand.u32 %v1409, 2147483648
    %v1467 = vor.u32 1.1754944e-38, %v1466
    %v1468 = vsel %vm1465, %v1467, %v1463
    %v1469 = vmul.f32 1.0, %v1468
    %v1470 = vadd.f32 %v1301, %v370
    %v1471 = vadd.f32 %v1303, %v370
    %v1472 = vadd.f32 %v1306, %v370
    %v1473 = vadd.f32 %v1308, %v370
    %v1474 = vmul.f32 %v1344, %v1470
    %v1475 = vmul.f32 %v1359, %v1471
    %v1476 = vmul.f32 %v1374, %v1472
    %v1477 = vmul.f32 %v1389, %v1473
    %v1478 = vadd.f32 %v327, %v1474
    %v1479 = vadd.f32 %v329, %v1475
    %v1480 = vadd.f32 %v332, %v1476
    %v1481 = vadd.f32 %v334, %v1477
    %v1482 = vtanh.pop %v1478
    %v1483 = vtanh.pop %v1479
    %v1484 = vtanh.pop %v1480
    %v1485 = vtanh.pop %v1481
    %v1486 = vsub.f32 1.0, %v1424
    %v1487 = vsub.f32 1.0, %v1439
    %v1488 = vsub.f32 1.0, %v1454
    %v1489 = vsub.f32 1.0, %v1469
    %v1490 = vmul.f32 %v1486, %v1482
    %v1491 = vmul.f32 %v1487, %v1483
    %v1492 = vmul.f32 %v1488, %v1484
    %v1493 = vmul.f32 %v1489, %v1485
    %v1494 = vmul.f32 %v1424, %v1247
    %v1495 = vmul.f32 %v1439, %v1248
    %v1496 = vmul.f32 %v1454, %v1249
    %v1497 = vmul.f32 %v1469, %v1250
    %v1498 = vadd.f32 %v1490, %v1494
    %v1499 = vadd.f32 %v1491, %v1495
    %v1500 = vadd.f32 %v1492, %v1496
    %v1501 = vadd.f32 %v1493, %v1497
    %v1502 = vpack.c.bf16 %v1499, %v1498
    %v1503 = vpack.c.bf16 %v1501, %v1500
    %v1504 = vld [vmem:[#allocation5] sm:$0xff]
    %v1505 = vld [vmem:[#allocation5 + $0x8] sm:$0xf]
    %v1506 = vld [vmem:[#allocation5 + $0xc] sm:$0xff]
    %v1507 = vld [vmem:[#allocation5 + $0x14] sm:$0xf]
    %v1508 = vld [vmem:[#allocation5 + $0x18] sm:$0xff]
    %v1509 = vld [vmem:[#allocation5 + $0x20] sm:$0xf]
    %v1510 = vld [vmem:[#allocation5 + $0x24] sm:$0xff]
    %v1511 = vld [vmem:[#allocation5 + $0x2c] sm:$0xf]
    %v1512 = vld [vmem:[#allocation5 + $0x30] sm:$0xff]
    %v1513 = vld [vmem:[#allocation5 + $0x38] sm:$0xf]
    %v1514 = vld [vmem:[#allocation5 + $0x3c] sm:$0xff]
    %v1515 = vld [vmem:[#allocation5 + $0x44] sm:$0xf]
    %v1516 = vld [vmem:[#allocation5 + $0x48] sm:$0xff]
    %v1517 = vld [vmem:[#allocation5 + $0x50] sm:$0xf]
    %v1518 = vld [vmem:[#allocation5 + $0x54] sm:$0xff]
    %v1519 = vld [vmem:[#allocation5 + $0x5c] sm:$0xf]
    %v1520 = vld [vmem:[#allocation5 + $0x60] sm:$0xff]
    %v1521 = vld [vmem:[#allocation5 + $0x68] sm:$0xf]
    %v1522 = vld [vmem:[#allocation5 + $0x6c] sm:$0xff]
    %v1523 = vld [vmem:[#allocation5 + $0x74] sm:$0xf]
    %v1524 = vld [vmem:[#allocation5 + $0x78] sm:$0xff]
    %v1525 = vld [vmem:[#allocation5 + $0x80] sm:$0xf]
    %v1526 = vld [vmem:[#allocation5 + $0x84] sm:$0xff]
    %v1527 = vld [vmem:[#allocation5 + $0x8c] sm:$0xf]
    %v1528 = vld [vmem:[#allocation5 + $0x90] sm:$0xff]
    %v1529 = vld [vmem:[#allocation5 + $0x98] sm:$0xf]
    %v1530 = vld [vmem:[#allocation5 + $0x9c] sm:$0xff]
    %v1531 = vld [vmem:[#allocation5 + $0xa4] sm:$0xf]
    %v1532 = vld [vmem:[#allocation5 + $0xa8] sm:$0xff]
    %v1533 = vld [vmem:[#allocation5 + $0xb0] sm:$0xf]
    %v1534 = vld [vmem:[#allocation5 + $0xb4] sm:$0xff]
    %v1535 = vld [vmem:[#allocation5 + $0xbc] sm:$0xf]
    %v1536 = vld [vmem:[%s7] sm:$0x7]
    %v1538 = vperm.slane %v1536, 0
    %v1539 = vperm.slane %v1536, 1
    %v1540 = vperm.slane %v1536, 2
    %v1576 = vunpack.c.l.b16 %v1504
    %v1577 = vunpack.c.h.b16 %v1504
    %v1578 = vunpack.c.l.b16 %v1505
    %v1579 = vunpack.c.l.b16 %v1506
    %v1580 = vunpack.c.h.b16 %v1506
    %v1581 = vunpack.c.l.b16 %v1507
    %v1582 = vunpack.c.l.b16 %v1508
    %v1583 = vunpack.c.h.b16 %v1508
    %v1584 = vunpack.c.l.b16 %v1509
    %v1585 = vunpack.c.l.b16 %v1510
    %v1586 = vunpack.c.h.b16 %v1510
    %v1587 = vunpack.c.l.b16 %v1511
    %v1588 = vunpack.c.l.b16 %v1512
    %v1589 = vunpack.c.h.b16 %v1512
    %v1590 = vunpack.c.l.b16 %v1513
    %v1591 = vunpack.c.l.b16 %v1514
    %v1592 = vunpack.c.h.b16 %v1514
    %v1593 = vunpack.c.l.b16 %v1515
    %v1594 = vunpack.c.l.b16 %v1516
    %v1595 = vunpack.c.h.b16 %v1516
    %v1596 = vunpack.c.l.b16 %v1517
    %v1597 = vunpack.c.l.b16 %v1518
    %v1598 = vunpack.c.h.b16 %v1518
    %v1599 = vunpack.c.l.b16 %v1519
    %v1600 = vunpack.c.l.b16 %v1520
    %v1601 = vunpack.c.h.b16 %v1520
    %v1602 = vunpack.c.l.b16 %v1521
    %v1603 = vunpack.c.l.b16 %v1522
    %v1604 = vunpack.c.h.b16 %v1522
    %v1605 = vunpack.c.l.b16 %v1523
    %v1606 = vunpack.c.l.b16 %v1524
    %v1607 = vunpack.c.h.b16 %v1524
    %v1608 = vunpack.c.l.b16 %v1525
    %v1609 = vunpack.c.l.b16 %v1526
    %v1610 = vunpack.c.h.b16 %v1526
    %v1611 = vunpack.c.l.b16 %v1527
    %v1612 = vunpack.c.l.b16 %v1528
    %v1613 = vunpack.c.h.b16 %v1528
    %v1614 = vunpack.c.l.b16 %v1529
    %v1615 = vunpack.c.l.b16 %v1530
    %v1616 = vunpack.c.h.b16 %v1530
    %v1617 = vunpack.c.l.b16 %v1531
    %v1618 = vunpack.c.l.b16 %v1532
    %v1619 = vunpack.c.h.b16 %v1532
    %v1620 = vunpack.c.l.b16 %v1533
    %v1621 = vunpack.c.l.b16 %v1534
    %v1622 = vunpack.c.h.b16 %v1534
    %v1623 = vunpack.c.l.b16 %v1535
    %v1624 = vpack.c.b16 %v1579, %v1576
    %v1625 = vpack.c.b16 %v1580, %v1577
    %v1626 = vpack.c.b16 %v1581, %v1578
    %v1627 = vpack.c.b16 %v1585, %v1582
    %v1628 = vpack.c.b16 %v1586, %v1583
    %v1629 = vpack.c.b16 %v1587, %v1584
    %v1630 = vpack.c.b16 %v1591, %v1588
    %v1631 = vpack.c.b16 %v1592, %v1589
    %v1632 = vpack.c.b16 %v1593, %v1590
    %v1633 = vpack.c.b16 %v1597, %v1594
    %v1634 = vpack.c.b16 %v1598, %v1595
    %v1635 = vpack.c.b16 %v1599, %v1596
    %v1636 = vpack.c.b16 %v1603, %v1600
    %v1637 = vpack.c.b16 %v1604, %v1601
    %v1638 = vpack.c.b16 %v1605, %v1602
    %v1639 = vpack.c.b16 %v1609, %v1606
    %v1640 = vpack.c.b16 %v1610, %v1607
    %v1641 = vpack.c.b16 %v1611, %v1608
    %v1642 = vpack.c.b16 %v1615, %v1612
    %v1643 = vpack.c.b16 %v1616, %v1613
    %v1644 = vpack.c.b16 %v1617, %v1614
    %v1645 = vpack.c.b16 %v1621, %v1618
    %v1646 = vpack.c.b16 %v1622, %v1619
    %v1647 = vpack.c.b16 %v1623, %v1620
    %1672 = vmatpush.bf16.msra.mxu0 %v1645
    %1673 = vmatpush.bf16.msra.mxu0 %v1642
    %1674 = vmatpush.bf16.msra.mxu0 %v1639
    %1675 = vmatpush.bf16.msra.mxu0 %v1636
    %1676 = vmatpush.bf16.msra.mxu0 %v1633
    %1677 = vmatpush.bf16.msra.mxu0 %v1630
    %1678 = vmatpush.bf16.msra.mxu0 %v1627
    %1679 = vmatpush.bf16.msra.mxu0 %v1624
    %1680 = vmatmul.bf16.gmra.mxu0 %v1502
    %v1681 = vpop.f32.mrf.mxu0
    %v1682 = vadd.f32 %v1538, %v1681
    %v1683 = vpop.f32.mrf.mxu0
    %v1684 = vadd.f32 %v1538, %v1683
    %1685 = vmatmul.bf16.gmra.mxu0 %v1503
    %v1686 = vpop.f32.mrf.mxu0
    %v1687 = vadd.f32 %v1538, %v1686
    %v1688 = vpop.f32.mrf.mxu0
    %v1689 = vadd.f32 %v1538, %v1688
    %1690 = vdwg.mxu0
    %1691 = vmatpush.bf16.msra.mxu0 %v1646
    %1692 = vmatpush.bf16.msra.mxu0 %v1643
    %1693 = vmatpush.bf16.msra.mxu0 %v1640
    %1694 = vmatpush.bf16.msra.mxu0 %v1637
    %1695 = vmatpush.bf16.msra.mxu0 %v1634
    %1696 = vmatpush.bf16.msra.mxu0 %v1631
    %1697 = vmatpush.bf16.msra.mxu0 %v1628
    %1698 = vmatpush.bf16.msra.mxu0 %v1625
    %1699 = vmatmul.bf16.gmra.mxu0 %v1502
    %v1700 = vpop.f32.mrf.mxu0
    %v1701 = vadd.f32 %v1539, %v1700
    %v1702 = vpop.f32.mrf.mxu0
    %v1703 = vadd.f32 %v1539, %v1702
    %1704 = vmatmul.bf16.gmra.mxu0 %v1503
    %v1705 = vpop.f32.mrf.mxu0
    %v1706 = vadd.f32 %v1539, %v1705
    %v1707 = vpop.f32.mrf.mxu0
    %v1708 = vadd.f32 %v1539, %v1707
    %1709 = vdwg.mxu0
    %1710 = vmatpush.bf16.msra.mxu0 %v1647
    %1711 = vmatpush.bf16.msra.mxu0 %v1644
    %1712 = vmatpush.bf16.msra.mxu0 %v1641
    %1713 = vmatpush.bf16.msra.mxu0 %v1638
    %1714 = vmatpush.bf16.msra.mxu0 %v1635
    %1715 = vmatpush.bf16.msra.mxu0 %v1632
    %1716 = vmatpush.bf16.msra.mxu0 %v1629
    %1717 = vmatpush.bf16.msra.mxu0 %v1626
    %1718 = vmatmul.bf16.gmra.mxu0 %v1502
    %v1719 = vpop.f32.mrf.mxu0
    %v1720 = vadd.f32 %v1540, %v1719
    %v1721 = vpop.f32.mrf.mxu0
    %v1722 = vadd.f32 %v1540, %v1721
    %1723 = vmatmul.bf16.gmra.mxu0 %v1503
    %v1724 = vpop.f32.mrf.mxu0
    %v1725 = vadd.f32 %v1540, %v1724
    %v1726 = vpop.f32.mrf.mxu0
    %v1727 = vadd.f32 %v1540, %v1726
    %1728 = vdwg.mxu0
    %v1729 = vld [vmem:[#allocation7] sm:$0xff]
    %v1730 = vld [vmem:[#allocation7 + $0x8] sm:$0xf]
    %v1731 = vld [vmem:[#allocation7 + $0xc] sm:$0xff]
    %v1732 = vld [vmem:[#allocation7 + $0x14] sm:$0xf]
    %v1733 = vld [vmem:[#allocation7 + $0x18] sm:$0xff]
    %v1734 = vld [vmem:[#allocation7 + $0x20] sm:$0xf]
    %v1735 = vld [vmem:[#allocation7 + $0x24] sm:$0xff]
    %v1736 = vld [vmem:[#allocation7 + $0x2c] sm:$0xf]
    %v1737 = vld [vmem:[#allocation7 + $0x30] sm:$0xff]
    %v1738 = vld [vmem:[#allocation7 + $0x38] sm:$0xf]
    %v1739 = vld [vmem:[#allocation7 + $0x3c] sm:$0xff]
    %v1740 = vld [vmem:[#allocation7 + $0x44] sm:$0xf]
    %v1741 = vld [vmem:[#allocation7 + $0x48] sm:$0xff]
    %v1742 = vld [vmem:[#allocation7 + $0x50] sm:$0xf]
    %v1743 = vld [vmem:[#allocation7 + $0x54] sm:$0xff]
    %v1744 = vld [vmem:[#allocation7 + $0x5c] sm:$0xf]
    %v1745 = vld [vmem:[#allocation7 + $0x60] sm:$0xff]
    %v1746 = vld [vmem:[#allocation7 + $0x68] sm:$0xf]
    %v1747 = vld [vmem:[#allocation7 + $0x6c] sm:$0xff]
    %v1748 = vld [vmem:[#allocation7 + $0x74] sm:$0xf]
    %v1749 = vld [vmem:[#allocation7 + $0x78] sm:$0xff]
    %v1750 = vld [vmem:[#allocation7 + $0x80] sm:$0xf]
    %v1751 = vld [vmem:[#allocation7 + $0x84] sm:$0xff]
    %v1752 = vld [vmem:[#allocation7 + $0x8c] sm:$0xf]
    %v1753 = vld [vmem:[#allocation7 + $0x90] sm:$0xff]
    %v1754 = vld [vmem:[#allocation7 + $0x98] sm:$0xf]
    %v1755 = vld [vmem:[#allocation7 + $0x9c] sm:$0xff]
    %v1756 = vld [vmem:[#allocation7 + $0xa4] sm:$0xf]
    %v1757 = vld [vmem:[#allocation7 + $0xa8] sm:$0xff]
    %v1758 = vld [vmem:[#allocation7 + $0xb0] sm:$0xf]
    %v1759 = vld [vmem:[#allocation7 + $0xb4] sm:$0xff]
    %v1760 = vld [vmem:[#allocation7 + $0xbc] sm:$0xf]
    %v1761 = vld [vmem:[%s8] sm:$0x1]
    %v1763 = vperm.slane %v1761, 0
    %v1797 = vunpack.c.l.b16 %v1729
    %v1798 = vunpack.c.h.b16 %v1729
    %v1799 = vunpack.c.l.b16 %v1730
    %v1800 = vunpack.c.l.b16 %v1731
    %v1801 = vunpack.c.h.b16 %v1731
    %v1802 = vunpack.c.l.b16 %v1732
    %v1803 = vunpack.c.l.b16 %v1733
    %v1804 = vunpack.c.h.b16 %v1733
    %v1805 = vunpack.c.l.b16 %v1734
    %v1806 = vunpack.c.l.b16 %v1735
    %v1807 = vunpack.c.h.b16 %v1735
    %v1808 = vunpack.c.l.b16 %v1736
    %v1809 = vunpack.c.l.b16 %v1737
    %v1810 = vunpack.c.h.b16 %v1737
    %v1811 = vunpack.c.l.b16 %v1738
    %v1812 = vunpack.c.l.b16 %v1739
    %v1813 = vunpack.c.h.b16 %v1739
    %v1814 = vunpack.c.l.b16 %v1740
    %v1815 = vunpack.c.l.b16 %v1741
    %v1816 = vunpack.c.h.b16 %v1741
    %v1817 = vunpack.c.l.b16 %v1742
    %v1818 = vunpack.c.l.b16 %v1743
    %v1819 = vunpack.c.h.b16 %v1743
    %v1820 = vunpack.c.l.b16 %v1744
    %v1821 = vunpack.c.l.b16 %v1745
    %v1822 = vunpack.c.h.b16 %v1745
    %v1823 = vunpack.c.l.b16 %v1746
    %v1824 = vunpack.c.l.b16 %v1747
    %v1825 = vunpack.c.h.b16 %v1747
    %v1826 = vunpack.c.l.b16 %v1748
    %v1827 = vunpack.c.l.b16 %v1749
    %v1828 = vunpack.c.h.b16 %v1749
    %v1829 = vunpack.c.l.b16 %v1750
    %v1830 = vunpack.c.l.b16 %v1751
    %v1831 = vunpack.c.h.b16 %v1751
    %v1832 = vunpack.c.l.b16 %v1752
    %v1833 = vunpack.c.l.b16 %v1753
    %v1834 = vunpack.c.h.b16 %v1753
    %v1835 = vunpack.c.l.b16 %v1754
    %v1836 = vunpack.c.l.b16 %v1755
    %v1837 = vunpack.c.h.b16 %v1755
    %v1838 = vunpack.c.l.b16 %v1756
    %v1839 = vunpack.c.l.b16 %v1757
    %v1840 = vunpack.c.h.b16 %v1757
    %v1841 = vunpack.c.l.b16 %v1758
    %v1842 = vunpack.c.l.b16 %v1759
    %v1843 = vunpack.c.h.b16 %v1759
    %v1844 = vunpack.c.l.b16 %v1760
    %v1845 = vpack.c.b16 %v1800, %v1797
    %v1846 = vpack.c.b16 %v1801, %v1798
    %v1847 = vpack.c.b16 %v1802, %v1799
    %v1848 = vpack.c.b16 %v1806, %v1803
    %v1849 = vpack.c.b16 %v1807, %v1804
    %v1850 = vpack.c.b16 %v1808, %v1805
    %v1851 = vpack.c.b16 %v1812, %v1809
    %v1852 = vpack.c.b16 %v1813, %v1810
    %v1853 = vpack.c.b16 %v1814, %v1811
    %v1854 = vpack.c.b16 %v1818, %v1815
    %v1855 = vpack.c.b16 %v1819, %v1816
    %v1856 = vpack.c.b16 %v1820, %v1817
    %v1857 = vpack.c.b16 %v1824, %v1821
    %v1858 = vpack.c.b16 %v1825, %v1822
    %v1859 = vpack.c.b16 %v1826, %v1823
    %v1860 = vpack.c.b16 %v1830, %v1827
    %v1861 = vpack.c.b16 %v1831, %v1828
    %v1862 = vpack.c.b16 %v1832, %v1829
    %v1863 = vpack.c.b16 %v1836, %v1833
    %v1864 = vpack.c.b16 %v1837, %v1834
    %v1865 = vpack.c.b16 %v1838, %v1835
    %v1866 = vpack.c.b16 %v1842, %v1839
    %v1867 = vpack.c.b16 %v1843, %v1840
    %v1868 = vpack.c.b16 %v1844, %v1841
    %1893 = vmatpush.bf16.msra.mxu0 %v1866
    %1894 = vmatpush.bf16.msra.mxu0 %v1863
    %1895 = vmatpush.bf16.msra.mxu0 %v1860
    %1896 = vmatpush.bf16.msra.mxu0 %v1857
    %1897 = vmatpush.bf16.msra.mxu0 %v1854
    %1898 = vmatpush.bf16.msra.mxu0 %v1851
    %1899 = vmatpush.bf16.msra.mxu0 %v1848
    %1900 = vmatpush.bf16.msra.mxu0 %v1845
    %1901 = vmatmul.bf16.gmra.mxu0 0
    %v1902 = vpop.f32.mrf.mxu0
    %v1903 = vadd.f32 0.0, %v1902
    %v1904 = vpop.f32.mrf.mxu0
    %v1905 = vadd.f32 0.0, %v1904
    %1906 = vdwg.mxu0
    %1907 = vmatpush.bf16.msra.mxu0 %v1867
    %1908 = vmatpush.bf16.msra.mxu0 %v1864
    %1909 = vmatpush.bf16.msra.mxu0 %v1861
    %1910 = vmatpush.bf16.msra.mxu0 %v1858
    %1911 = vmatpush.bf16.msra.mxu0 %v1855
    %1912 = vmatpush.bf16.msra.mxu0 %v1852
    %1913 = vmatpush.bf16.msra.mxu0 %v1849
    %1914 = vmatpush.bf16.msra.mxu0 %v1846
    %1915 = vmatmul.bf16.gmra.mxu0 0
    %v1916 = vpop.f32.mrf.mxu0
    %v1917 = vadd.f32 0.0, %v1916
    %v1918 = vpop.f32.mrf.mxu0
    %v1919 = vadd.f32 0.0, %v1918
    %1920 = vdwg.mxu0
    %1921 = vmatpush.bf16.msra.mxu0 %v1868
    %1922 = vmatpush.bf16.msra.mxu0 %v1865
    %1923 = vmatpush.bf16.msra.mxu0 %v1862
    %1924 = vmatpush.bf16.msra.mxu0 %v1859
    %1925 = vmatpush.bf16.msra.mxu0 %v1856
    %1926 = vmatpush.bf16.msra.mxu0 %v1853
    %1927 = vmatpush.bf16.msra.mxu0 %v1850
    %1928 = vmatpush.bf16.msra.mxu0 %v1847
    %1929 = vmatmul.bf16.gmra.mxu0 0
    %v1930 = vpop.f32.mrf.mxu0
    %v1931 = vadd.f32 0.0, %v1930
    %v1932 = vpop.f32.mrf.mxu0
    %v1933 = vadd.f32 0.0, %v1932
    %1934 = vdwg.mxu0
    %v1935 = vadd.f32 %v1682, %v1903
    %v1936 = vadd.f32 %v1684, %v1905
    %v1937 = vxor.u32 %v1935, 2147483648
    %v1938 = vxor.u32 %v1936, 2147483648
    %v1939 = vmul.f32 %v1937, 1.442695
    %v1940 = vpow.pop %v1939
    %v1941 = vmul.f32 %v1938, 1.442695
    %v1942 = vpow.pop %v1941
    %v1943 = vadd.f32 %v1940, 1.0
    %v1944 = vadd.f32 %v1942, 1.0
    %v1945 = vrcp.pop %v1943
    %v1946 = vmul.f32 %v1943, %v1945
    %v1947 = vsub.f32 1.0, %v1946
    %v1948 = vmul.f32 %v1945, %v1947
    %v1949 = vadd.f32 %v1945, %v1948
    %vm1950 = vweird.f32 %v1943
    %vm1951 = vweird.f32 %v1945
    %vm1952 = vmor %vm1950, %vm1951
    %v1953 = vsel %vm1952, %v1945, %v1949
    %v1954 = vand.u32 2147483647, %v1943
    %vm1955 = vcmp.eq.f32.partialorder %v1954, 8.507059e+37
    %v1956 = vand.u32 %v1943, 2147483648
    %v1957 = vor.u32 1.1754944e-38, %v1956
    %v1958 = vsel %vm1955, %v1957, %v1953
    %v1959 = vmul.f32 1.0, %v1958
    %v1960 = vrcp.pop %v1944
    %v1961 = vmul.f32 %v1944, %v1960
    %v1962 = vsub.f32 1.0, %v1961
    %v1963 = vmul.f32 %v1960, %v1962
    %v1964 = vadd.f32 %v1960, %v1963
    %vm1965 = vweird.f32 %v1944
    %vm1966 = vweird.f32 %v1960
    %vm1967 = vmor %vm1965, %vm1966
    %v1968 = vsel %vm1967, %v1960, %v1964
    %v1969 = vand.u32 2147483647, %v1944
    %vm1970 = vcmp.eq.f32.partialorder %v1969, 8.507059e+37
    %v1971 = vand.u32 %v1944, 2147483648
    %v1972 = vor.u32 1.1754944e-38, %v1971
    %v1973 = vsel %vm1970, %v1972, %v1968
    %v1974 = vmul.f32 1.0, %v1973
    %v1975 = vadd.f32 %v1701, %v1917
    %v1976 = vadd.f32 %v1703, %v1919
    %v1977 = vxor.u32 %v1975, 2147483648
    %v1978 = vxor.u32 %v1976, 2147483648
    %v1979 = vmul.f32 %v1977, 1.442695
    %v1980 = vpow.pop %v1979
    %v1981 = vmul.f32 %v1978, 1.442695
    %v1982 = vpow.pop %v1981
    %v1983 = vadd.f32 %v1980, 1.0
    %v1984 = vadd.f32 %v1982, 1.0
    %v1985 = vrcp.pop %v1983
    %v1986 = vmul.f32 %v1983, %v1985
    %v1987 = vsub.f32 1.0, %v1986
    %v1988 = vmul.f32 %v1985, %v1987
    %v1989 = vadd.f32 %v1985, %v1988
    %vm1990 = vweird.f32 %v1983
    %vm1991 = vweird.f32 %v1985
    %vm1992 = vmor %vm1990, %vm1991
    %v1993 = vsel %vm1992, %v1985, %v1989
    %v1994 = vand.u32 2147483647, %v1983
    %vm1995 = vcmp.eq.f32.partialorder %v1994, 8.507059e+37
    %v1996 = vand.u32 %v1983, 2147483648
    %v1997 = vor.u32 1.1754944e-38, %v1996
    %v1998 = vsel %vm1995, %v1997, %v1993
    %v1999 = vmul.f32 1.0, %v1998
    %v2000 = vrcp.pop %v1984
    %v2001 = vmul.f32 %v1984, %v2000
    %v2002 = vsub.f32 1.0, %v2001
    %v2003 = vmul.f32 %v2000, %v2002
    %v2004 = vadd.f32 %v2000, %v2003
    %vm2005 = vweird.f32 %v1984
    %vm2006 = vweird.f32 %v2000
    %vm2007 = vmor %vm2005, %vm2006
    %v2008 = vsel %vm2007, %v2000, %v2004
    %v2009 = vand.u32 2147483647, %v1984
    %vm2010 = vcmp.eq.f32.partialorder %v2009, 8.507059e+37
    %v2011 = vand.u32 %v1984, 2147483648
    %v2012 = vor.u32 1.1754944e-38, %v2011
    %v2013 = vsel %vm2010, %v2012, %v2008
    %v2014 = vmul.f32 1.0, %v2013
    %v2015 = vadd.f32 %v1931, %v1763
    %v2016 = vadd.f32 %v1933, %v1763
    %v2017 = vmul.f32 %v1959, %v2015
    %v2018 = vmul.f32 %v1974, %v2016
    %v2019 = vadd.f32 %v1720, %v2017
    %v2020 = vadd.f32 %v1722, %v2018
    %v2021 = vtanh.pop %v2019
    %v2022 = vtanh.pop %v2020
    %v2023 = vsub.f32 1.0, %v1999
    %v2024 = vsub.f32 1.0, %v2014
    %v2025 = vmul.f32 %v2023, %v2021
    %v2026 = vmul.f32 %v2024, %v2022
    %v2027 = vmul.f32 %v1999, 0.0
    %v2028 = vmul.f32 %v2014, 0.0
    %v2029 = vadd.f32 %v2025, %v2027
    %v2030 = vadd.f32 %v2026, %v2028
    %v2031 = vpack.c.bf16 %v2030, %v2029
    %2032 = vmatpush.bf16.msra.mxu0 %v1866
    %2033 = vmatpush.bf16.msra.mxu0 %v1863
    %2034 = vmatpush.bf16.msra.mxu0 %v1860
    %2035 = vmatpush.bf16.msra.mxu0 %v1857
    %2036 = vmatpush.bf16.msra.mxu0 %v1854
    %2037 = vmatpush.bf16.msra.mxu0 %v1851
    %2038 = vmatpush.bf16.msra.mxu0 %v1848
    %2039 = vmatpush.bf16.msra.mxu0 %v1845
    %2040 = vmatmul.bf16.gmra.mxu0 %v2031
    %v2041 = vpop.f32.mrf.mxu0
    %v2042 = vadd.f32 0.0, %v2041
    %v2043 = vpop.f32.mrf.mxu0
    %v2044 = vadd.f32 0.0, %v2043
    %2045 = vdwg.mxu0
    %2046 = vmatpush.bf16.msra.mxu0 %v1867
    %2047 = vmatpush.bf16.msra.mxu0 %v1864
    %2048 = vmatpush.bf16.msra.mxu0 %v1861
    %2049 = vmatpush.bf16.msra.mxu0 %v1858
    %2050 = vmatpush.bf16.msra.mxu0 %v1855
    %2051 = vmatpush.bf16.msra.mxu0 %v1852
    %2052 = vmatpush.bf16.msra.mxu0 %v1849
    %2053 = vmatpush.bf16.msra.mxu0 %v1846
    %2054 = vmatmul.bf16.gmra.mxu0 %v2031
    %v2055 = vpop.f32.mrf.mxu0
    %v2056 = vadd.f32 0.0, %v2055
    %v2057 = vpop.f32.mrf.mxu0
    %v2058 = vadd.f32 0.0, %v2057
    %2059 = vdwg.mxu0
    %2060 = vmatpush.bf16.msra.mxu0 %v1868
    %2061 = vmatpush.bf16.msra.mxu0 %v1865
    %2062 = vmatpush.bf16.msra.mxu0 %v1862
    %2063 = vmatpush.bf16.msra.mxu0 %v1859
    %2064 = vmatpush.bf16.msra.mxu0 %v1856
    %2065 = vmatpush.bf16.msra.mxu0 %v1853
    %2066 = vmatpush.bf16.msra.mxu0 %v1850
    %2067 = vmatpush.bf16.msra.mxu0 %v1847
    %2068 = vmatmul.bf16.gmra.mxu0 %v2031
    %v2069 = vpop.f32.mrf.mxu0
    %v2070 = vadd.f32 0.0, %v2069
    %v2071 = vpop.f32.mrf.mxu0
    %v2072 = vadd.f32 0.0, %v2071
    %2073 = vdwg.mxu0
    %v2074 = vadd.f32 %v1687, %v2042
    %v2075 = vadd.f32 %v1689, %v2044
    %v2076 = vxor.u32 %v2074, 2147483648
    %v2077 = vxor.u32 %v2075, 2147483648
    %v2078 = vmul.f32 %v2076, 1.442695
    %v2079 = vpow.pop %v2078
    %v2080 = vmul.f32 %v2077, 1.442695
    %v2081 = vpow.pop %v2080
    %v2082 = vadd.f32 %v2079, 1.0
    %v2083 = vadd.f32 %v2081, 1.0
    %v2084 = vrcp.pop %v2082
    %v2085 = vmul.f32 %v2082, %v2084
    %v2086 = vsub.f32 1.0, %v2085
    %v2087 = vmul.f32 %v2084, %v2086
    %v2088 = vadd.f32 %v2084, %v2087
    %vm2089 = vweird.f32 %v2082
    %vm2090 = vweird.f32 %v2084
    %vm2091 = vmor %vm2089, %vm2090
    %v2092 = vsel %vm2091, %v2084, %v2088
    %v2093 = vand.u32 2147483647, %v2082
    %vm2094 = vcmp.eq.f32.partialorder %v2093, 8.507059e+37
    %v2095 = vand.u32 %v2082, 2147483648
    %v2096 = vor.u32 1.1754944e-38, %v2095
    %v2097 = vsel %vm2094, %v2096, %v2092
    %v2098 = vmul.f32 1.0, %v2097
    %v2099 = vrcp.pop %v2083
    %v2100 = vmul.f32 %v2083, %v2099
    %v2101 = vsub.f32 1.0, %v2100
    %v2102 = vmul.f32 %v2099, %v2101
    %v2103 = vadd.f32 %v2099, %v2102
    %vm2104 = vweird.f32 %v2083
    %vm2105 = vweird.f32 %v2099
    %vm2106 = vmor %vm2104, %vm2105
    %v2107 = vsel %vm2106, %v2099, %v2103
    %v2108 = vand.u32 2147483647, %v2083
    %vm2109 = vcmp.eq.f32.partialorder %v2108, 8.507059e+37
    %v2110 = vand.u32 %v2083, 2147483648
    %v2111 = vor.u32 1.1754944e-38, %v2110
    %v2112 = vsel %vm2109, %v2111, %v2107
    %v2113 = vmul.f32 1.0, %v2112
    %v2114 = vadd.f32 %v1706, %v2056
    %v2115 = vadd.f32 %v1708, %v2058
    %v2116 = vxor.u32 %v2114, 2147483648
    %v2117 = vxor.u32 %v2115, 2147483648
    %v2118 = vmul.f32 %v2116, 1.442695
    %v2119 = vpow.pop %v2118
    %v2120 = vmul.f32 %v2117, 1.442695
    %v2121 = vpow.pop %v2120
    %v2122 = vadd.f32 %v2119, 1.0
    %v2123 = vadd.f32 %v2121, 1.0
    %v2124 = vrcp.pop %v2122
    %v2125 = vmul.f32 %v2122, %v2124
    %v2126 = vsub.f32 1.0, %v2125
    %v2127 = vmul.f32 %v2124, %v2126
    %v2128 = vadd.f32 %v2124, %v2127
    %vm2129 = vweird.f32 %v2122
    %vm2130 = vweird.f32 %v2124
    %vm2131 = vmor %vm2129, %vm2130
    %v2132 = vsel %vm2131, %v2124, %v2128
    %v2133 = vand.u32 2147483647, %v2122
    %vm2134 = vcmp.eq.f32.partialorder %v2133, 8.507059e+37
    %v2135 = vand.u32 %v2122, 2147483648
    %v2136 = vor.u32 1.1754944e-38, %v2135
    %v2137 = vsel %vm2134, %v2136, %v2132
    %v2138 = vmul.f32 1.0, %v2137
    %v2139 = vrcp.pop %v2123
    %v2140 = vmul.f32 %v2123, %v2139
    %v2141 = vsub.f32 1.0, %v2140
    %v2142 = vmul.f32 %v2139, %v2141
    %v2143 = vadd.f32 %v2139, %v2142
    %vm2144 = vweird.f32 %v2123
    %vm2145 = vweird.f32 %v2139
    %vm2146 = vmor %vm2144, %vm2145
    %v2147 = vsel %vm2146, %v2139, %v2143
    %v2148 = vand.u32 2147483647, %v2123
    %vm2149 = vcmp.eq.f32.partialorder %v2148, 8.507059e+37
    %v2150 = vand.u32 %v2123, 2147483648
    %v2151 = vor.u32 1.1754944e-38, %v2150
    %v2152 = vsel %vm2149, %v2151, %v2147
    %v2153 = vmul.f32 1.0, %v2152
    %v2154 = vadd.f32 %v2070, %v1763
    %v2155 = vadd.f32 %v2072, %v1763
    %v2156 = vmul.f32 %v2098, %v2154
    %v2157 = vmul.f32 %v2113, %v2155
    %v2158 = vadd.f32 %v1725, %v2156
    %v2159 = vadd.f32 %v1727, %v2157
    %v2160 = vtanh.pop %v2158
    %v2161 = vtanh.pop %v2159
    %v2162 = vsub.f32 1.0, %v2138
    %v2163 = vsub.f32 1.0, %v2153
    %v2164 = vmul.f32 %v2162, %v2160
    %v2165 = vmul.f32 %v2163, %v2161
    %v2166 = vmul.f32 %v2138, %v2029
    %v2167 = vmul.f32 %v2153, %v2030
    %v2168 = vadd.f32 %v2164, %v2166
    %v2169 = vadd.f32 %v2165, %v2167
    %v2170 = vpack.c.bf16 %v2169, %v2168
    %v2171 = vld [vmem:[%s9] sm:$0xf]
    %v2172 = vld [vmem:[%s9 + $0x4] sm:$0xf]
    %v2173 = vld [vmem:[%s9 + $0x8] sm:$0xf]
    %v2174 = vld [vmem:[%s9 + $0xc] sm:$0xf]
    %v2175 = vld [vmem:[%s9 + $0x10] sm:$0xf]
    %v2176 = vld [vmem:[%s9 + $0x14] sm:$0xf]
    %v2177 = vld [vmem:[%s9 + $0x18] sm:$0xf]
    %v2178 = vld [vmem:[%s9 + $0x1c] sm:$0xf]
    %v2179 = vld [vmem:[%s9 + $0x20] sm:$0xf]
    %v2180 = vld [vmem:[%s9 + $0x24] sm:$0xf]
    %v2181 = vld [vmem:[%s9 + $0x28] sm:$0xf]
    %v2182 = vld [vmem:[%s9 + $0x2c] sm:$0xf]
    %v2183 = vld [vmem:[%s9 + $0x30] sm:$0xf]
    %v2184 = vld [vmem:[%s9 + $0x34] sm:$0xf]
    %v2185 = vld [vmem:[%s9 + $0x38] sm:$0xf]
    %v2186 = vld [vmem:[%s9 + $0x3c] sm:$0xf]
    %v2187 = vld [vmem:[%s10] sm:$0x1]
    %v2189 = vperm.slane %v2187, 0
    %v2207 = vunpack.c.l.b16 %v2171
    %v2208 = vunpack.c.l.b16 %v2172
    %v2209 = vunpack.c.l.b16 %v2173
    %v2210 = vunpack.c.l.b16 %v2174
    %v2211 = vunpack.c.l.b16 %v2175
    %v2212 = vunpack.c.l.b16 %v2176
    %v2213 = vunpack.c.l.b16 %v2177
    %v2214 = vunpack.c.l.b16 %v2178
    %v2215 = vunpack.c.l.b16 %v2179
    %v2216 = vunpack.c.l.b16 %v2180
    %v2217 = vunpack.c.l.b16 %v2181
    %v2218 = vunpack.c.l.b16 %v2182
    %v2219 = vunpack.c.l.b16 %v2183
    %v2220 = vunpack.c.l.b16 %v2184
    %v2221 = vunpack.c.l.b16 %v2185
    %v2222 = vunpack.c.l.b16 %v2186
    %v2223 = vpack.c.b16 %v2208, %v2207
    %v2224 = vpack.c.b16 %v2210, %v2209
    %v2225 = vpack.c.b16 %v2212, %v2211
    %v2226 = vpack.c.b16 %v2214, %v2213
    %v2227 = vpack.c.b16 %v2216, %v2215
    %v2228 = vpack.c.b16 %v2218, %v2217
    %v2229 = vpack.c.b16 %v2220, %v2219
    %v2230 = vpack.c.b16 %v2222, %v2221
    %2239 = vmatpush.bf16.msra.mxu0 %v2230
    %2240 = vmatpush.bf16.msra.mxu0 %v2229
    %2241 = vmatpush.bf16.msra.mxu0 %v2228
    %2242 = vmatpush.bf16.msra.mxu0 %v2227
    %2243 = vmatpush.bf16.msra.mxu0 %v2226
    %2244 = vmatpush.bf16.msra.mxu0 %v2225
    %2245 = vmatpush.bf16.msra.mxu0 %v2224
    %2246 = vmatpush.bf16.msra.mxu0 %v2223
    %2247 = vmatmul.bf16.gmra.mxu0 %v2170
    %v2248 = vpop.f32.mrf.mxu0
    %v2249 = vadd.f32 %v2189, %v2248
    %v2250 = vpop.f32.mrf.mxu0
    %v2251 = vadd.f32 %v2189, %v2250
    %2252 = vdwg.mxu0
    %2253 = vst [vmem:[#allocation8] sm:$0xff] %v2249
    %2254 = vst [vmem:[#allocation8 + $0x8] sm:$0xff] %v2251
    // Predicated region
    $region58: #{tpu_custom_call.1} parent=1 // pred_check
      _
    $region59: #{tpu_custom_call.1} parent=1 // pred_check_branch
      %2256 = sbr.rel (0) target = $region61
    $region60: #{tpu_custom_call.1} parent=1 // pred_region
      %2258 = vsyncadd [#allocation4], 0
      %s2259 = sshll.u32 [#allocation8], 4
      %s2260 = int_to_ptr.vmem [resolvable:$true] %s2259
      %s2261 = sshll.u32 %s11, 4
      %s2262 = int_to_ptr.hbm [resolvable:$true] %s2261
      %2267 = dma.vmem_to_hbm [thread:$0]  %s2260, 256, %s2262, [#allocation4], 128, 128, 8
    $region61: #{tpu_custom_call.1} parent=1 // pred_fallthru
      _
    // Predicated region
    $region62: #{tpu_custom_call.1} parent=1 // pred_check
      _
    $region63: #{tpu_custom_call.1} parent=1 // pred_check_branch
      %2269 = sbr.rel (0) target = $region65
    $region64: #{tpu_custom_call.1} parent=1 // pred_region
      %2271 = dma.done [#allocation4], 256
    $region65: #{tpu_custom_call.1} parent=1 // pred_fallthru
      _
    %2272 = vsyncpa [#allocation3], 1
    %2273 = vsyncpa [#allocation6], 1
    %2274 = vsyncpa [#allocation4], 1

// kernel: tpu_custom_call.1
$region0: #{tpu_custom_call.1}
  #allocation0 [shape = 'u32[]', space=smem, size = 0x4, offset = 0x4, fixed_abs, tag = 'smem constant byte address 0x4 - core index']
  #allocation1 [shape = 'u32[72,128]{1,0:T(1,128)}', space=vmem, size = 0x9000, scoped, tag = 'internal scratch']
  %s0 = inlined_call_operand.vmem [shape: bf16[4,2,16,4], index: 0, kind: input, shape index: {}]
  %s1 = inlined_call_operand.vmem [shape: bf16[4,384], index: 1, kind: input, shape index: {}]
  %s2 = inlined_call_operand.hbm [shape: bf16[128,384], index: 2, kind: input, shape index: {}]
  %s3 = inlined_call_operand.vmem [shape: f32[1,384], index: 3, kind: input, shape index: {}]
  %s4 = inlined_call_operand.vmem [shape: f32[1,128], index: 4, kind: input, shape index: {}]
  %s5 = inlined_call_operand.hbm [shape: bf16[128,384], index: 5, kind: input, shape index: {}]
  %s6 = inlined_call_operand.hbm [shape: bf16[128,384], index: 6, kind: input, shape index: {}]
  %s7 = inlined_call_operand.vmem [shape: f32[1,384], index: 7, kind: input, shape index: {}]
  %s8 = inlined_call_operand.vmem [shape: f32[1,128], index: 8, kind: input, shape index: {}]
  %s9 = inlined_call_operand.vmem [shape: bf16[128,128], index: 9, kind: input, shape index: {}]
  %s10 = inlined_call_operand.vmem [shape: f32[1,128], index: 10, kind: input, shape index: {}]
  %s11 = inlined_call_operand.hbm [shape: f32[16,128], index: 11, kind: output, shape index: {}]
  %s12 = sld [smem:[#allocation0]]
  $region66: #{tpu_custom_call.1} parent=0
    _
  %s14 = ssub.s32 1, %s12
  %s15 = scalar_select 0, %s14, %s12
  $region1: #{tpu_custom_call.1} parent=0
    #allocation2 [shape = 'u8[98304]{0}', space=vmem, size = 0x18000, scoped, tag = 'input window, operand 2, single buffered']
    #allocation3 [shape = 's32[1]{0}', space=sflag, size = 0x4, scoped, tag = 'scoped memory for tpu_custom_call.1']
    #allocation4 [shape = 's32[1]{0}', space=sflag, size = 0x4, scoped, tag = 'scoped memory for tpu_custom_call.1']
    #allocation5 [shape = 'u8[98304]{0}', space=vmem, size = 0x18000, scoped, tag = 'input window, operand 5, single buffered']
    #allocation6 [shape = 's32[1]{0}', space=sflag, size = 0x4, scoped, tag = 'scoped memory for tpu_custom_call.1']
    #allocation7 [shape = 'u8[98304]{0}', space=vmem, size = 0x18000, scoped, tag = 'input window, operand 6, single buffered']
    #allocation8 [shape = 'u8[8192]{0}', space=vmem, size = 0x2000, scoped, tag = 'output window, operand 0, single buffered']
    %16 = vsyncpa [#allocation3], 0
    %17 = vsyncpa [#allocation6], 0
    %18 = vsyncpa [#allocation4], 0
    // Predicated region
    $region2: #{tpu_custom_call.1} parent=1 // pred_check
      _
    $region3: #{tpu_custom_call.1} parent=1 // pred_check_branch
      %20 = sbr.rel (0) target = $region5
    $region4: #{tpu_custom_call.1} parent=1 // pred_region
      _
    $region5: #{tpu_custom_call.1} parent=1 // pred_fallthru
      _
    // Predicated region
    $region6: #{tpu_custom_call.1} parent=1 // pred_check
      _
    $region7: #{tpu_custom_call.1} parent=1 // pred_check_branch
      %22 = sbr.rel (0) target = $region9
    $region8: #{tpu_custom_call.1} parent=1 // pred_region
      _
    $region9: #{tpu_custom_call.1} parent=1 // pred_fallthru
      _
    // Predicated region
    $region10: #{tpu_custom_call.1} parent=1 // pred_check
      _
    $region11: #{tpu_custom_call.1} parent=1 // pred_check_branch
      %24 = sbr.rel (0) target = $region13
    $region12: #{tpu_custom_call.1} parent=1 // pred_region
      %26 = vsyncadd [#allocation3], 0
      %s27 = sshll.u32 %s2, 4
      %s28 = int_to_ptr.hbm [resolvable:$true] %s27
      %s29 = sshll.u32 [#allocation2], 4
      %s30 = int_to_ptr.vmem [resolvable:$true] %s29
      %35 = dma.hbm_to_vmem [thread:$0]  %s28, 3072, %s30, [#allocation3], 192, 192, 12
    $region13: #{tpu_custom_call.1} parent=1 // pred_fallthru
      _
    // Predicated region
    $region14: #{tpu_custom_call.1} parent=1 // pred_check
      _
    $region15: #{tpu_custom_call.1} parent=1 // pred_check_branch
      %37 = sbr.rel (0) target = $region17
    $region16: #{tpu_custom_call.1} parent=1 // pred_region
      _
    $region17: #{tpu_custom_call.1} parent=1 // pred_fallthru
      _
    // Predicated region
    $region18: #{tpu_custom_call.1} parent=1 // pred_check
      _
    $region19: #{tpu_custom_call.1} parent=1 // pred_check_branch
      %39 = sbr.rel (0) target = $region21
    $region20: #{tpu_custom_call.1} parent=1 // pred_region
      _
    $region21: #{tpu_custom_call.1} parent=1 // pred_fallthru
      _
    // Predicated region
    $region22: #{tpu_custom_call.1} parent=1 // pred_check
      _
    $region23: #{tpu_custom_call.1} parent=1 // pred_check_branch
      %41 = sbr.rel (0) target = $region25
    $region24: #{tpu_custom_call.1} parent=1 // pred_region
      %43 = vsyncadd [#allocation6], 0
      %s44 = sshll.u32 %s5, 4
      %s45 = int_to_ptr.hbm [resolvable:$true] %s44
      %s46 = sshll.u32 [#allocation5], 4
      %s47 = int_to_ptr.vmem [resolvable:$true] %s46
      %52 = dma.hbm_to_vmem [thread:$0]  %s45, 3072, %s47, [#allocation6], 192, 192, 12
    $region25: #{tpu_custom_call.1} parent=1 // pred_fallthru
      _
    // Predicated region
    $region26: #{tpu_custom_call.1} parent=1 // pred_check
      _
    $region27: #{tpu_custom_call.1} parent=1 // pred_check_branch
      %54 = sbr.rel (0) target = $region29
    $region28: #{tpu_custom_call.1} parent=1 // pred_region
      %56 = vsyncadd [#allocation6], 0
      %s57 = sshll.u32 %s6, 4
      %s58 = int_to_ptr.hbm [resolvable:$true] %s57
      %s59 = sshll.u32 [#allocation7], 4
      %s60 = int_to_ptr.vmem [resolvable:$true] %s59
      %65 = dma.hbm_to_vmem [thread:$0]  %s58, 3072, %s60, [#allocation6], 192, 192, 12
    $region29: #{tpu_custom_call.1} parent=1 // pred_fallthru
      _
    // Predicated region
    $region30: #{tpu_custom_call.1} parent=1 // pred_check
      _
    $region31: #{tpu_custom_call.1} parent=1 // pred_check_branch
      %67 = sbr.rel (0) target = $region33
    $region32: #{tpu_custom_call.1} parent=1 // pred_region
      _
    $region33: #{tpu_custom_call.1} parent=1 // pred_fallthru
      _
    // Predicated region
    $region34: #{tpu_custom_call.1} parent=1 // pred_check
      _
    $region35: #{tpu_custom_call.1} parent=1 // pred_check_branch
      %69 = sbr.rel (0) target = $region37
    $region36: #{tpu_custom_call.1} parent=1 // pred_region
      _
    $region37: #{tpu_custom_call.1} parent=1 // pred_fallthru
      _
    // Predicated region
    $region38: #{tpu_custom_call.1} parent=1 // pred_check
      _
    $region39: #{tpu_custom_call.1} parent=1 // pred_check_branch
      %71 = sbr.rel (0) target = $region41
    $region40: #{tpu_custom_call.1} parent=1 // pred_region
      _
    $region41: #{tpu_custom_call.1} parent=1 // pred_fallthru
      _
    // Predicated region
    $region42: #{tpu_custom_call.1} parent=1 // pred_check
      _
    $region43: #{tpu_custom_call.1} parent=1 // pred_check_branch
      %73 = sbr.rel (0) target = $region45
    $region44: #{tpu_custom_call.1} parent=1 // pred_region
      _
    $region45: #{tpu_custom_call.1} parent=1 // pred_fallthru
      _
    // Predicated region
    $region46: #{tpu_custom_call.1} parent=1 // pred_check
      _
    $region47: #{tpu_custom_call.1} parent=1 // pred_check_branch
      %75 = sbr.rel (0) target = $region49
    $region48: #{tpu_custom_call.1} parent=1 // pred_region
      %77 = dma.done [#allocation3], 3072
    $region49: #{tpu_custom_call.1} parent=1 // pred_fallthru
      _
    // Predicated region
    $region50: #{tpu_custom_call.1} parent=1 // pred_check
      _
    $region51: #{tpu_custom_call.1} parent=1 // pred_check_branch
      %79 = sbr.rel (0) target = $region53
    $region52: #{tpu_custom_call.1} parent=1 // pred_region
      %81 = dma.done [#allocation6], 3072
    $region53: #{tpu_custom_call.1} parent=1 // pred_fallthru
      _
    // Predicated region
    $region54: #{tpu_custom_call.1} parent=1 // pred_check
      _
    $region55: #{tpu_custom_call.1} parent=1 // pred_check_branch
      %83 = sbr.rel (0) target = $region57
    $region56: #{tpu_custom_call.1} parent=1 // pred_region
      %85 = dma.done [#allocation6], 3072
    $region57: #{tpu_custom_call.1} parent=1 // pred_fallthru
      _
    %v87 = vld [vmem:[%s0] sm:$0xf]
    %v88 = vld [vmem:[%s0 + $0x4] sm:$0xf]
    %v89 = vld [vmem:[%s0 + $0x8] sm:$0xf]
    %v90 = vld [vmem:[%s0 + $0xc] sm:$0xf]
    %v91 = vld [vmem:[%s0 + $0x10] sm:$0xf]
    %v92 = vld [vmem:[%s0 + $0x14] sm:$0xf]
    %v93 = vld [vmem:[%s0 + $0x18] sm:$0xf]
    %v94 = vld [vmem:[%s0 + $0x1c] sm:$0xf]
    %v95 = vld [vmem:[%s0 + $0x20] sm:$0xf]
    %v96 = vld [vmem:[%s0 + $0x24] sm:$0xf]
    %v97 = vld [vmem:[%s0 + $0x28] sm:$0xf]
    %v98 = vld [vmem:[%s0 + $0x2c] sm:$0xf]
    %v99 = vld [vmem:[%s0 + $0x30] sm:$0xf]
    %v100 = vld [vmem:[%s0 + $0x34] sm:$0xf]
    %v101 = vld [vmem:[%s0 + $0x38] sm:$0xf]
    %v102 = vld [vmem:[%s0 + $0x3c] sm:$0xf]
    %v103 = vld [vmem:[%s1] sm:$0x3f]
    %v104 = vld [vmem:[%s3] sm:$0x7]
    %v106 = vperm.slane %v104, 0
    %v107 = vperm.slane %v104, 1
    %v108 = vperm.slane %v104, 2
    %v128 = vunpack.c.l.b16 %v87
    %v129 = vunpack.c.l.b16 %v88
    %v130 = vunpack.c.l.b16 %v89
    %v131 = vunpack.c.l.b16 %v90
    %v132 = vunpack.c.l.b16 %v91
    %v133 = vunpack.c.l.b16 %v92
    %v134 = vunpack.c.l.b16 %v93
    %v135 = vunpack.c.l.b16 %v94
    %v136 = vunpack.c.l.b16 %v95
    %v137 = vunpack.c.l.b16 %v96
    %v138 = vunpack.c.l.b16 %v97
    %v139 = vunpack.c.l.b16 %v98
    %v140 = vunpack.c.l.b16 %v99
    %v141 = vunpack.c.l.b16 %v100
    %v142 = vunpack.c.l.b16 %v101
    %v143 = vunpack.c.l.b16 %v102
    %v144 = vpack.c.b16 %v129, %v128
    %v145 = vpack.c.b16 %v131, %v130
    %v146 = vpack.c.b16 %v133, %v132
    %v147 = vpack.c.b16 %v135, %v134
    %v148 = vpack.c.b16 %v137, %v136
    %v149 = vpack.c.b16 %v139, %v138
    %v150 = vpack.c.b16 %v141, %v140
    %v151 = vpack.c.b16 %v143, %v142
    %153 = vst [vmem:[#allocation1] ss:$4 sm:$0xff] %v103
    %v154 = vld.sshfl [vmem:[#allocation1] sm:$0xff pattern:$0x73625140]
    %v155 = vld.sshfl [vmem:[#allocation1 + $0x8] sm:$0xff pattern:$0x73625140]
    %v156 = vld.sshfl [vmem:[#allocation1 + $0x10] sm:$0xff pattern:$0x73625140]
    %vm157 = vcmask 31744
    %v159 = vsel %vm157, %v144, 0
    %v162 = vsel %vm157, %v145, 0
    %v165 = vsel %vm157, %v146, 0
    %v168 = vsel %vm157, %v147, 0
    %v171 = vsel %vm157, %v148, 0
    %v174 = vsel %vm157, %v149, 0
    %v177 = vsel %vm157, %v150, 0
    %v180 = vsel %vm157, %v151, 0
    %vm182 = vcmask 1041408
    %v183 = vsel %vm182, %v154, 0
    %v185 = vsel %vm182, %v155, 0
    %v187 = vsel %vm182, %v156, 0
    %189 = vmatpush.bf16.msra.mxu0 0
    %190 = vmatpush.bf16.msra.mxu0 0
    %191 = vmatpush.bf16.msra.mxu0 0
    %192 = vmatpush.bf16.msra.mxu0 0
    %193 = vmatpush.bf16.msra.mxu0 0
    %194 = vmatpush.bf16.msra.mxu0 0
    %195 = vmatpush.bf16.msra.mxu0 0
    %196 = vmatpush.bf16.msra.mxu0 %v183
    %197 = vmatmul.bf16.gmra.mxu0 %v159
    %v198 = vpop.f32.mrf.mxu0
    %v199 = vadd.f32 %v106, %v198
    %v200 = vpop.f32.mrf.mxu0
    %v201 = vadd.f32 %v106, %v200
    %202 = vmatmul.bf16.gmra.mxu0 %v162
    %v203 = vpop.f32.mrf.mxu0
    %v204 = vadd.f32 %v106, %v203
    %v205 = vpop.f32.mrf.mxu0
    %v206 = vadd.f32 %v106, %v205
    %207 = vmatmul.bf16.gmra.mxu0 %v165
    %v208 = vpop.f32.mrf.mxu0
    %v209 = vadd.f32 %v106, %v208
    %v210 = vpop.f32.mrf.mxu0
    %v211 = vadd.f32 %v106, %v210
    %212 = vmatmul.bf16.gmra.mxu0 %v168
    %v213 = vpop.f32.mrf.mxu0
    %v214 = vadd.f32 %v106, %v213
    %v215 = vpop.f32.mrf.mxu0
    %v216 = vadd.f32 %v106, %v215
    %217 = vmatmul.bf16.gmra.mxu0 %v171
    %v218 = vpop.f32.mrf.mxu0
    %v219 = vadd.f32 %v106, %v218
    %v220 = vpop.f32.mrf.mxu0
    %v221 = vadd.f32 %v106, %v220
    %222 = vmatmul.bf16.gmra.mxu0 %v174
    %v223 = vpop.f32.mrf.mxu0
    %v224 = vadd.f32 %v106, %v223
    %v225 = vpop.f32.mrf.mxu0
    %v226 = vadd.f32 %v106, %v225
    %227 = vmatmul.bf16.gmra.mxu0 %v177
    %v228 = vpop.f32.mrf.mxu0
    %v229 = vadd.f32 %v106, %v228
    %v230 = vpop.f32.mrf.mxu0
    %v231 = vadd.f32 %v106, %v230
    %232 = vmatmul.bf16.gmra.mxu0 %v180
    %v233 = vpop.f32.mrf.mxu0
    %v234 = vadd.f32 %v106, %v233
    %v235 = vpop.f32.mrf.mxu0
    %v236 = vadd.f32 %v106, %v235
    %237 = vdwg.mxu0
    %238 = vmatpush.bf16.msra.mxu0 0
    %239 = vmatpush.bf16.msra.mxu0 0
    %240 = vmatpush.bf16.msra.mxu0 0
    %241 = vmatpush.bf16.msra.mxu0 0
    %242 = vmatpush.bf16.msra.mxu0 0
    %243 = vmatpush.bf16.msra.mxu0 0
    %244 = vmatpush.bf16.msra.mxu0 0
    %245 = vmatpush.bf16.msra.mxu0 %v185
    %246 = vmatmul.bf16.gmra.mxu0 %v159
    %v247 = vpop.f32.mrf.mxu0
    %v248 = vadd.f32 %v107, %v247
    %v249 = vpop.f32.mrf.mxu0
    %v250 = vadd.f32 %v107, %v249
    %251 = vmatmul.bf16.gmra.mxu0 %v162
    %v252 = vpop.f32.mrf.mxu0
    %v253 = vadd.f32 %v107, %v252
    %v254 = vpop.f32.mrf.mxu0
    %v255 = vadd.f32 %v107, %v254
    %256 = vmatmul.bf16.gmra.mxu0 %v165
    %v257 = vpop.f32.mrf.mxu0
    %v258 = vadd.f32 %v107, %v257
    %v259 = vpop.f32.mrf.mxu0
    %v260 = vadd.f32 %v107, %v259
    %261 = vmatmul.bf16.gmra.mxu0 %v168
    %v262 = vpop.f32.mrf.mxu0
    %v263 = vadd.f32 %v107, %v262
    %v264 = vpop.f32.mrf.mxu0
    %v265 = vadd.f32 %v107, %v264
    %266 = vmatmul.bf16.gmra.mxu0 %v171
    %v267 = vpop.f32.mrf.mxu0
    %v268 = vadd.f32 %v107, %v267
    %v269 = vpop.f32.mrf.mxu0
    %v270 = vadd.f32 %v107, %v269
    %271 = vmatmul.bf16.gmra.mxu0 %v174
    %v272 = vpop.f32.mrf.mxu0
    %v273 = vadd.f32 %v107, %v272
    %v274 = vpop.f32.mrf.mxu0
    %v275 = vadd.f32 %v107, %v274
    %276 = vmatmul.bf16.gmra.mxu0 %v177
    %v277 = vpop.f32.mrf.mxu0
    %v278 = vadd.f32 %v107, %v277
    %v279 = vpop.f32.mrf.mxu0
    %v280 = vadd.f32 %v107, %v279
    %281 = vmatmul.bf16.gmra.mxu0 %v180
    %v282 = vpop.f32.mrf.mxu0
    %v283 = vadd.f32 %v107, %v282
    %v284 = vpop.f32.mrf.mxu0
    %v285 = vadd.f32 %v107, %v284
    %286 = vdwg.mxu0
    %287 = vmatpush.bf16.msra.mxu0 0
    %288 = vmatpush.bf16.msra.mxu0 0
    %289 = vmatpush.bf16.msra.mxu0 0
    %290 = vmatpush.bf16.msra.mxu0 0
    %291 = vmatpush.bf16.msra.mxu0 0
    %292 = vmatpush.bf16.msra.mxu0 0
    %293 = vmatpush.bf16.msra.mxu0 0
    %294 = vmatpush.bf16.msra.mxu0 %v187
    %295 = vmatmul.bf16.gmra.mxu0 %v159
    %v296 = vpop.f32.mrf.mxu0
    %v297 = vadd.f32 %v108, %v296
    %v298 = vpop.f32.mrf.mxu0
    %v299 = vadd.f32 %v108, %v298
    %300 = vmatmul.bf16.gmra.mxu0 %v162
    %v301 = vpop.f32.mrf.mxu0
    %v302 = vadd.f32 %v108, %v301
    %v303 = vpop.f32.mrf.mxu0
    %v304 = vadd.f32 %v108, %v303
    %305 = vmatmul.bf16.gmra.mxu0 %v165
    %v306 = vpop.f32.mrf.mxu0
    %v307 = vadd.f32 %v108, %v306
    %v308 = vpop.f32.mrf.mxu0
    %v309 = vadd.f32 %v108, %v308
    %310 = vmatmul.bf16.gmra.mxu0 %v168
    %v311 = vpop.f32.mrf.mxu0
    %v312 = vadd.f32 %v108, %v311
    %v313 = vpop.f32.mrf.mxu0
    %v314 = vadd.f32 %v108, %v313
    %315 = vmatmul.bf16.gmra.mxu0 %v171
    %v316 = vpop.f32.mrf.mxu0
    %v317 = vadd.f32 %v108, %v316
    %v318 = vpop.f32.mrf.mxu0
    %v319 = vadd.f32 %v108, %v318
    %320 = vmatmul.bf16.gmra.mxu0 %v174
    %v321 = vpop.f32.mrf.mxu0
    %v322 = vadd.f32 %v108, %v321
    %v323 = vpop.f32.mrf.mxu0
    %v324 = vadd.f32 %v108, %v323
    %325 = vmatmul.bf16.gmra.mxu0 %v177
    %v326 = vpop.f32.mrf.mxu0
    %v327 = vadd.f32 %v108, %v326
    %v328 = vpop.f32.mrf.mxu0
    %v329 = vadd.f32 %v108, %v328
    %330 = vmatmul.bf16.gmra.mxu0 %v180
    %v331 = vpop.f32.mrf.mxu0
    %v332 = vadd.f32 %v108, %v331
    %v333 = vpop.f32.mrf.mxu0
    %v334 = vadd.f32 %v108, %v333
    %335 = vdwg.mxu0
    %v336 = vld [vmem:[#allocation2] sm:$0xff]
    %v337 = vld [vmem:[#allocation2 + $0x8] sm:$0xf]
    %v338 = vld [vmem:[#allocation2 + $0xc] sm:$0xff]
    %v339 = vld [vmem:[#allocation2 + $0x14] sm:$0xf]
    %v340 = vld [vmem:[#allocation2 + $0x18] sm:$0xff]
    %v341 = vld [vmem:[#allocation2 + $0x20] sm:$0xf]
    %v342 = vld [vmem:[#allocation2 + $0x24] sm:$0xff]
    %v343 = vld [vmem:[#allocation2 + $0x2c] sm:$0xf]
    %v344 = vld [vmem:[#allocation2 + $0x30] sm:$0xff]
    %v345 = vld [vmem:[#allocation2 + $0x38] sm:$0xf]
    %v346 = vld [vmem:[#allocation2 + $0x3c] sm:$0xff]
    %v347 = vld [vmem:[#allocation2 + $0x44] sm:$0xf]
    %v348 = vld [vmem:[#allocation2 + $0x48] sm:$0xff]
    %v349 = vld [vmem:[#allocation2 + $0x50] sm:$0xf]
    %v350 = vld [vmem:[#allocation2 + $0x54] sm:$0xff]
    %v351 = vld [vmem:[#allocation2 + $0x5c] sm:$0xf]
    %v352 = vld [vmem:[#allocation2 + $0x60] sm:$0xff]
    %v353 = vld [vmem:[#allocation2 + $0x68] sm:$0xf]
    %v354 = vld [vmem:[#allocation2 + $0x6c] sm:$0xff]
    %v355 = vld [vmem:[#allocation2 + $0x74] sm:$0xf]
    %v356 = vld [vmem:[#allocation2 + $0x78] sm:$0xff]
    %v357 = vld [vmem:[#allocation2 + $0x80] sm:$0xf]
    %v358 = vld [vmem:[#allocation2 + $0x84] sm:$0xff]
    %v359 = vld [vmem:[#allocation2 + $0x8c] sm:$0xf]
    %v360 = vld [vmem:[#allocation2 + $0x90] sm:$0xff]
    %v361 = vld [vmem:[#allocation2 + $0x98] sm:$0xf]
    %v362 = vld [vmem:[#allocation2 + $0x9c] sm:$0xff]
    %v363 = vld [vmem:[#allocation2 + $0xa4] sm:$0xf]
    %v364 = vld [vmem:[#allocation2 + $0xa8] sm:$0xff]
    %v365 = vld [vmem:[#allocation2 + $0xb0] sm:$0xf]
    %v366 = vld [vmem:[#allocation2 + $0xb4] sm:$0xff]
    %v367 = vld [vmem:[#allocation2 + $0xbc] sm:$0xf]
    %v368 = vld [vmem:[%s4] sm:$0x1]
    %v370 = vperm.slane %v368, 0
    %v404 = vunpack.c.l.b16 %v336
    %v405 = vunpack.c.h.b16 %v336
    %v406 = vunpack.c.l.b16 %v337
    %v407 = vunpack.c.l.b16 %v338
    %v408 = vunpack.c.h.b16 %v338
    %v409 = vunpack.c.l.b16 %v339
    %v410 = vunpack.c.l.b16 %v340
    %v411 = vunpack.c.h.b16 %v340
    %v412 = vunpack.c.l.b16 %v341
    %v413 = vunpack.c.l.b16 %v342
    %v414 = vunpack.c.h.b16 %v342
    %v415 = vunpack.c.l.b16 %v343
    %v416 = vunpack.c.l.b16 %v344
    %v417 = vunpack.c.h.b16 %v344
    %v418 = vunpack.c.l.b16 %v345
    %v419 = vunpack.c.l.b16 %v346
    %v420 = vunpack.c.h.b16 %v346
    %v421 = vunpack.c.l.b16 %v347
    %v422 = vunpack.c.l.b16 %v348
    %v423 = vunpack.c.h.b16 %v348
    %v424 = vunpack.c.l.b16 %v349
    %v425 = vunpack.c.l.b16 %v350
    %v426 = vunpack.c.h.b16 %v350
    %v427 = vunpack.c.l.b16 %v351
    %v428 = vunpack.c.l.b16 %v352
    %v429 = vunpack.c.h.b16 %v352
    %v430 = vunpack.c.l.b16 %v353
    %v431 = vunpack.c.l.b16 %v354
    %v432 = vunpack.c.h.b16 %v354
    %v433 = vunpack.c.l.b16 %v355
    %v434 = vunpack.c.l.b16 %v356
    %v435 = vunpack.c.h.b16 %v356
    %v436 = vunpack.c.l.b16 %v357
    %v437 = vunpack.c.l.b16 %v358
    %v438 = vunpack.c.h.b16 %v358
    %v439 = vunpack.c.l.b16 %v359
    %v440 = vunpack.c.l.b16 %v360
    %v441 = vunpack.c.h.b16 %v360
    %v442 = vunpack.c.l.b16 %v361
    %v443 = vunpack.c.l.b16 %v362
    %v444 = vunpack.c.h.b16 %v362
    %v445 = vunpack.c.l.b16 %v363
    %v446 = vunpack.c.l.b16 %v364
    %v447 = vunpack.c.h.b16 %v364
    %v448 = vunpack.c.l.b16 %v365
    %v449 = vunpack.c.l.b16 %v366
    %v450 = vunpack.c.h.b16 %v366
    %v451 = vunpack.c.l.b16 %v367
    %v452 = vpack.c.b16 %v407, %v404
    %v453 = vpack.c.b16 %v408, %v405
    %v454 = vpack.c.b16 %v409, %v406
    %v455 = vpack.c.b16 %v413, %v410
    %v456 = vpack.c.b16 %v414, %v411
    %v457 = vpack.c.b16 %v415, %v412
    %v458 = vpack.c.b16 %v419, %v416
    %v459 = vpack.c.b16 %v420, %v417
    %v460 = vpack.c.b16 %v421, %v418
    %v461 = vpack.c.b16 %v425, %v422
    %v462 = vpack.c.b16 %v426, %v423
    %v463 = vpack.c.b16 %v427, %v424
    %v464 = vpack.c.b16 %v431, %v428
    %v465 = vpack.c.b16 %v432, %v429
    %v466 = vpack.c.b16 %v433, %v430
    %v467 = vpack.c.b16 %v437, %v434
    %v468 = vpack.c.b16 %v438, %v435
    %v469 = vpack.c.b16 %v439, %v436
    %v470 = vpack.c.b16 %v443, %v440
    %v471 = vpack.c.b16 %v444, %v441
    %v472 = vpack.c.b16 %v445, %v442
    %v473 = vpack.c.b16 %v449, %v446
    %v474 = vpack.c.b16 %v450, %v447
    %v475 = vpack.c.b16 %v451, %v448
    %500 = vmatpush.bf16.msra.mxu0 %v473
    %501 = vmatpush.bf16.msra.mxu0 %v470
    %502 = vmatpush.bf16.msra.mxu0 %v467
    %503 = vmatpush.bf16.msra.mxu0 %v464
    %504 = vmatpush.bf16.msra.mxu0 %v461
    %505 = vmatpush.bf16.msra.mxu0 %v458
    %506 = vmatpush.bf16.msra.mxu0 %v455
    %507 = vmatpush.bf16.msra.mxu0 %v452
    %508 = vmatmul.bf16.gmra.mxu0 0
    %v509 = vpop.f32.mrf.mxu0
    %v510 = vadd.f32 0.0, %v509
    %v511 = vpop.f32.mrf.mxu0
    %v512 = vadd.f32 0.0, %v511
    %513 = vmatmul.bf16.gmra.mxu0 0
    %v514 = vpop.f32.mrf.mxu0
    %v515 = vadd.f32 0.0, %v514
    %v516 = vpop.f32.mrf.mxu0
    %v517 = vadd.f32 0.0, %v516
    %518 = vdwg.mxu0
    %519 = vmatpush.bf16.msra.mxu0 %v474
    %520 = vmatpush.bf16.msra.mxu0 %v471
    %521 = vmatpush.bf16.msra.mxu0 %v468
    %522 = vmatpush.bf16.msra.mxu0 %v465
    %523 = vmatpush.bf16.msra.mxu0 %v462
    %524 = vmatpush.bf16.msra.mxu0 %v459
    %525 = vmatpush.bf16.msra.mxu0 %v456
    %526 = vmatpush.bf16.msra.mxu0 %v453
    %527 = vmatmul.bf16.gmra.mxu0 0
    %v528 = vpop.f32.mrf.mxu0
    %v529 = vadd.f32 0.0, %v528
    %v530 = vpop.f32.mrf.mxu0
    %v531 = vadd.f32 0.0, %v530
    %532 = vmatmul.bf16.gmra.mxu0 0
    %v533 = vpop.f32.mrf.mxu0
    %v534 = vadd.f32 0.0, %v533
    %v535 = vpop.f32.mrf.mxu0
    %v536 = vadd.f32 0.0, %v535
    %537 = vdwg.mxu0
    %538 = vmatpush.bf16.msra.mxu0 %v475
    %539 = vmatpush.bf16.msra.mxu0 %v472
    %540 = vmatpush.bf16.msra.mxu0 %v469
    %541 = vmatpush.bf16.msra.mxu0 %v466
    %542 = vmatpush.bf16.msra.mxu0 %v463
    %543 = vmatpush.bf16.msra.mxu0 %v460
    %544 = vmatpush.bf16.msra.mxu0 %v457
    %545 = vmatpush.bf16.msra.mxu0 %v454
    %546 = vmatmul.bf16.gmra.mxu0 0
    %v547 = vpop.f32.mrf.mxu0
    %v548 = vadd.f32 0.0, %v547
    %v549 = vpop.f32.mrf.mxu0
    %v550 = vadd.f32 0.0, %v549
    %551 = vmatmul.bf16.gmra.mxu0 0
    %v552 = vpop.f32.mrf.mxu0
    %v553 = vadd.f32 0.0, %v552
    %v554 = vpop.f32.mrf.mxu0
    %v555 = vadd.f32 0.0, %v554
    %556 = vdwg.mxu0
    %v557 = vadd.f32 %v199, %v510
    %v558 = vadd.f32 %v201, %v512
    %v559 = vadd.f32 %v204, %v515
    %v560 = vadd.f32 %v206, %v517
    %v561 = vxor.u32 %v557, 2147483648
    %v562 = vxor.u32 %v558, 2147483648
    %v563 = vxor.u32 %v559, 2147483648
    %v564 = vxor.u32 %v560, 2147483648
    %v565 = vmul.f32 %v561, 1.442695
    %v566 = vpow.pop %v565
    %v567 = vmul.f32 %v562, 1.442695
    %v568 = vpow.pop %v567
    %v569 = vmul.f32 %v563, 1.442695
    %v570 = vpow.pop %v569
    %v571 = vmul.f32 %v564, 1.442695
    %v572 = vpow.pop %v571
    %v573 = vadd.f32 %v566, 1.0
    %v574 = vadd.f32 %v568, 1.0
    %v575 = vadd.f32 %v570, 1.0
    %v576 = vadd.f32 %v572, 1.0
    %v577 = vrcp.pop %v573
    %v578 = vmul.f32 %v573, %v577
    %v579 = vsub.f32 1.0, %v578
    %v580 = vmul.f32 %v577, %v579
    %v581 = vadd.f32 %v577, %v580
    %vm582 = vweird.f32 %v573
    %vm583 = vweird.f32 %v577
    %vm584 = vmor %vm582, %vm583
    %v585 = vsel %vm584, %v577, %v581
    %v586 = vand.u32 2147483647, %v573
    %vm587 = vcmp.eq.f32.partialorder %v586, 8.507059e+37
    %v588 = vand.u32 %v573, 2147483648
    %v589 = vor.u32 1.1754944e-38, %v588
    %v590 = vsel %vm587, %v589, %v585
    %v591 = vmul.f32 1.0, %v590
    %v592 = vrcp.pop %v574
    %v593 = vmul.f32 %v574, %v592
    %v594 = vsub.f32 1.0, %v593
    %v595 = vmul.f32 %v592, %v594
    %v596 = vadd.f32 %v592, %v595
    %vm597 = vweird.f32 %v574
    %vm598 = vweird.f32 %v592
    %vm599 = vmor %vm597, %vm598
    %v600 = vsel %vm599, %v592, %v596
    %v601 = vand.u32 2147483647, %v574
    %vm602 = vcmp.eq.f32.partialorder %v601, 8.507059e+37
    %v603 = vand.u32 %v574, 2147483648
    %v604 = vor.u32 1.1754944e-38, %v603
    %v605 = vsel %vm602, %v604, %v600
    %v606 = vmul.f32 1.0, %v605
    %v607 = vrcp.pop %v575
    %v608 = vmul.f32 %v575, %v607
    %v609 = vsub.f32 1.0, %v608
    %v610 = vmul.f32 %v607, %v609
    %v611 = vadd.f32 %v607, %v610
    %vm612 = vweird.f32 %v575
    %vm613 = vweird.f32 %v607
    %vm614 = vmor %vm612, %vm613
    %v615 = vsel %vm614, %v607, %v611
    %v616 = vand.u32 2147483647, %v575
    %vm617 = vcmp.eq.f32.partialorder %v616, 8.507059e+37
    %v618 = vand.u32 %v575, 2147483648
    %v619 = vor.u32 1.1754944e-38, %v618
    %v620 = vsel %vm617, %v619, %v615
    %v621 = vmul.f32 1.0, %v620
    %v622 = vrcp.pop %v576
    %v623 = vmul.f32 %v576, %v622
    %v624 = vsub.f32 1.0, %v623
    %v625 = vmul.f32 %v622, %v624
    %v626 = vadd.f32 %v622, %v625
    %vm627 = vweird.f32 %v576
    %vm628 = vweird.f32 %v622
    %vm629 = vmor %vm627, %vm628
    %v630 = vsel %vm629, %v622, %v626
    %v631 = vand.u32 2147483647, %v576
    %vm632 = vcmp.eq.f32.partialorder %v631, 8.507059e+37
    %v633 = vand.u32 %v576, 2147483648
    %v634 = vor.u32 1.1754944e-38, %v633
    %v635 = vsel %vm632, %v634, %v630
    %v636 = vmul.f32 1.0, %v635
    %v637 = vadd.f32 %v248, %v529
    %v638 = vadd.f32 %v250, %v531
    %v639 = vadd.f32 %v253, %v534
    %v640 = vadd.f32 %v255, %v536
    %v641 = vxor.u32 %v637, 2147483648
    %v642 = vxor.u32 %v638, 2147483648
    %v643 = vxor.u32 %v639, 2147483648
    %v644 = vxor.u32 %v640, 2147483648
    %v645 = vmul.f32 %v641, 1.442695
    %v646 = vpow.pop %v645
    %v647 = vmul.f32 %v642, 1.442695
    %v648 = vpow.pop %v647
    %v649 = vmul.f32 %v643, 1.442695
    %v650 = vpow.pop %v649
    %v651 = vmul.f32 %v644, 1.442695
    %v652 = vpow.pop %v651
    %v653 = vadd.f32 %v646, 1.0
    %v654 = vadd.f32 %v648, 1.0
    %v655 = vadd.f32 %v650, 1.0
    %v656 = vadd.f32 %v652, 1.0
    %v657 = vrcp.pop %v653
    %v658 = vmul.f32 %v653, %v657
    %v659 = vsub.f32 1.0, %v658
    %v660 = vmul.f32 %v657, %v659
    %v661 = vadd.f32 %v657, %v660
    %vm662 = vweird.f32 %v653
    %vm663 = vweird.f32 %v657
    %vm664 = vmor %vm662, %vm663
    %v665 = vsel %vm664, %v657, %v661
    %v666 = vand.u32 2147483647, %v653
    %vm667 = vcmp.eq.f32.partialorder %v666, 8.507059e+37
    %v668 = vand.u32 %v653, 2147483648
    %v669 = vor.u32 1.1754944e-38, %v668
    %v670 = vsel %vm667, %v669, %v665
    %v671 = vmul.f32 1.0, %v670
    %v672 = vrcp.pop %v654
    %v673 = vmul.f32 %v654, %v672
    %v674 = vsub.f32 1.0, %v673
    %v675 = vmul.f32 %v672, %v674
    %v676 = vadd.f32 %v672, %v675
    %vm677 = vweird.f32 %v654
    %vm678 = vweird.f32 %v672
    %vm679 = vmor %vm677, %vm678
    %v680 = vsel %vm679, %v672, %v676
    %v681 = vand.u32 2147483647, %v654
    %vm682 = vcmp.eq.f32.partialorder %v681, 8.507059e+37
    %v683 = vand.u32 %v654, 2147483648
    %v684 = vor.u32 1.1754944e-38, %v683
    %v685 = vsel %vm682, %v684, %v680
    %v686 = vmul.f32 1.0, %v685
    %v687 = vrcp.pop %v655
    %v688 = vmul.f32 %v655, %v687
    %v689 = vsub.f32 1.0, %v688
    %v690 = vmul.f32 %v687, %v689
    %v691 = vadd.f32 %v687, %v690
    %vm692 = vweird.f32 %v655
    %vm693 = vweird.f32 %v687
    %vm694 = vmor %vm692, %vm693
    %v695 = vsel %vm694, %v687, %v691
    %v696 = vand.u32 2147483647, %v655
    %vm697 = vcmp.eq.f32.partialorder %v696, 8.507059e+37
    %v698 = vand.u32 %v655, 2147483648
    %v699 = vor.u32 1.1754944e-38, %v698
    %v700 = vsel %vm697, %v699, %v695
    %v701 = vmul.f32 1.0, %v700
    %v702 = vrcp.pop %v656
    %v703 = vmul.f32 %v656, %v702
    %v704 = vsub.f32 1.0, %v703
    %v705 = vmul.f32 %v702, %v704
    %v706 = vadd.f32 %v702, %v705
    %vm707 = vweird.f32 %v656
    %vm708 = vweird.f32 %v702
    %vm709 = vmor %vm707, %vm708
    %v710 = vsel %vm709, %v702, %v706
    %v711 = vand.u32 2147483647, %v656
    %vm712 = vcmp.eq.f32.partialorder %v711, 8.507059e+37
    %v713 = vand.u32 %v656, 2147483648
    %v714 = vor.u32 1.1754944e-38, %v713
    %v715 = vsel %vm712, %v714, %v710
    %v716 = vmul.f32 1.0, %v715
    %v717 = vadd.f32 %v548, %v370
    %v718 = vadd.f32 %v550, %v370
    %v719 = vadd.f32 %v553, %v370
    %v720 = vadd.f32 %v555, %v370
    %v721 = vmul.f32 %v591, %v717
    %v722 = vmul.f32 %v606, %v718
    %v723 = vmul.f32 %v621, %v719
    %v724 = vmul.f32 %v636, %v720
    %v725 = vadd.f32 %v297, %v721
    %v726 = vadd.f32 %v299, %v722
    %v727 = vadd.f32 %v302, %v723
    %v728 = vadd.f32 %v304, %v724
    %v729 = vtanh.pop %v725
    %v730 = vtanh.pop %v726
    %v731 = vtanh.pop %v727
    %v732 = vtanh.pop %v728
    %v733 = vsub.f32 1.0, %v671
    %v734 = vsub.f32 1.0, %v686
    %v735 = vsub.f32 1.0, %v701
    %v736 = vsub.f32 1.0, %v716
    %v737 = vmul.f32 %v733, %v729
    %v738 = vmul.f32 %v734, %v730
    %v739 = vmul.f32 %v735, %v731
    %v740 = vmul.f32 %v736, %v732
    %v741 = vmul.f32 %v671, 0.0
    %v742 = vmul.f32 %v686, 0.0
    %v743 = vmul.f32 %v701, 0.0
    %v744 = vmul.f32 %v716, 0.0
    %v745 = vadd.f32 %v737, %v741
    %v746 = vadd.f32 %v738, %v742
    %v747 = vadd.f32 %v739, %v743
    %v748 = vadd.f32 %v740, %v744
    %v749 = vpack.c.bf16 %v746, %v745
    %v750 = vpack.c.bf16 %v748, %v747
    %751 = vmatpush.bf16.msra.mxu0 %v473
    %752 = vmatpush.bf16.msra.mxu0 %v470
    %753 = vmatpush.bf16.msra.mxu0 %v467
    %754 = vmatpush.bf16.msra.mxu0 %v464
    %755 = vmatpush.bf16.msra.mxu0 %v461
    %756 = vmatpush.bf16.msra.mxu0 %v458
    %757 = vmatpush.bf16.msra.mxu0 %v455
    %758 = vmatpush.bf16.msra.mxu0 %v452
    %759 = vmatmul.bf16.gmra.mxu0 %v749
    %v760 = vpop.f32.mrf.mxu0
    %v761 = vadd.f32 0.0, %v760
    %v762 = vpop.f32.mrf.mxu0
    %v763 = vadd.f32 0.0, %v762
    %764 = vmatmul.bf16.gmra.mxu0 %v750
    %v765 = vpop.f32.mrf.mxu0
    %v766 = vadd.f32 0.0, %v765
    %v767 = vpop.f32.mrf.mxu0
    %v768 = vadd.f32 0.0, %v767
    %769 = vdwg.mxu0
    %770 = vmatpush.bf16.msra.mxu0 %v474
    %771 = vmatpush.bf16.msra.mxu0 %v471
    %772 = vmatpush.bf16.msra.mxu0 %v468
    %773 = vmatpush.bf16.msra.mxu0 %v465
    %774 = vmatpush.bf16.msra.mxu0 %v462
    %775 = vmatpush.bf16.msra.mxu0 %v459
    %776 = vmatpush.bf16.msra.mxu0 %v456
    %777 = vmatpush.bf16.msra.mxu0 %v453
    %778 = vmatmul.bf16.gmra.mxu0 %v749
    %v779 = vpop.f32.mrf.mxu0
    %v780 = vadd.f32 0.0, %v779
    %v781 = vpop.f32.mrf.mxu0
    %v782 = vadd.f32 0.0, %v781
    %783 = vmatmul.bf16.gmra.mxu0 %v750
    %v784 = vpop.f32.mrf.mxu0
    %v785 = vadd.f32 0.0, %v784
    %v786 = vpop.f32.mrf.mxu0
    %v787 = vadd.f32 0.0, %v786
    %788 = vdwg.mxu0
    %789 = vmatpush.bf16.msra.mxu0 %v475
    %790 = vmatpush.bf16.msra.mxu0 %v472
    %791 = vmatpush.bf16.msra.mxu0 %v469
    %792 = vmatpush.bf16.msra.mxu0 %v466
    %793 = vmatpush.bf16.msra.mxu0 %v463
    %794 = vmatpush.bf16.msra.mxu0 %v460
    %795 = vmatpush.bf16.msra.mxu0 %v457
    %796 = vmatpush.bf16.msra.mxu0 %v454
    %797 = vmatmul.bf16.gmra.mxu0 %v749
    %v798 = vpop.f32.mrf.mxu0
    %v799 = vadd.f32 0.0, %v798
    %v800 = vpop.f32.mrf.mxu0
    %v801 = vadd.f32 0.0, %v800
    %802 = vmatmul.bf16.gmra.mxu0 %v750
    %v803 = vpop.f32.mrf.mxu0
    %v804 = vadd.f32 0.0, %v803
    %v805 = vpop.f32.mrf.mxu0
    %v806 = vadd.f32 0.0, %v805
    %807 = vdwg.mxu0
    %v808 = vadd.f32 %v209, %v761
    %v809 = vadd.f32 %v211, %v763
    %v810 = vadd.f32 %v214, %v766
    %v811 = vadd.f32 %v216, %v768
    %v812 = vxor.u32 %v808, 2147483648
    %v813 = vxor.u32 %v809, 2147483648
    %v814 = vxor.u32 %v810, 2147483648
    %v815 = vxor.u32 %v811, 2147483648
    %v816 = vmul.f32 %v812, 1.442695
    %v817 = vpow.pop %v816
    %v818 = vmul.f32 %v813, 1.442695
    %v819 = vpow.pop %v818
    %v820 = vmul.f32 %v814, 1.442695
    %v821 = vpow.pop %v820
    %v822 = vmul.f32 %v815, 1.442695
    %v823 = vpow.pop %v822
    %v824 = vadd.f32 %v817, 1.0
    %v825 = vadd.f32 %v819, 1.0
    %v826 = vadd.f32 %v821, 1.0
    %v827 = vadd.f32 %v823, 1.0
    %v828 = vrcp.pop %v824
    %v829 = vmul.f32 %v824, %v828
    %v830 = vsub.f32 1.0, %v829
    %v831 = vmul.f32 %v828, %v830
    %v832 = vadd.f32 %v828, %v831
    %vm833 = vweird.f32 %v824
    %vm834 = vweird.f32 %v828
    %vm835 = vmor %vm833, %vm834
    %v836 = vsel %vm835, %v828, %v832
    %v837 = vand.u32 2147483647, %v824
    %vm838 = vcmp.eq.f32.partialorder %v837, 8.507059e+37
    %v839 = vand.u32 %v824, 2147483648
    %v840 = vor.u32 1.1754944e-38, %v839
    %v841 = vsel %vm838, %v840, %v836
    %v842 = vmul.f32 1.0, %v841
    %v843 = vrcp.pop %v825
    %v844 = vmul.f32 %v825, %v843
    %v845 = vsub.f32 1.0, %v844
    %v846 = vmul.f32 %v843, %v845
    %v847 = vadd.f32 %v843, %v846
    %vm848 = vweird.f32 %v825
    %vm849 = vweird.f32 %v843
    %vm850 = vmor %vm848, %vm849
    %v851 = vsel %vm850, %v843, %v847
    %v852 = vand.u32 2147483647, %v825
    %vm853 = vcmp.eq.f32.partialorder %v852, 8.507059e+37
    %v854 = vand.u32 %v825, 2147483648
    %v855 = vor.u32 1.1754944e-38, %v854
    %v856 = vsel %vm853, %v855, %v851
    %v857 = vmul.f32 1.0, %v856
    %v858 = vrcp.pop %v826
    %v859 = vmul.f32 %v826, %v858
    %v860 = vsub.f32 1.0, %v859
    %v861 = vmul.f32 %v858, %v860
    %v862 = vadd.f32 %v858, %v861
    %vm863 = vweird.f32 %v826
    %vm864 = vweird.f32 %v858
    %vm865 = vmor %vm863, %vm864
    %v866 = vsel %vm865, %v858, %v862
    %v867 = vand.u32 2147483647, %v826
    %vm868 = vcmp.eq.f32.partialorder %v867, 8.507059e+37
    %v869 = vand.u32 %v826, 2147483648
    %v870 = vor.u32 1.1754944e-38, %v869
    %v871 = vsel %vm868, %v870, %v866
    %v872 = vmul.f32 1.0, %v871
    %v873 = vrcp.pop %v827
    %v874 = vmul.f32 %v827, %v873
    %v875 = vsub.f32 1.0, %v874
    %v876 = vmul.f32 %v873, %v875
    %v877 = vadd.f32 %v873, %v876
    %vm878 = vweird.f32 %v827
    %vm879 = vweird.f32 %v873
    %vm880 = vmor %vm878, %vm879
    %v881 = vsel %vm880, %v873, %v877
    %v882 = vand.u32 2147483647, %v827
    %vm883 = vcmp.eq.f32.partialorder %v882, 8.507059e+37
    %v884 = vand.u32 %v827, 2147483648
    %v885 = vor.u32 1.1754944e-38, %v884
    %v886 = vsel %vm883, %v885, %v881
    %v887 = vmul.f32 1.0, %v886
    %v888 = vadd.f32 %v258, %v780
    %v889 = vadd.f32 %v260, %v782
    %v890 = vadd.f32 %v263, %v785
    %v891 = vadd.f32 %v265, %v787
    %v892 = vxor.u32 %v888, 2147483648
    %v893 = vxor.u32 %v889, 2147483648
    %v894 = vxor.u32 %v890, 2147483648
    %v895 = vxor.u32 %v891, 2147483648
    %v896 = vmul.f32 %v892, 1.442695
    %v897 = vpow.pop %v896
    %v898 = vmul.f32 %v893, 1.442695
    %v899 = vpow.pop %v898
    %v900 = vmul.f32 %v894, 1.442695
    %v901 = vpow.pop %v900
    %v902 = vmul.f32 %v895, 1.442695
    %v903 = vpow.pop %v902
    %v904 = vadd.f32 %v897, 1.0
    %v905 = vadd.f32 %v899, 1.0
    %v906 = vadd.f32 %v901, 1.0
    %v907 = vadd.f32 %v903, 1.0
    %v908 = vrcp.pop %v904
    %v909 = vmul.f32 %v904, %v908
    %v910 = vsub.f32 1.0, %v909
    %v911 = vmul.f32 %v908, %v910
    %v912 = vadd.f32 %v908, %v911
    %vm913 = vweird.f32 %v904
    %vm914 = vweird.f32 %v908
    %vm915 = vmor %vm913, %vm914
    %v916 = vsel %vm915, %v908, %v912
    %v917 = vand.u32 2147483647, %v904
    %vm918 = vcmp.eq.f32.partialorder %v917, 8.507059e+37
    %v919 = vand.u32 %v904, 2147483648
    %v920 = vor.u32 1.1754944e-38, %v919
    %v921 = vsel %vm918, %v920, %v916
    %v922 = vmul.f32 1.0, %v921
    %v923 = vrcp.pop %v905
    %v924 = vmul.f32 %v905, %v923
    %v925 = vsub.f32 1.0, %v924
    %v926 = vmul.f32 %v923, %v925
    %v927 = vadd.f32 %v923, %v926
    %vm928 = vweird.f32 %v905
    %vm929 = vweird.f32 %v923
    %vm930 = vmor %vm928, %vm929
    %v931 = vsel %vm930, %v923, %v927
    %v932 = vand.u32 2147483647, %v905
    %vm933 = vcmp.eq.f32.partialorder %v932, 8.507059e+37
    %v934 = vand.u32 %v905, 2147483648
    %v935 = vor.u32 1.1754944e-38, %v934
    %v936 = vsel %vm933, %v935, %v931
    %v937 = vmul.f32 1.0, %v936
    %v938 = vrcp.pop %v906
    %v939 = vmul.f32 %v906, %v938
    %v940 = vsub.f32 1.0, %v939
    %v941 = vmul.f32 %v938, %v940
    %v942 = vadd.f32 %v938, %v941
    %vm943 = vweird.f32 %v906
    %vm944 = vweird.f32 %v938
    %vm945 = vmor %vm943, %vm944
    %v946 = vsel %vm945, %v938, %v942
    %v947 = vand.u32 2147483647, %v906
    %vm948 = vcmp.eq.f32.partialorder %v947, 8.507059e+37
    %v949 = vand.u32 %v906, 2147483648
    %v950 = vor.u32 1.1754944e-38, %v949
    %v951 = vsel %vm948, %v950, %v946
    %v952 = vmul.f32 1.0, %v951
    %v953 = vrcp.pop %v907
    %v954 = vmul.f32 %v907, %v953
    %v955 = vsub.f32 1.0, %v954
    %v956 = vmul.f32 %v953, %v955
    %v957 = vadd.f32 %v953, %v956
    %vm958 = vweird.f32 %v907
    %vm959 = vweird.f32 %v953
    %vm960 = vmor %vm958, %vm959
    %v961 = vsel %vm960, %v953, %v957
    %v962 = vand.u32 2147483647, %v907
    %vm963 = vcmp.eq.f32.partialorder %v962, 8.507059e+37
    %v964 = vand.u32 %v907, 2147483648
    %v965 = vor.u32 1.1754944e-38, %v964
    %v966 = vsel %vm963, %v965, %v961
    %v967 = vmul.f32 1.0, %v966
    %v968 = vadd.f32 %v799, %v370
    %v969 = vadd.f32 %v801, %v370
    %v970 = vadd.f32 %v804, %v370
    %v971 = vadd.f32 %v806, %v370
    %v972 = vmul.f32 %v842, %v968
    %v973 = vmul.f32 %v857, %v969
    %v974 = vmul.f32 %v872, %v970
    %v975 = vmul.f32 %v887, %v971
    %v976 = vadd.f32 %v307, %v972
    %v977 = vadd.f32 %v309, %v973
    %v978 = vadd.f32 %v312, %v974
    %v979 = vadd.f32 %v314, %v975
    %v980 = vtanh.pop %v976
    %v981 = vtanh.pop %v977
    %v982 = vtanh.pop %v978
    %v983 = vtanh.pop %v979
    %v984 = vsub.f32 1.0, %v922
    %v985 = vsub.f32 1.0, %v937
    %v986 = vsub.f32 1.0, %v952
    %v987 = vsub.f32 1.0, %v967
    %v988 = vmul.f32 %v984, %v980
    %v989 = vmul.f32 %v985, %v981
    %v990 = vmul.f32 %v986, %v982
    %v991 = vmul.f32 %v987, %v983
    %v992 = vmul.f32 %v922, %v745
    %v993 = vmul.f32 %v937, %v746
    %v994 = vmul.f32 %v952, %v747
    %v995 = vmul.f32 %v967, %v748
    %v996 = vadd.f32 %v988, %v992
    %v997 = vadd.f32 %v989, %v993
    %v998 = vadd.f32 %v990, %v994
    %v999 = vadd.f32 %v991, %v995
    %v1000 = vpack.c.bf16 %v997, %v996
    %v1001 = vpack.c.bf16 %v999, %v998
    %1002 = vmatpush.bf16.msra.mxu0 %v473
    %1003 = vmatpush.bf16.msra.mxu0 %v470
    %1004 = vmatpush.bf16.msra.mxu0 %v467
    %1005 = vmatpush.bf16.msra.mxu0 %v464
    %1006 = vmatpush.bf16.msra.mxu0 %v461
    %1007 = vmatpush.bf16.msra.mxu0 %v458
    %1008 = vmatpush.bf16.msra.mxu0 %v455
    %1009 = vmatpush.bf16.msra.mxu0 %v452
    %1010 = vmatmul.bf16.gmra.mxu0 %v1000
    %v1011 = vpop.f32.mrf.mxu0
    %v1012 = vadd.f32 0.0, %v1011
    %v1013 = vpop.f32.mrf.mxu0
    %v1014 = vadd.f32 0.0, %v1013
    %1015 = vmatmul.bf16.gmra.mxu0 %v1001
    %v1016 = vpop.f32.mrf.mxu0
    %v1017 = vadd.f32 0.0, %v1016
    %v1018 = vpop.f32.mrf.mxu0
    %v1019 = vadd.f32 0.0, %v1018
    %1020 = vdwg.mxu0
    %1021 = vmatpush.bf16.msra.mxu0 %v474
    %1022 = vmatpush.bf16.msra.mxu0 %v471
    %1023 = vmatpush.bf16.msra.mxu0 %v468
    %1024 = vmatpush.bf16.msra.mxu0 %v465
    %1025 = vmatpush.bf16.msra.mxu0 %v462
    %1026 = vmatpush.bf16.msra.mxu0 %v459
    %1027 = vmatpush.bf16.msra.mxu0 %v456
    %1028 = vmatpush.bf16.msra.mxu0 %v453
    %1029 = vmatmul.bf16.gmra.mxu0 %v1000
    %v1030 = vpop.f32.mrf.mxu0
    %v1031 = vadd.f32 0.0, %v1030
    %v1032 = vpop.f32.mrf.mxu0
    %v1033 = vadd.f32 0.0, %v1032
    %1034 = vmatmul.bf16.gmra.mxu0 %v1001
    %v1035 = vpop.f32.mrf.mxu0
    %v1036 = vadd.f32 0.0, %v1035
    %v1037 = vpop.f32.mrf.mxu0
    %v1038 = vadd.f32 0.0, %v1037
    %1039 = vdwg.mxu0
    %1040 = vmatpush.bf16.msra.mxu0 %v475
    %1041 = vmatpush.bf16.msra.mxu0 %v472
    %1042 = vmatpush.bf16.msra.mxu0 %v469
    %1043 = vmatpush.bf16.msra.mxu0 %v466
    %1044 = vmatpush.bf16.msra.mxu0 %v463
    %1045 = vmatpush.bf16.msra.mxu0 %v460
    %1046 = vmatpush.bf16.msra.mxu0 %v457
    %1047 = vmatpush.bf16.msra.mxu0 %v454
    %1048 = vmatmul.bf16.gmra.mxu0 %v1000
    %v1049 = vpop.f32.mrf.mxu0
    %v1050 = vadd.f32 0.0, %v1049
    %v1051 = vpop.f32.mrf.mxu0
    %v1052 = vadd.f32 0.0, %v1051
    %1053 = vmatmul.bf16.gmra.mxu0 %v1001
    %v1054 = vpop.f32.mrf.mxu0
    %v1055 = vadd.f32 0.0, %v1054
    %v1056 = vpop.f32.mrf.mxu0
    %v1057 = vadd.f32 0.0, %v1056
    %1058 = vdwg.mxu0
    %v1059 = vadd.f32 %v219, %v1012
    %v1060 = vadd.f32 %v221, %v1014
    %v1061 = vadd.f32 %v224, %v1017
    %v1062 = vadd.f32 %v226, %v1019
    %v1063 = vxor.u32 %v1059, 2147483648
    %v1064 = vxor.u32 %v1060, 2147483648
    %v1065 = vxor.u32 %v1061, 2147483648
    %v1066 = vxor.u32 %v1062, 2147483648
    %v1067 = vmul.f32 %v1063, 1.442695
    %v1068 = vpow.pop %v1067
    %v1069 = vmul.f32 %v1064, 1.442695
    %v1070 = vpow.pop %v1069
    %v1071 = vmul.f32 %v1065, 1.442695
    %v1072 = vpow.pop %v1071
    %v1073 = vmul.f32 %v1066, 1.442695
    %v1074 = vpow.pop %v1073
    %v1075 = vadd.f32 %v1068, 1.0
    %v1076 = vadd.f32 %v1070, 1.0
    %v1077 = vadd.f32 %v1072, 1.0
    %v1078 = vadd.f32 %v1074, 1.0
    %v1079 = vrcp.pop %v1075
    %v1080 = vmul.f32 %v1075, %v1079
    %v1081 = vsub.f32 1.0, %v1080
    %v1082 = vmul.f32 %v1079, %v1081
    %v1083 = vadd.f32 %v1079, %v1082
    %vm1084 = vweird.f32 %v1075
    %vm1085 = vweird.f32 %v1079
    %vm1086 = vmor %vm1084, %vm1085
    %v1087 = vsel %vm1086, %v1079, %v1083
    %v1088 = vand.u32 2147483647, %v1075
    %vm1089 = vcmp.eq.f32.partialorder %v1088, 8.507059e+37
    %v1090 = vand.u32 %v1075, 2147483648
    %v1091 = vor.u32 1.1754944e-38, %v1090
    %v1092 = vsel %vm1089, %v1091, %v1087
    %v1093 = vmul.f32 1.0, %v1092
    %v1094 = vrcp.pop %v1076
    %v1095 = vmul.f32 %v1076, %v1094
    %v1096 = vsub.f32 1.0, %v1095
    %v1097 = vmul.f32 %v1094, %v1096
    %v1098 = vadd.f32 %v1094, %v1097
    %vm1099 = vweird.f32 %v1076
    %vm1100 = vweird.f32 %v1094
    %vm1101 = vmor %vm1099, %vm1100
    %v1102 = vsel %vm1101, %v1094, %v1098
    %v1103 = vand.u32 2147483647, %v1076
    %vm1104 = vcmp.eq.f32.partialorder %v1103, 8.507059e+37
    %v1105 = vand.u32 %v1076, 2147483648
    %v1106 = vor.u32 1.1754944e-38, %v1105
    %v1107 = vsel %vm1104, %v1106, %v1102
    %v1108 = vmul.f32 1.0, %v1107
    %v1109 = vrcp.pop %v1077
    %v1110 = vmul.f32 %v1077, %v1109
    %v1111 = vsub.f32 1.0, %v1110
    %v1112 = vmul.f32 %v1109, %v1111
    %v1113 = vadd.f32 %v1109, %v1112
    %vm1114 = vweird.f32 %v1077
    %vm1115 = vweird.f32 %v1109
    %vm1116 = vmor %vm1114, %vm1115
    %v1117 = vsel %vm1116, %v1109, %v1113
    %v1118 = vand.u32 2147483647, %v1077
    %vm1119 = vcmp.eq.f32.partialorder %v1118, 8.507059e+37
    %v1120 = vand.u32 %v1077, 2147483648
    %v1121 = vor.u32 1.1754944e-38, %v1120
    %v1122 = vsel %vm1119, %v1121, %v1117
    %v1123 = vmul.f32 1.0, %v1122
    %v1124 = vrcp.pop %v1078
    %v1125 = vmul.f32 %v1078, %v1124
    %v1126 = vsub.f32 1.0, %v1125
    %v1127 = vmul.f32 %v1124, %v1126
    %v1128 = vadd.f32 %v1124, %v1127
    %vm1129 = vweird.f32 %v1078
    %vm1130 = vweird.f32 %v1124
    %vm1131 = vmor %vm1129, %vm1130
    %v1132 = vsel %vm1131, %v1124, %v1128
    %v1133 = vand.u32 2147483647, %v1078
    %vm1134 = vcmp.eq.f32.partialorder %v1133, 8.507059e+37
    %v1135 = vand.u32 %v1078, 2147483648
    %v1136 = vor.u32 1.1754944e-38, %v1135
    %v1137 = vsel %vm1134, %v1136, %v1132
    %v1138 = vmul.f32 1.0, %v1137
    %v1139 = vadd.f32 %v268, %v1031
    %v1140 = vadd.f32 %v270, %v1033
    %v1141 = vadd.f32 %v273, %v1036
    %v1142 = vadd.f32 %v275, %v1038
    %v1143 = vxor.u32 %v1139, 2147483648
    %v1144 = vxor.u32 %v1140, 2147483648
    %v1145 = vxor.u32 %v1141, 2147483648
    %v1146 = vxor.u32 %v1142, 2147483648
    %v1147 = vmul.f32 %v1143, 1.442695
    %v1148 = vpow.pop %v1147
    %v1149 = vmul.f32 %v1144, 1.442695
    %v1150 = vpow.pop %v1149
    %v1151 = vmul.f32 %v1145, 1.442695
    %v1152 = vpow.pop %v1151
    %v1153 = vmul.f32 %v1146, 1.442695
    %v1154 = vpow.pop %v1153
    %v1155 = vadd.f32 %v1148, 1.0
    %v1156 = vadd.f32 %v1150, 1.0
    %v1157 = vadd.f32 %v1152, 1.0
    %v1158 = vadd.f32 %v1154, 1.0
    %v1159 = vrcp.pop %v1155
    %v1160 = vmul.f32 %v1155, %v1159
    %v1161 = vsub.f32 1.0, %v1160
    %v1162 = vmul.f32 %v1159, %v1161
    %v1163 = vadd.f32 %v1159, %v1162
    %vm1164 = vweird.f32 %v1155
    %vm1165 = vweird.f32 %v1159
    %vm1166 = vmor %vm1164, %vm1165
    %v1167 = vsel %vm1166, %v1159, %v1163
    %v1168 = vand.u32 2147483647, %v1155
    %vm1169 = vcmp.eq.f32.partialorder %v1168, 8.507059e+37
    %v1170 = vand.u32 %v1155, 2147483648
    %v1171 = vor.u32 1.1754944e-38, %v1170
    %v1172 = vsel %vm1169, %v1171, %v1167
    %v1173 = vmul.f32 1.0, %v1172
    %v1174 = vrcp.pop %v1156
    %v1175 = vmul.f32 %v1156, %v1174
    %v1176 = vsub.f32 1.0, %v1175
    %v1177 = vmul.f32 %v1174, %v1176
    %v1178 = vadd.f32 %v1174, %v1177
    %vm1179 = vweird.f32 %v1156
    %vm1180 = vweird.f32 %v1174
    %vm1181 = vmor %vm1179, %vm1180
    %v1182 = vsel %vm1181, %v1174, %v1178
    %v1183 = vand.u32 2147483647, %v1156
    %vm1184 = vcmp.eq.f32.partialorder %v1183, 8.507059e+37
    %v1185 = vand.u32 %v1156, 2147483648
    %v1186 = vor.u32 1.1754944e-38, %v1185
    %v1187 = vsel %vm1184, %v1186, %v1182
    %v1188 = vmul.f32 1.0, %v1187
    %v1189 = vrcp.pop %v1157
    %v1190 = vmul.f32 %v1157, %v1189
    %v1191 = vsub.f32 1.0, %v1190
    %v1192 = vmul.f32 %v1189, %v1191
    %v1193 = vadd.f32 %v1189, %v1192
    %vm1194 = vweird.f32 %v1157
    %vm1195 = vweird.f32 %v1189
    %vm1196 = vmor %vm1194, %vm1195
    %v1197 = vsel %vm1196, %v1189, %v1193
    %v1198 = vand.u32 2147483647, %v1157
    %vm1199 = vcmp.eq.f32.partialorder %v1198, 8.507059e+37
    %v1200 = vand.u32 %v1157, 2147483648
    %v1201 = vor.u32 1.1754944e-38, %v1200
    %v1202 = vsel %vm1199, %v1201, %v1197
    %v1203 = vmul.f32 1.0, %v1202
    %v1204 = vrcp.pop %v1158
    %v1205 = vmul.f32 %v1158, %v1204
    %v1206 = vsub.f32 1.0, %v1205
    %v1207 = vmul.f32 %v1204, %v1206
    %v1208 = vadd.f32 %v1204, %v1207
    %vm1209 = vweird.f32 %v1158
    %vm1210 = vweird.f32 %v1204
    %vm1211 = vmor %vm1209, %vm1210
    %v1212 = vsel %vm1211, %v1204, %v1208
    %v1213 = vand.u32 2147483647, %v1158
    %vm1214 = vcmp.eq.f32.partialorder %v1213, 8.507059e+37
    %v1215 = vand.u32 %v1158, 2147483648
    %v1216 = vor.u32 1.1754944e-38, %v1215
    %v1217 = vsel %vm1214, %v1216, %v1212
    %v1218 = vmul.f32 1.0, %v1217
    %v1219 = vadd.f32 %v1050, %v370
    %v1220 = vadd.f32 %v1052, %v370
    %v1221 = vadd.f32 %v1055, %v370
    %v1222 = vadd.f32 %v1057, %v370
    %v1223 = vmul.f32 %v1093, %v1219
    %v1224 = vmul.f32 %v1108, %v1220
    %v1225 = vmul.f32 %v1123, %v1221
    %v1226 = vmul.f32 %v1138, %v1222
    %v1227 = vadd.f32 %v317, %v1223
    %v1228 = vadd.f32 %v319, %v1224
    %v1229 = vadd.f32 %v322, %v1225
    %v1230 = vadd.f32 %v324, %v1226
    %v1231 = vtanh.pop %v1227
    %v1232 = vtanh.pop %v1228
    %v1233 = vtanh.pop %v1229
    %v1234 = vtanh.pop %v1230
    %v1235 = vsub.f32 1.0, %v1173
    %v1236 = vsub.f32 1.0, %v1188
    %v1237 = vsub.f32 1.0, %v1203
    %v1238 = vsub.f32 1.0, %v1218
    %v1239 = vmul.f32 %v1235, %v1231
    %v1240 = vmul.f32 %v1236, %v1232
    %v1241 = vmul.f32 %v1237, %v1233
    %v1242 = vmul.f32 %v1238, %v1234
    %v1243 = vmul.f32 %v1173, %v996
    %v1244 = vmul.f32 %v1188, %v997
    %v1245 = vmul.f32 %v1203, %v998
    %v1246 = vmul.f32 %v1218, %v999
    %v1247 = vadd.f32 %v1239, %v1243
    %v1248 = vadd.f32 %v1240, %v1244
    %v1249 = vadd.f32 %v1241, %v1245
    %v1250 = vadd.f32 %v1242, %v1246
    %v1251 = vpack.c.bf16 %v1248, %v1247
    %v1252 = vpack.c.bf16 %v1250, %v1249
    %1253 = vmatpush.bf16.msra.mxu0 %v473
    %1254 = vmatpush.bf16.msra.mxu0 %v470
    %1255 = vmatpush.bf16.msra.mxu0 %v467
    %1256 = vmatpush.bf16.msra.mxu0 %v464
    %1257 = vmatpush.bf16.msra.mxu0 %v461
    %1258 = vmatpush.bf16.msra.mxu0 %v458
    %1259 = vmatpush.bf16.msra.mxu0 %v455
    %1260 = vmatpush.bf16.msra.mxu0 %v452
    %1261 = vmatmul.bf16.gmra.mxu0 %v1251
    %v1262 = vpop.f32.mrf.mxu0
    %v1263 = vadd.f32 0.0, %v1262
    %v1264 = vpop.f32.mrf.mxu0
    %v1265 = vadd.f32 0.0, %v1264
    %1266 = vmatmul.bf16.gmra.mxu0 %v1252
    %v1267 = vpop.f32.mrf.mxu0
    %v1268 = vadd.f32 0.0, %v1267
    %v1269 = vpop.f32.mrf.mxu0
    %v1270 = vadd.f32 0.0, %v1269
    %1271 = vdwg.mxu0
    %1272 = vmatpush.bf16.msra.mxu0 %v474
    %1273 = vmatpush.bf16.msra.mxu0 %v471
    %1274 = vmatpush.bf16.msra.mxu0 %v468
    %1275 = vmatpush.bf16.msra.mxu0 %v465
    %1276 = vmatpush.bf16.msra.mxu0 %v462
    %1277 = vmatpush.bf16.msra.mxu0 %v459
    %1278 = vmatpush.bf16.msra.mxu0 %v456
    %1279 = vmatpush.bf16.msra.mxu0 %v453
    %1280 = vmatmul.bf16.gmra.mxu0 %v1251
    %v1281 = vpop.f32.mrf.mxu0
    %v1282 = vadd.f32 0.0, %v1281
    %v1283 = vpop.f32.mrf.mxu0
    %v1284 = vadd.f32 0.0, %v1283
    %1285 = vmatmul.bf16.gmra.mxu0 %v1252
    %v1286 = vpop.f32.mrf.mxu0
    %v1287 = vadd.f32 0.0, %v1286
    %v1288 = vpop.f32.mrf.mxu0
    %v1289 = vadd.f32 0.0, %v1288
    %1290 = vdwg.mxu0
    %1291 = vmatpush.bf16.msra.mxu0 %v475
    %1292 = vmatpush.bf16.msra.mxu0 %v472
    %1293 = vmatpush.bf16.msra.mxu0 %v469
    %1294 = vmatpush.bf16.msra.mxu0 %v466
    %1295 = vmatpush.bf16.msra.mxu0 %v463
    %1296 = vmatpush.bf16.msra.mxu0 %v460
    %1297 = vmatpush.bf16.msra.mxu0 %v457
    %1298 = vmatpush.bf16.msra.mxu0 %v454
    %1299 = vmatmul.bf16.gmra.mxu0 %v1251
    %v1300 = vpop.f32.mrf.mxu0
    %v1301 = vadd.f32 0.0, %v1300
    %v1302 = vpop.f32.mrf.mxu0
    %v1303 = vadd.f32 0.0, %v1302
    %1304 = vmatmul.bf16.gmra.mxu0 %v1252
    %v1305 = vpop.f32.mrf.mxu0
    %v1306 = vadd.f32 0.0, %v1305
    %v1307 = vpop.f32.mrf.mxu0
    %v1308 = vadd.f32 0.0, %v1307
    %1309 = vdwg.mxu0
    %v1310 = vadd.f32 %v229, %v1263
    %v1311 = vadd.f32 %v231, %v1265
    %v1312 = vadd.f32 %v234, %v1268
    %v1313 = vadd.f32 %v236, %v1270
    %v1314 = vxor.u32 %v1310, 2147483648
    %v1315 = vxor.u32 %v1311, 2147483648
    %v1316 = vxor.u32 %v1312, 2147483648
    %v1317 = vxor.u32 %v1313, 2147483648
    %v1318 = vmul.f32 %v1314, 1.442695
    %v1319 = vpow.pop %v1318
    %v1320 = vmul.f32 %v1315, 1.442695
    %v1321 = vpow.pop %v1320
    %v1322 = vmul.f32 %v1316, 1.442695
    %v1323 = vpow.pop %v1322
    %v1324 = vmul.f32 %v1317, 1.442695
    %v1325 = vpow.pop %v1324
    %v1326 = vadd.f32 %v1319, 1.0
    %v1327 = vadd.f32 %v1321, 1.0
    %v1328 = vadd.f32 %v1323, 1.0
    %v1329 = vadd.f32 %v1325, 1.0
    %v1330 = vrcp.pop %v1326
    %v1331 = vmul.f32 %v1326, %v1330
    %v1332 = vsub.f32 1.0, %v1331
    %v1333 = vmul.f32 %v1330, %v1332
    %v1334 = vadd.f32 %v1330, %v1333
    %vm1335 = vweird.f32 %v1326
    %vm1336 = vweird.f32 %v1330
    %vm1337 = vmor %vm1335, %vm1336
    %v1338 = vsel %vm1337, %v1330, %v1334
    %v1339 = vand.u32 2147483647, %v1326
    %vm1340 = vcmp.eq.f32.partialorder %v1339, 8.507059e+37
    %v1341 = vand.u32 %v1326, 2147483648
    %v1342 = vor.u32 1.1754944e-38, %v1341
    %v1343 = vsel %vm1340, %v1342, %v1338
    %v1344 = vmul.f32 1.0, %v1343
    %v1345 = vrcp.pop %v1327
    %v1346 = vmul.f32 %v1327, %v1345
    %v1347 = vsub.f32 1.0, %v1346
    %v1348 = vmul.f32 %v1345, %v1347
    %v1349 = vadd.f32 %v1345, %v1348
    %vm1350 = vweird.f32 %v1327
    %vm1351 = vweird.f32 %v1345
    %vm1352 = vmor %vm1350, %vm1351
    %v1353 = vsel %vm1352, %v1345, %v1349
    %v1354 = vand.u32 2147483647, %v1327
    %vm1355 = vcmp.eq.f32.partialorder %v1354, 8.507059e+37
    %v1356 = vand.u32 %v1327, 2147483648
    %v1357 = vor.u32 1.1754944e-38, %v1356
    %v1358 = vsel %vm1355, %v1357, %v1353
    %v1359 = vmul.f32 1.0, %v1358
    %v1360 = vrcp.pop %v1328
    %v1361 = vmul.f32 %v1328, %v1360
    %v1362 = vsub.f32 1.0, %v1361
    %v1363 = vmul.f32 %v1360, %v1362
    %v1364 = vadd.f32 %v1360, %v1363
    %vm1365 = vweird.f32 %v1328
    %vm1366 = vweird.f32 %v1360
    %vm1367 = vmor %vm1365, %vm1366
    %v1368 = vsel %vm1367, %v1360, %v1364
    %v1369 = vand.u32 2147483647, %v1328
    %vm1370 = vcmp.eq.f32.partialorder %v1369, 8.507059e+37
    %v1371 = vand.u32 %v1328, 2147483648
    %v1372 = vor.u32 1.1754944e-38, %v1371
    %v1373 = vsel %vm1370, %v1372, %v1368
    %v1374 = vmul.f32 1.0, %v1373
    %v1375 = vrcp.pop %v1329
    %v1376 = vmul.f32 %v1329, %v1375
    %v1377 = vsub.f32 1.0, %v1376
    %v1378 = vmul.f32 %v1375, %v1377
    %v1379 = vadd.f32 %v1375, %v1378
    %vm1380 = vweird.f32 %v1329
    %vm1381 = vweird.f32 %v1375
    %vm1382 = vmor %vm1380, %vm1381
    %v1383 = vsel %vm1382, %v1375, %v1379
    %v1384 = vand.u32 2147483647, %v1329
    %vm1385 = vcmp.eq.f32.partialorder %v1384, 8.507059e+37
    %v1386 = vand.u32 %v1329, 2147483648
    %v1387 = vor.u32 1.1754944e-38, %v1386
    %v1388 = vsel %vm1385, %v1387, %v1383
    %v1389 = vmul.f32 1.0, %v1388
    %v1390 = vadd.f32 %v278, %v1282
    %v1391 = vadd.f32 %v280, %v1284
    %v1392 = vadd.f32 %v283, %v1287
    %v1393 = vadd.f32 %v285, %v1289
    %v1394 = vxor.u32 %v1390, 2147483648
    %v1395 = vxor.u32 %v1391, 2147483648
    %v1396 = vxor.u32 %v1392, 2147483648
    %v1397 = vxor.u32 %v1393, 2147483648
    %v1398 = vmul.f32 %v1394, 1.442695
    %v1399 = vpow.pop %v1398
    %v1400 = vmul.f32 %v1395, 1.442695
    %v1401 = vpow.pop %v1400
    %v1402 = vmul.f32 %v1396, 1.442695
    %v1403 = vpow.pop %v1402
    %v1404 = vmul.f32 %v1397, 1.442695
    %v1405 = vpow.pop %v1404
    %v1406 = vadd.f32 %v1399, 1.0
    %v1407 = vadd.f32 %v1401, 1.0
    %v1408 = vadd.f32 %v1403, 1.0
    %v1409 = vadd.f32 %v1405, 1.0
    %v1410 = vrcp.pop %v1406
    %v1411 = vmul.f32 %v1406, %v1410
    %v1412 = vsub.f32 1.0, %v1411
    %v1413 = vmul.f32 %v1410, %v1412
    %v1414 = vadd.f32 %v1410, %v1413
    %vm1415 = vweird.f32 %v1406
    %vm1416 = vweird.f32 %v1410
    %vm1417 = vmor %vm1415, %vm1416
    %v1418 = vsel %vm1417, %v1410, %v1414
    %v1419 = vand.u32 2147483647, %v1406
    %vm1420 = vcmp.eq.f32.partialorder %v1419, 8.507059e+37
    %v1421 = vand.u32 %v1406, 2147483648
    %v1422 = vor.u32 1.1754944e-38, %v1421
    %v1423 = vsel %vm1420, %v1422, %v1418
    %v1424 = vmul.f32 1.0, %v1423
    %v1425 = vrcp.pop %v1407
    %v1426 = vmul.f32 %v1407, %v1425
    %v1427 = vsub.f32 1.0, %v1426
    %v1428 = vmul.f32 %v1425, %v1427
    %v1429 = vadd.f32 %v1425, %v1428
    %vm1430 = vweird.f32 %v1407
    %vm1431 = vweird.f32 %v1425
    %vm1432 = vmor %vm1430, %vm1431
    %v1433 = vsel %vm1432, %v1425, %v1429
    %v1434 = vand.u32 2147483647, %v1407
    %vm1435 = vcmp.eq.f32.partialorder %v1434, 8.507059e+37
    %v1436 = vand.u32 %v1407, 2147483648
    %v1437 = vor.u32 1.1754944e-38, %v1436
    %v1438 = vsel %vm1435, %v1437, %v1433
    %v1439 = vmul.f32 1.0, %v1438
    %v1440 = vrcp.pop %v1408
    %v1441 = vmul.f32 %v1408, %v1440
    %v1442 = vsub.f32 1.0, %v1441
    %v1443 = vmul.f32 %v1440, %v1442
    %v1444 = vadd.f32 %v1440, %v1443
    %vm1445 = vweird.f32 %v1408
    %vm1446 = vweird.f32 %v1440
    %vm1447 = vmor %vm1445, %vm1446
    %v1448 = vsel %vm1447, %v1440, %v1444
    %v1449 = vand.u32 2147483647, %v1408
    %vm1450 = vcmp.eq.f32.partialorder %v1449, 8.507059e+37
    %v1451 = vand.u32 %v1408, 2147483648
    %v1452 = vor.u32 1.1754944e-38, %v1451
    %v1453 = vsel %vm1450, %v1452, %v1448
    %v1454 = vmul.f32 1.0, %v1453
    %v1455 = vrcp.pop %v1409
    %v1456 = vmul.f32 %v1409, %v1455
    %v1457 = vsub.f32 1.0, %v1456
    %v1458 = vmul.f32 %v1455, %v1457
    %v1459 = vadd.f32 %v1455, %v1458
    %vm1460 = vweird.f32 %v1409
    %vm1461 = vweird.f32 %v1455
    %vm1462 = vmor %vm1460, %vm1461
    %v1463 = vsel %vm1462, %v1455, %v1459
    %v1464 = vand.u32 2147483647, %v1409
    %vm1465 = vcmp.eq.f32.partialorder %v1464, 8.507059e+37
    %v1466 = vand.u32 %v1409, 2147483648
    %v1467 = vor.u32 1.1754944e-38, %v1466
    %v1468 = vsel %vm1465, %v1467, %v1463
    %v1469 = vmul.f32 1.0, %v1468
    %v1470 = vadd.f32 %v1301, %v370
    %v1471 = vadd.f32 %v1303, %v370
    %v1472 = vadd.f32 %v1306, %v370
    %v1473 = vadd.f32 %v1308, %v370
    %v1474 = vmul.f32 %v1344, %v1470
    %v1475 = vmul.f32 %v1359, %v1471
    %v1476 = vmul.f32 %v1374, %v1472
    %v1477 = vmul.f32 %v1389, %v1473
    %v1478 = vadd.f32 %v327, %v1474
    %v1479 = vadd.f32 %v329, %v1475
    %v1480 = vadd.f32 %v332, %v1476
    %v1481 = vadd.f32 %v334, %v1477
    %v1482 = vtanh.pop %v1478
    %v1483 = vtanh.pop %v1479
    %v1484 = vtanh.pop %v1480
    %v1485 = vtanh.pop %v1481
    %v1486 = vsub.f32 1.0, %v1424
    %v1487 = vsub.f32 1.0, %v1439
    %v1488 = vsub.f32 1.0, %v1454
    %v1489 = vsub.f32 1.0, %v1469
    %v1490 = vmul.f32 %v1486, %v1482
    %v1491 = vmul.f32 %v1487, %v1483
    %v1492 = vmul.f32 %v1488, %v1484
    %v1493 = vmul.f32 %v1489, %v1485
    %v1494 = vmul.f32 %v1424, %v1247
    %v1495 = vmul.f32 %v1439, %v1248
    %v1496 = vmul.f32 %v1454, %v1249
    %v1497 = vmul.f32 %v1469, %v1250
    %v1498 = vadd.f32 %v1490, %v1494
    %v1499 = vadd.f32 %v1491, %v1495
    %v1500 = vadd.f32 %v1492, %v1496
    %v1501 = vadd.f32 %v1493, %v1497
    %v1502 = vpack.c.bf16 %v1499, %v1498
    %v1503 = vpack.c.bf16 %v1501, %v1500
    %v1504 = vld [vmem:[#allocation5] sm:$0xff]
    %v1505 = vld [vmem:[#allocation5 + $0x8] sm:$0xf]
    %v1506 = vld [vmem:[#allocation5 + $0xc] sm:$0xff]
    %v1507 = vld [vmem:[#allocation5 + $0x14] sm:$0xf]
    %v1508 = vld [vmem:[#allocation5 + $0x18] sm:$0xff]
    %v1509 = vld [vmem:[#allocation5 + $0x20] sm:$0xf]
    %v1510 = vld [vmem:[#allocation5 + $0x24] sm:$0xff]
    %v1511 = vld [vmem:[#allocation5 + $0x2c] sm:$0xf]
    %v1512 = vld [vmem:[#allocation5 + $0x30] sm:$0xff]
    %v1513 = vld [vmem:[#allocation5 + $0x38] sm:$0xf]
    %v1514 = vld [vmem:[#allocation5 + $0x3c] sm:$0xff]
    %v1515 = vld [vmem:[#allocation5 + $0x44] sm:$0xf]
    %v1516 = vld [vmem:[#allocation5 + $0x48] sm:$0xff]
    %v1517 = vld [vmem:[#allocation5 + $0x50] sm:$0xf]
    %v1518 = vld [vmem:[#allocation5 + $0x54] sm:$0xff]
    %v1519 = vld [vmem:[#allocation5 + $0x5c] sm:$0xf]
    %v1520 = vld [vmem:[#allocation5 + $0x60] sm:$0xff]
    %v1521 = vld [vmem:[#allocation5 + $0x68] sm:$0xf]
    %v1522 = vld [vmem:[#allocation5 + $0x6c] sm:$0xff]
    %v1523 = vld [vmem:[#allocation5 + $0x74] sm:$0xf]
    %v1524 = vld [vmem:[#allocation5 + $0x78] sm:$0xff]
    %v1525 = vld [vmem:[#allocation5 + $0x80] sm:$0xf]
    %v1526 = vld [vmem:[#allocation5 + $0x84] sm:$0xff]
    %v1527 = vld [vmem:[#allocation5 + $0x8c] sm:$0xf]
    %v1528 = vld [vmem:[#allocation5 + $0x90] sm:$0xff]
    %v1529 = vld [vmem:[#allocation5 + $0x98] sm:$0xf]
    %v1530 = vld [vmem:[#allocation5 + $0x9c] sm:$0xff]
    %v1531 = vld [vmem:[#allocation5 + $0xa4] sm:$0xf]
    %v1532 = vld [vmem:[#allocation5 + $0xa8] sm:$0xff]
    %v1533 = vld [vmem:[#allocation5 + $0xb0] sm:$0xf]
    %v1534 = vld [vmem:[#allocation5 + $0xb4] sm:$0xff]
    %v1535 = vld [vmem:[#allocation5 + $0xbc] sm:$0xf]
    %v1536 = vld [vmem:[%s7] sm:$0x7]
    %v1538 = vperm.slane %v1536, 0
    %v1539 = vperm.slane %v1536, 1
    %v1540 = vperm.slane %v1536, 2
    %v1576 = vunpack.c.l.b16 %v1504
    %v1577 = vunpack.c.h.b16 %v1504
    %v1578 = vunpack.c.l.b16 %v1505
    %v1579 = vunpack.c.l.b16 %v1506
    %v1580 = vunpack.c.h.b16 %v1506
    %v1581 = vunpack.c.l.b16 %v1507
    %v1582 = vunpack.c.l.b16 %v1508
    %v1583 = vunpack.c.h.b16 %v1508
    %v1584 = vunpack.c.l.b16 %v1509
    %v1585 = vunpack.c.l.b16 %v1510
    %v1586 = vunpack.c.h.b16 %v1510
    %v1587 = vunpack.c.l.b16 %v1511
    %v1588 = vunpack.c.l.b16 %v1512
    %v1589 = vunpack.c.h.b16 %v1512
    %v1590 = vunpack.c.l.b16 %v1513
    %v1591 = vunpack.c.l.b16 %v1514
    %v1592 = vunpack.c.h.b16 %v1514
    %v1593 = vunpack.c.l.b16 %v1515
    %v1594 = vunpack.c.l.b16 %v1516
    %v1595 = vunpack.c.h.b16 %v1516
    %v1596 = vunpack.c.l.b16 %v1517
    %v1597 = vunpack.c.l.b16 %v1518
    %v1598 = vunpack.c.h.b16 %v1518
    %v1599 = vunpack.c.l.b16 %v1519
    %v1600 = vunpack.c.l.b16 %v1520
    %v1601 = vunpack.c.h.b16 %v1520
    %v1602 = vunpack.c.l.b16 %v1521
    %v1603 = vunpack.c.l.b16 %v1522
    %v1604 = vunpack.c.h.b16 %v1522
    %v1605 = vunpack.c.l.b16 %v1523
    %v1606 = vunpack.c.l.b16 %v1524
    %v1607 = vunpack.c.h.b16 %v1524
    %v1608 = vunpack.c.l.b16 %v1525
    %v1609 = vunpack.c.l.b16 %v1526
    %v1610 = vunpack.c.h.b16 %v1526
    %v1611 = vunpack.c.l.b16 %v1527
    %v1612 = vunpack.c.l.b16 %v1528
    %v1613 = vunpack.c.h.b16 %v1528
    %v1614 = vunpack.c.l.b16 %v1529
    %v1615 = vunpack.c.l.b16 %v1530
    %v1616 = vunpack.c.h.b16 %v1530
    %v1617 = vunpack.c.l.b16 %v1531
    %v1618 = vunpack.c.l.b16 %v1532
    %v1619 = vunpack.c.h.b16 %v1532
    %v1620 = vunpack.c.l.b16 %v1533
    %v1621 = vunpack.c.l.b16 %v1534
    %v1622 = vunpack.c.h.b16 %v1534
    %v1623 = vunpack.c.l.b16 %v1535
    %v1624 = vpack.c.b16 %v1579, %v1576
    %v1625 = vpack.c.b16 %v1580, %v1577
    %v1626 = vpack.c.b16 %v1581, %v1578
    %v1627 = vpack.c.b16 %v1585, %v1582
    %v1628 = vpack.c.b16 %v1586, %v1583
    %v1629 = vpack.c.b16 %v1587, %v1584
    %v1630 = vpack.c.b16 %v1591, %v1588
    %v1631 = vpack.c.b16 %v1592, %v1589
    %v1632 = vpack.c.b16 %v1593, %v1590
    %v1633 = vpack.c.b16 %v1597, %v1594
    %v1634 = vpack.c.b16 %v1598, %v1595
    %v1635 = vpack.c.b16 %v1599, %v1596
    %v1636 = vpack.c.b16 %v1603, %v1600
    %v1637 = vpack.c.b16 %v1604, %v1601
    %v1638 = vpack.c.b16 %v1605, %v1602
    %v1639 = vpack.c.b16 %v1609, %v1606
    %v1640 = vpack.c.b16 %v1610, %v1607
    %v1641 = vpack.c.b16 %v1611, %v1608
    %v1642 = vpack.c.b16 %v1615, %v1612
    %v1643 = vpack.c.b16 %v1616, %v1613
    %v1644 = vpack.c.b16 %v1617, %v1614
    %v1645 = vpack.c.b16 %v1621, %v1618
    %v1646 = vpack.c.b16 %v1622, %v1619
    %v1647 = vpack.c.b16 %v1623, %v1620
    %1672 = vmatpush.bf16.msra.mxu0 %v1645
    %1673 = vmatpush.bf16.msra.mxu0 %v1642
    %1674 = vmatpush.bf16.msra.mxu0 %v1639
    %1675 = vmatpush.bf16.msra.mxu0 %v1636
    %1676 = vmatpush.bf16.msra.mxu0 %v1633
    %1677 = vmatpush.bf16.msra.mxu0 %v1630
    %1678 = vmatpush.bf16.msra.mxu0 %v1627
    %1679 = vmatpush.bf16.msra.mxu0 %v1624
    %1680 = vmatmul.bf16.gmra.mxu0 %v1502
    %v1681 = vpop.f32.mrf.mxu0
    %v1682 = vadd.f32 %v1538, %v1681
    %v1683 = vpop.f32.mrf.mxu0
    %v1684 = vadd.f32 %v1538, %v1683
    %1685 = vmatmul.bf16.gmra.mxu0 %v1503
    %v1686 = vpop.f32.mrf.mxu0
    %v1687 = vadd.f32 %v1538, %v1686
    %v1688 = vpop.f32.mrf.mxu0
    %v1689 = vadd.f32 %v1538, %v1688
    %1690 = vdwg.mxu0
    %1691 = vmatpush.bf16.msra.mxu0 %v1646
    %1692 = vmatpush.bf16.msra.mxu0 %v1643
    %1693 = vmatpush.bf16.msra.mxu0 %v1640
    %1694 = vmatpush.bf16.msra.mxu0 %v1637
    %1695 = vmatpush.bf16.msra.mxu0 %v1634
    %1696 = vmatpush.bf16.msra.mxu0 %v1631
    %1697 = vmatpush.bf16.msra.mxu0 %v1628
    %1698 = vmatpush.bf16.msra.mxu0 %v1625
    %1699 = vmatmul.bf16.gmra.mxu0 %v1502
    %v1700 = vpop.f32.mrf.mxu0
    %v1701 = vadd.f32 %v1539, %v1700
    %v1702 = vpop.f32.mrf.mxu0
    %v1703 = vadd.f32 %v1539, %v1702
    %1704 = vmatmul.bf16.gmra.mxu0 %v1503
    %v1705 = vpop.f32.mrf.mxu0
    %v1706 = vadd.f32 %v1539, %v1705
    %v1707 = vpop.f32.mrf.mxu0
    %v1708 = vadd.f32 %v1539, %v1707
    %1709 = vdwg.mxu0
    %1710 = vmatpush.bf16.msra.mxu0 %v1647
    %1711 = vmatpush.bf16.msra.mxu0 %v1644
    %1712 = vmatpush.bf16.msra.mxu0 %v1641
    %1713 = vmatpush.bf16.msra.mxu0 %v1638
    %1714 = vmatpush.bf16.msra.mxu0 %v1635
    %1715 = vmatpush.bf16.msra.mxu0 %v1632
    %1716 = vmatpush.bf16.msra.mxu0 %v1629
    %1717 = vmatpush.bf16.msra.mxu0 %v1626
    %1718 = vmatmul.bf16.gmra.mxu0 %v1502
    %v1719 = vpop.f32.mrf.mxu0
    %v1720 = vadd.f32 %v1540, %v1719
    %v1721 = vpop.f32.mrf.mxu0
    %v1722 = vadd.f32 %v1540, %v1721
    %1723 = vmatmul.bf16.gmra.mxu0 %v1503
    %v1724 = vpop.f32.mrf.mxu0
    %v1725 = vadd.f32 %v1540, %v1724
    %v1726 = vpop.f32.mrf.mxu0
    %v1727 = vadd.f32 %v1540, %v1726
    %1728 = vdwg.mxu0
    %v1729 = vld [vmem:[#allocation7] sm:$0xff]
    %v1730 = vld [vmem:[#allocation7 + $0x8] sm:$0xf]
    %v1731 = vld [vmem:[#allocation7 + $0xc] sm:$0xff]
    %v1732 = vld [vmem:[#allocation7 + $0x14] sm:$0xf]
    %v1733 = vld [vmem:[#allocation7 + $0x18] sm:$0xff]
    %v1734 = vld [vmem:[#allocation7 + $0x20] sm:$0xf]
    %v1735 = vld [vmem:[#allocation7 + $0x24] sm:$0xff]
    %v1736 = vld [vmem:[#allocation7 + $0x2c] sm:$0xf]
    %v1737 = vld [vmem:[#allocation7 + $0x30] sm:$0xff]
    %v1738 = vld [vmem:[#allocation7 + $0x38] sm:$0xf]
    %v1739 = vld [vmem:[#allocation7 + $0x3c] sm:$0xff]
    %v1740 = vld [vmem:[#allocation7 + $0x44] sm:$0xf]
    %v1741 = vld [vmem:[#allocation7 + $0x48] sm:$0xff]
    %v1742 = vld [vmem:[#allocation7 + $0x50] sm:$0xf]
    %v1743 = vld [vmem:[#allocation7 + $0x54] sm:$0xff]
    %v1744 = vld [vmem:[#allocation7 + $0x5c] sm:$0xf]
    %v1745 = vld [vmem:[#allocation7 + $0x60] sm:$0xff]
    %v1746 = vld [vmem:[#allocation7 + $0x68] sm:$0xf]
    %v1747 = vld [vmem:[#allocation7 + $0x6c] sm:$0xff]
    %v1748 = vld [vmem:[#allocation7 + $0x74] sm:$0xf]
    %v1749 = vld [vmem:[#allocation7 + $0x78] sm:$0xff]
    %v1750 = vld [vmem:[#allocation7 + $0x80] sm:$0xf]
    %v1751 = vld [vmem:[#allocation7 + $0x84] sm:$0xff]
    %v1752 = vld [vmem:[#allocation7 + $0x8c] sm:$0xf]
    %v1753 = vld [vmem:[#allocation7 + $0x90] sm:$0xff]
    %v1754 = vld [vmem:[#allocation7 + $0x98] sm:$0xf]
    %v1755 = vld [vmem:[#allocation7 + $0x9c] sm:$0xff]
    %v1756 = vld [vmem:[#allocation7 + $0xa4] sm:$0xf]
    %v1757 = vld [vmem:[#allocation7 + $0xa8] sm:$0xff]
    %v1758 = vld [vmem:[#allocation7 + $0xb0] sm:$0xf]
    %v1759 = vld [vmem:[#allocation7 + $0xb4] sm:$0xff]
    %v1760 = vld [vmem:[#allocation7 + $0xbc] sm:$0xf]
    %v1761 = vld [vmem:[%s8] sm:$0x1]
    %v1763 = vperm.slane %v1761, 0
    %v1797 = vunpack.c.l.b16 %v1729
    %v1798 = vunpack.c.h.b16 %v1729
    %v1799 = vunpack.c.l.b16 %v1730
    %v1800 = vunpack.c.l.b16 %v1731
    %v1801 = vunpack.c.h.b16 %v1731
    %v1802 = vunpack.c.l.b16 %v1732
    %v1803 = vunpack.c.l.b16 %v1733
    %v1804 = vunpack.c.h.b16 %v1733
    %v1805 = vunpack.c.l.b16 %v1734
    %v1806 = vunpack.c.l.b16 %v1735
    %v1807 = vunpack.c.h.b16 %v1735
    %v1808 = vunpack.c.l.b16 %v1736
    %v1809 = vunpack.c.l.b16 %v1737
    %v1810 = vunpack.c.h.b16 %v1737
    %v1811 = vunpack.c.l.b16 %v1738
    %v1812 = vunpack.c.l.b16 %v1739
    %v1813 = vunpack.c.h.b16 %v1739
    %v1814 = vunpack.c.l.b16 %v1740
    %v1815 = vunpack.c.l.b16 %v1741
    %v1816 = vunpack.c.h.b16 %v1741
    %v1817 = vunpack.c.l.b16 %v1742
    %v1818 = vunpack.c.l.b16 %v1743
    %v1819 = vunpack.c.h.b16 %v1743
    %v1820 = vunpack.c.l.b16 %v1744
    %v1821 = vunpack.c.l.b16 %v1745
    %v1822 = vunpack.c.h.b16 %v1745
    %v1823 = vunpack.c.l.b16 %v1746
    %v1824 = vunpack.c.l.b16 %v1747
    %v1825 = vunpack.c.h.b16 %v1747
    %v1826 = vunpack.c.l.b16 %v1748
    %v1827 = vunpack.c.l.b16 %v1749
    %v1828 = vunpack.c.h.b16 %v1749
    %v1829 = vunpack.c.l.b16 %v1750
    %v1830 = vunpack.c.l.b16 %v1751
    %v1831 = vunpack.c.h.b16 %v1751
    %v1832 = vunpack.c.l.b16 %v1752
    %v1833 = vunpack.c.l.b16 %v1753
    %v1834 = vunpack.c.h.b16 %v1753
    %v1835 = vunpack.c.l.b16 %v1754
    %v1836 = vunpack.c.l.b16 %v1755
    %v1837 = vunpack.c.h.b16 %v1755
    %v1838 = vunpack.c.l.b16 %v1756
    %v1839 = vunpack.c.l.b16 %v1757
    %v1840 = vunpack.c.h.b16 %v1757
    %v1841 = vunpack.c.l.b16 %v1758
    %v1842 = vunpack.c.l.b16 %v1759
    %v1843 = vunpack.c.h.b16 %v1759
    %v1844 = vunpack.c.l.b16 %v1760
    %v1845 = vpack.c.b16 %v1800, %v1797
    %v1846 = vpack.c.b16 %v1801, %v1798
    %v1847 = vpack.c.b16 %v1802, %v1799
    %v1848 = vpack.c.b16 %v1806, %v1803
    %v1849 = vpack.c.b16 %v1807, %v1804
    %v1850 = vpack.c.b16 %v1808, %v1805
    %v1851 = vpack.c.b16 %v1812, %v1809
    %v1852 = vpack.c.b16 %v1813, %v1810
    %v1853 = vpack.c.b16 %v1814, %v1811
    %v1854 = vpack.c.b16 %v1818, %v1815
    %v1855 = vpack.c.b16 %v1819, %v1816
    %v1856 = vpack.c.b16 %v1820, %v1817
    %v1857 = vpack.c.b16 %v1824, %v1821
    %v1858 = vpack.c.b16 %v1825, %v1822
    %v1859 = vpack.c.b16 %v1826, %v1823
    %v1860 = vpack.c.b16 %v1830, %v1827
    %v1861 = vpack.c.b16 %v1831, %v1828
    %v1862 = vpack.c.b16 %v1832, %v1829
    %v1863 = vpack.c.b16 %v1836, %v1833
    %v1864 = vpack.c.b16 %v1837, %v1834
    %v1865 = vpack.c.b16 %v1838, %v1835
    %v1866 = vpack.c.b16 %v1842, %v1839
    %v1867 = vpack.c.b16 %v1843, %v1840
    %v1868 = vpack.c.b16 %v1844, %v1841
    %1893 = vmatpush.bf16.msra.mxu0 %v1866
    %1894 = vmatpush.bf16.msra.mxu0 %v1863
    %1895 = vmatpush.bf16.msra.mxu0 %v1860
    %1896 = vmatpush.bf16.msra.mxu0 %v1857
    %1897 = vmatpush.bf16.msra.mxu0 %v1854
    %1898 = vmatpush.bf16.msra.mxu0 %v1851
    %1899 = vmatpush.bf16.msra.mxu0 %v1848
    %1900 = vmatpush.bf16.msra.mxu0 %v1845
    %1901 = vmatmul.bf16.gmra.mxu0 0
    %v1902 = vpop.f32.mrf.mxu0
    %v1903 = vadd.f32 0.0, %v1902
    %v1904 = vpop.f32.mrf.mxu0
    %v1905 = vadd.f32 0.0, %v1904
    %1906 = vdwg.mxu0
    %1907 = vmatpush.bf16.msra.mxu0 %v1867
    %1908 = vmatpush.bf16.msra.mxu0 %v1864
    %1909 = vmatpush.bf16.msra.mxu0 %v1861
    %1910 = vmatpush.bf16.msra.mxu0 %v1858
    %1911 = vmatpush.bf16.msra.mxu0 %v1855
    %1912 = vmatpush.bf16.msra.mxu0 %v1852
    %1913 = vmatpush.bf16.msra.mxu0 %v1849
    %1914 = vmatpush.bf16.msra.mxu0 %v1846
    %1915 = vmatmul.bf16.gmra.mxu0 0
    %v1916 = vpop.f32.mrf.mxu0
    %v1917 = vadd.f32 0.0, %v1916
    %v1918 = vpop.f32.mrf.mxu0
    %v1919 = vadd.f32 0.0, %v1918
    %1920 = vdwg.mxu0
    %1921 = vmatpush.bf16.msra.mxu0 %v1868
    %1922 = vmatpush.bf16.msra.mxu0 %v1865
    %1923 = vmatpush.bf16.msra.mxu0 %v1862
    %1924 = vmatpush.bf16.msra.mxu0 %v1859
    %1925 = vmatpush.bf16.msra.mxu0 %v1856
    %1926 = vmatpush.bf16.msra.mxu0 %v1853
    %1927 = vmatpush.bf16.msra.mxu0 %v1850
    %1928 = vmatpush.bf16.msra.mxu0 %v1847
    %1929 = vmatmul.bf16.gmra.mxu0 0
    %v1930 = vpop.f32.mrf.mxu0
    %v1931 = vadd.f32 0.0, %v1930
    %v1932 = vpop.f32.mrf.mxu0
    %v1933 = vadd.f32 0.0, %v1932
    %1934 = vdwg.mxu0
    %v1935 = vadd.f32 %v1682, %v1903
    %v1936 = vadd.f32 %v1684, %v1905
    %v1937 = vxor.u32 %v1935, 2147483648
    %v1938 = vxor.u32 %v1936, 2147483648
    %v1939 = vmul.f32 %v1937, 1.442695
    %v1940 = vpow.pop %v1939
    %v1941 = vmul.f32 %v1938, 1.442695
    %v1942 = vpow.pop %v1941
    %v1943 = vadd.f32 %v1940, 1.0
    %v1944 = vadd.f32 %v1942, 1.0
    %v1945 = vrcp.pop %v1943
    %v1946 = vmul.f32 %v1943, %v1945
    %v1947 = vsub.f32 1.0, %v1946
    %v1948 = vmul.f32 %v1945, %v1947
    %v1949 = vadd.f32 %v1945, %v1948
    %vm1950 = vweird.f32 %v1943
    %vm1951 = vweird.f32 %v1945
    %vm1952 = vmor %vm1950, %vm1951
    %v1953 = vsel %vm1952, %v1945, %v1949
    %v1954 = vand.u32 2147483647, %v1943
    %vm1955 = vcmp.eq.f32.partialorder %v1954, 8.507059e+37
    %v1956 = vand.u32 %v1943, 2147483648
    %v1957 = vor.u32 1.1754944e-38, %v1956
    %v1958 = vsel %vm1955, %v1957, %v1953
    %v1959 = vmul.f32 1.0, %v1958
    %v1960 = vrcp.pop %v1944
    %v1961 = vmul.f32 %v1944, %v1960
    %v1962 = vsub.f32 1.0, %v1961
    %v1963 = vmul.f32 %v1960, %v1962
    %v1964 = vadd.f32 %v1960, %v1963
    %vm1965 = vweird.f32 %v1944
    %vm1966 = vweird.f32 %v1960
    %vm1967 = vmor %vm1965, %vm1966
    %v1968 = vsel %vm1967, %v1960, %v1964
    %v1969 = vand.u32 2147483647, %v1944
    %vm1970 = vcmp.eq.f32.partialorder %v1969, 8.507059e+37
    %v1971 = vand.u32 %v1944, 2147483648
    %v1972 = vor.u32 1.1754944e-38, %v1971
    %v1973 = vsel %vm1970, %v1972, %v1968
    %v1974 = vmul.f32 1.0, %v1973
    %v1975 = vadd.f32 %v1701, %v1917
    %v1976 = vadd.f32 %v1703, %v1919
    %v1977 = vxor.u32 %v1975, 2147483648
    %v1978 = vxor.u32 %v1976, 2147483648
    %v1979 = vmul.f32 %v1977, 1.442695
    %v1980 = vpow.pop %v1979
    %v1981 = vmul.f32 %v1978, 1.442695
    %v1982 = vpow.pop %v1981
    %v1983 = vadd.f32 %v1980, 1.0
    %v1984 = vadd.f32 %v1982, 1.0
    %v1985 = vrcp.pop %v1983
    %v1986 = vmul.f32 %v1983, %v1985
    %v1987 = vsub.f32 1.0, %v1986
    %v1988 = vmul.f32 %v1985, %v1987
    %v1989 = vadd.f32 %v1985, %v1988
    %vm1990 = vweird.f32 %v1983
    %vm1991 = vweird.f32 %v1985
    %vm1992 = vmor %vm1990, %vm1991
    %v1993 = vsel %vm1992, %v1985, %v1989
    %v1994 = vand.u32 2147483647, %v1983
    %vm1995 = vcmp.eq.f32.partialorder %v1994, 8.507059e+37
    %v1996 = vand.u32 %v1983, 2147483648
    %v1997 = vor.u32 1.1754944e-38, %v1996
    %v1998 = vsel %vm1995, %v1997, %v1993
    %v1999 = vmul.f32 1.0, %v1998
    %v2000 = vrcp.pop %v1984
    %v2001 = vmul.f32 %v1984, %v2000
    %v2002 = vsub.f32 1.0, %v2001
    %v2003 = vmul.f32 %v2000, %v2002
    %v2004 = vadd.f32 %v2000, %v2003
    %vm2005 = vweird.f32 %v1984
    %vm2006 = vweird.f32 %v2000
    %vm2007 = vmor %vm2005, %vm2006
    %v2008 = vsel %vm2007, %v2000, %v2004
    %v2009 = vand.u32 2147483647, %v1984
    %vm2010 = vcmp.eq.f32.partialorder %v2009, 8.507059e+37
    %v2011 = vand.u32 %v1984, 2147483648
    %v2012 = vor.u32 1.1754944e-38, %v2011
    %v2013 = vsel %vm2010, %v2012, %v2008
    %v2014 = vmul.f32 1.0, %v2013
    %v2015 = vadd.f32 %v1931, %v1763
    %v2016 = vadd.f32 %v1933, %v1763
    %v2017 = vmul.f32 %v1959, %v2015
    %v2018 = vmul.f32 %v1974, %v2016
    %v2019 = vadd.f32 %v1720, %v2017
    %v2020 = vadd.f32 %v1722, %v2018
    %v2021 = vtanh.pop %v2019
    %v2022 = vtanh.pop %v2020
    %v2023 = vsub.f32 1.0, %v1999
    %v2024 = vsub.f32 1.0, %v2014
    %v2025 = vmul.f32 %v2023, %v2021
    %v2026 = vmul.f32 %v2024, %v2022
    %v2027 = vmul.f32 %v1999, 0.0
    %v2028 = vmul.f32 %v2014, 0.0
    %v2029 = vadd.f32 %v2025, %v2027
    %v2030 = vadd.f32 %v2026, %v2028
    %v2031 = vpack.c.bf16 %v2030, %v2029
    %2032 = vmatpush.bf16.msra.mxu0 %v1866
    %2033 = vmatpush.bf16.msra.mxu0 %v1863
    %2034 = vmatpush.bf16.msra.mxu0 %v1860
    %2035 = vmatpush.bf16.msra.mxu0 %v1857
    %2036 = vmatpush.bf16.msra.mxu0 %v1854
    %2037 = vmatpush.bf16.msra.mxu0 %v1851
    %2038 = vmatpush.bf16.msra.mxu0 %v1848
    %2039 = vmatpush.bf16.msra.mxu0 %v1845
    %2040 = vmatmul.bf16.gmra.mxu0 %v2031
    %v2041 = vpop.f32.mrf.mxu0
    %v2042 = vadd.f32 0.0, %v2041
    %v2043 = vpop.f32.mrf.mxu0
    %v2044 = vadd.f32 0.0, %v2043
    %2045 = vdwg.mxu0
    %2046 = vmatpush.bf16.msra.mxu0 %v1867
    %2047 = vmatpush.bf16.msra.mxu0 %v1864
    %2048 = vmatpush.bf16.msra.mxu0 %v1861
    %2049 = vmatpush.bf16.msra.mxu0 %v1858
    %2050 = vmatpush.bf16.msra.mxu0 %v1855
    %2051 = vmatpush.bf16.msra.mxu0 %v1852
    %2052 = vmatpush.bf16.msra.mxu0 %v1849
    %2053 = vmatpush.bf16.msra.mxu0 %v1846
    %2054 = vmatmul.bf16.gmra.mxu0 %v2031
    %v2055 = vpop.f32.mrf.mxu0
    %v2056 = vadd.f32 0.0, %v2055
    %v2057 = vpop.f32.mrf.mxu0
    %v2058 = vadd.f32 0.0, %v2057
    %2059 = vdwg.mxu0
    %2060 = vmatpush.bf16.msra.mxu0 %v1868
    %2061 = vmatpush.bf16.msra.mxu0 %v1865
    %2062 = vmatpush.bf16.msra.mxu0 %v1862
    %2063 = vmatpush.bf16.msra.mxu0 %v1859
    %2064 = vmatpush.bf16.msra.mxu0 %v1856
    %2065 = vmatpush.bf16.msra.mxu0 %v1853
    %2066 = vmatpush.bf16.msra.mxu0 %v1850
    %2067 = vmatpush.bf16.msra.mxu0 %v1847
    %2068 = vmatmul.bf16.gmra.mxu0 %v2031
    %v2069 = vpop.f32.mrf.mxu0
    %v2070 = vadd.f32 0.0, %v2069
    %v2071 = vpop.f32.mrf.mxu0
    %v2072 = vadd.f32 0.0, %v2071
    %2073 = vdwg.mxu0
    %v2074 = vadd.f32 %v1687, %v2042
    %v2075 = vadd.f32 %v1689, %v2044
    %v2076 = vxor.u32 %v2074, 2147483648
    %v2077 = vxor.u32 %v2075, 2147483648
    %v2078 = vmul.f32 %v2076, 1.442695
    %v2079 = vpow.pop %v2078
    %v2080 = vmul.f32 %v2077, 1.442695
    %v2081 = vpow.pop %v2080
    %v2082 = vadd.f32 %v2079, 1.0
    %v2083 = vadd.f32 %v2081, 1.0
    %v2084 = vrcp.pop %v2082
    %v2085 = vmul.f32 %v2082, %v2084
    %v2086 = vsub.f32 1.0, %v2085
    %v2087 = vmul.f32 %v2084, %v2086
    %v2088 = vadd.f32 %v2084, %v2087
    %vm2089 = vweird.f32 %v2082
    %vm2090 = vweird.f32 %v2084
    %vm2091 = vmor %vm2089, %vm2090
    %v2092 = vsel %vm2091, %v2084, %v2088
    %v2093 = vand.u32 2147483647, %v2082
    %vm2094 = vcmp.eq.f32.partialorder %v2093, 8.507059e+37
    %v2095 = vand.u32 %v2082, 2147483648
    %v2096 = vor.u32 1.1754944e-38, %v2095
    %v2097 = vsel %vm2094, %v2096, %v2092
    %v2098 = vmul.f32 1.0, %v2097
    %v2099 = vrcp.pop %v2083
    %v2100 = vmul.f32 %v2083, %v2099
    %v2101 = vsub.f32 1.0, %v2100
    %v2102 = vmul.f32 %v2099, %v2101
    %v2103 = vadd.f32 %v2099, %v2102
    %vm2104 = vweird.f32 %v2083
    %vm2105 = vweird.f32 %v2099
    %vm2106 = vmor %vm2104, %vm2105
    %v2107 = vsel %vm2106, %v2099, %v2103
    %v2108 = vand.u32 2147483647, %v2083
    %vm2109 = vcmp.eq.f32.partialorder %v2108, 8.507059e+37
    %v2110 = vand.u32 %v2083, 2147483648
    %v2111 = vor.u32 1.1754944e-38, %v2110
    %v2112 = vsel %vm2109, %v2111, %v2107
    %v2113 = vmul.f32 1.0, %v2112
    %v2114 = vadd.f32 %v1706, %v2056
    %v2115 = vadd.f32 %v1708, %v2058
    %v2116 = vxor.u32 %v2114, 2147483648
    %v2117 = vxor.u32 %v2115, 2147483648
    %v2118 = vmul.f32 %v2116, 1.442695
    %v2119 = vpow.pop %v2118
    %v2120 = vmul.f32 %v2117, 1.442695
    %v2121 = vpow.pop %v2120
    %v2122 = vadd.f32 %v2119, 1.0
    %v2123 = vadd.f32 %v2121, 1.0
    %v2124 = vrcp.pop %v2122
    %v2125 = vmul.f32 %v2122, %v2124
    %v2126 = vsub.f32 1.0, %v2125
    %v2127 = vmul.f32 %v2124, %v2126
    %v2128 = vadd.f32 %v2124, %v2127
    %vm2129 = vweird.f32 %v2122
    %vm2130 = vweird.f32 %v2124
    %vm2131 = vmor %vm2129, %vm2130
    %v2132 = vsel %vm2131, %v2124, %v2128
    %v2133 = vand.u32 2147483647, %v2122
    %vm2134 = vcmp.eq.f32.partialorder %v2133, 8.507059e+37
    %v2135 = vand.u32 %v2122, 2147483648
    %v2136 = vor.u32 1.1754944e-38, %v2135
    %v2137 = vsel %vm2134, %v2136, %v2132
    %v2138 = vmul.f32 1.0, %v2137
    %v2139 = vrcp.pop %v2123
    %v2140 = vmul.f32 %v2123, %v2139
    %v2141 = vsub.f32 1.0, %v2140
    %v2142 = vmul.f32 %v2139, %v2141
    %v2143 = vadd.f32 %v2139, %v2142
    %vm2144 = vweird.f32 %v2123
    %vm2145 = vweird.f32 %v2139
    %vm2146 = vmor %vm2144, %vm2145
    %v2147 = vsel %vm2146, %v2139, %v2143
    %v2148 = vand.u32 2147483647, %v2123
    %vm2149 = vcmp.eq.f32.partialorder %v2148, 8.507059e+37
    %v2150 = vand.u32 %v2123, 2147483648
    %v2151 = vor.u32 1.1754944e-38, %v2150
    %v2152 = vsel %vm2149, %v2151, %v2147
    %v2153 = vmul.f32 1.0, %v2152
    %v2154 = vadd.f32 %v2070, %v1763
    %v2155 = vadd.f32 %v2072, %v1763
    %v2156 = vmul.f32 %v2098, %v2154
    %v2157 = vmul.f32 %v2113, %v2155
    %v2158 = vadd.f32 %v1725, %v2156
    %v2159 = vadd.f32 %v1727, %v2157
    %v2160 = vtanh.pop %v2158
    %v2161 = vtanh.pop %v2159
    %v2162 = vsub.f32 1.0, %v2138
    %v2163 = vsub.f32 1.0, %v2153
    %v2164 = vmul.f32 %v2162, %v2160
    %v2165 = vmul.f32 %v2163, %v2161
    %v2166 = vmul.f32 %v2138, %v2029
    %v2167 = vmul.f32 %v2153, %v2030
    %v2168 = vadd.f32 %v2164, %v2166
    %v2169 = vadd.f32 %v2165, %v2167
    %v2170 = vpack.c.bf16 %v2169, %v2168
    %v2171 = vld [vmem:[%s9] sm:$0xf]
    %v2172 = vld [vmem:[%s9 + $0x4] sm:$0xf]
    %v2173 = vld [vmem:[%s9 + $0x8] sm:$0xf]
    %v2174 = vld [vmem:[%s9 + $0xc] sm:$0xf]
    %v2175 = vld [vmem:[%s9 + $0x10] sm:$0xf]
    %v2176 = vld [vmem:[%s9 + $0x14] sm:$0xf]
    %v2177 = vld [vmem:[%s9 + $0x18] sm:$0xf]
    %v2178 = vld [vmem:[%s9 + $0x1c] sm:$0xf]
    %v2179 = vld [vmem:[%s9 + $0x20] sm:$0xf]
    %v2180 = vld [vmem:[%s9 + $0x24] sm:$0xf]
    %v2181 = vld [vmem:[%s9 + $0x28] sm:$0xf]
    %v2182 = vld [vmem:[%s9 + $0x2c] sm:$0xf]
    %v2183 = vld [vmem:[%s9 + $0x30] sm:$0xf]
    %v2184 = vld [vmem:[%s9 + $0x34] sm:$0xf]
    %v2185 = vld [vmem:[%s9 + $0x38] sm:$0xf]
    %v2186 = vld [vmem:[%s9 + $0x3c] sm:$0xf]
    %v2187 = vld [vmem:[%s10] sm:$0x1]
    %v2189 = vperm.slane %v2187, 0
    %v2207 = vunpack.c.l.b16 %v2171
    %v2208 = vunpack.c.l.b16 %v2172
    %v2209 = vunpack.c.l.b16 %v2173
    %v2210 = vunpack.c.l.b16 %v2174
    %v2211 = vunpack.c.l.b16 %v2175
    %v2212 = vunpack.c.l.b16 %v2176
    %v2213 = vunpack.c.l.b16 %v2177
    %v2214 = vunpack.c.l.b16 %v2178
    %v2215 = vunpack.c.l.b16 %v2179
    %v2216 = vunpack.c.l.b16 %v2180
    %v2217 = vunpack.c.l.b16 %v2181
    %v2218 = vunpack.c.l.b16 %v2182
    %v2219 = vunpack.c.l.b16 %v2183
    %v2220 = vunpack.c.l.b16 %v2184
    %v2221 = vunpack.c.l.b16 %v2185
    %v2222 = vunpack.c.l.b16 %v2186
    %v2223 = vpack.c.b16 %v2208, %v2207
    %v2224 = vpack.c.b16 %v2210, %v2209
    %v2225 = vpack.c.b16 %v2212, %v2211
    %v2226 = vpack.c.b16 %v2214, %v2213
    %v2227 = vpack.c.b16 %v2216, %v2215
    %v2228 = vpack.c.b16 %v2218, %v2217
    %v2229 = vpack.c.b16 %v2220, %v2219
    %v2230 = vpack.c.b16 %v2222, %v2221
    %2239 = vmatpush.bf16.msra.mxu0 %v2230
    %2240 = vmatpush.bf16.msra.mxu0 %v2229
    %2241 = vmatpush.bf16.msra.mxu0 %v2228
    %2242 = vmatpush.bf16.msra.mxu0 %v2227
    %2243 = vmatpush.bf16.msra.mxu0 %v2226
    %2244 = vmatpush.bf16.msra.mxu0 %v2225
    %2245 = vmatpush.bf16.msra.mxu0 %v2224
    %2246 = vmatpush.bf16.msra.mxu0 %v2223
    %2247 = vmatmul.bf16.gmra.mxu0 %v2170
    %v2248 = vpop.f32.mrf.mxu0
    %v2249 = vadd.f32 %v2189, %v2248
    %v2250 = vpop.f32.mrf.mxu0
    %v2251 = vadd.f32 %v2189, %v2250
    %2252 = vdwg.mxu0
    %2253 = vst [vmem:[#allocation8] sm:$0xff] %v2249
    %2254 = vst [vmem:[#allocation8 + $0x8] sm:$0xff] %v2251
    // Predicated region
    $region58: #{tpu_custom_call.1} parent=1 // pred_check
      _
    $region59: #{tpu_custom_call.1} parent=1 // pred_check_branch
      %2256 = sbr.rel (0) target = $region61
    $region60: #{tpu_custom_call.1} parent=1 // pred_region
      %2258 = vsyncadd [#allocation4], 0
      %s2259 = sshll.u32 [#allocation8], 4
      %s2260 = int_to_ptr.vmem [resolvable:$true] %s2259
      %s2261 = sshll.u32 %s11, 4
      %s2262 = int_to_ptr.hbm [resolvable:$true] %s2261
      %2267 = dma.vmem_to_hbm [thread:$0]  %s2260, 256, %s2262, [#allocation4], 128, 128, 8
    $region61: #{tpu_custom_call.1} parent=1 // pred_fallthru
      _
    // Predicated region
    $region62: #{tpu_custom_call.1} parent=1 // pred_check
      _
    $region63: #{tpu_custom_call.1} parent=1 // pred_check_branch
      %2269 = sbr.rel (0) target = $region65
    $region64: #{tpu_custom_call.1} parent=1 // pred_region
      %2271 = dma.done [#allocation4], 256
    $region65: #{tpu_custom_call.1} parent=1 // pred_fallthru
      _
    %2272 = vsyncpa [#allocation3], 1
    %2273 = vsyncpa [#allocation6], 1
    %2274 = vsyncpa [#allocation4], 1

</llo_original>
